<compile_context>
chip_gen: v7x
topology: tpu7x:2x2x1
jax: 0.10.0
libtpu: 0.0.40
codegen_flags: <defaults>
</compile_context>

<pallas_src>
import math
import jax
import jax.numpy as jnp
from jax import lax
from jax.experimental import pallas as pl
from jax.experimental.pallas import tpu as pltpu

# ----------------------------- config ---------------------------------------
B = 2          # batch
S = 16         # sequence length
H = 128        # hidden size (stand-in for 768)
NH = 2         # attention heads
DH = H // NH   # head dim
FFN = 256      # ffn intermediate (stand-in for 3072)
L = 2          # transformer layers (stand-in for 6)
C = 4          # real number of classes
CPAD = 128     # lane-dense padded class dim
VOCAB = 64
MAXPOS = 32
LN_EPS = 1e-12

# ----------------------------- in-kernel helpers -----------------------------

def _ln(x, g, b):
    """LayerNorm over the last axis, f32 math."""
    mu = jnp.mean(x, axis=-1, keepdims=True)
    var = jnp.mean(jnp.square(x - mu), axis=-1, keepdims=True)
    return (x - mu) * lax.rsqrt(var + LN_EPS) * g + b


def _erf(x):
    # Abramowitz & Stegun 7.1.26 polynomial approximation (|err| < 1.5e-7),
    # built from exp / mul / add + approx reciprocal (EUP) so it lowers on
    # every TPU generation without a VALU divide sequence.
    a1, a2, a3, a4, a5 = 0.254829592, -0.284496736, 1.421413741, -1.453152027, 1.061405429
    p = 0.3275911
    sign = jnp.where(x < 0.0, -1.0, 1.0)
    ax = jnp.abs(x)
    t = pl.reciprocal(1.0 + p * ax, approx=True)
    poly = ((((a5 * t + a4) * t + a3) * t + a2) * t + a1) * t
    return sign * (1.0 - poly * jnp.exp(-ax * ax))


def _gelu_exact(x):
    """Exact (erf) GELU, matching HuggingFace DistilBERT; f32 math."""
    return 0.5 * x * (1.0 + _erf(x * (1.0 / math.sqrt(2.0))))


# ----------------------------- fused model kernel ----------------------------

def _model_kernel(x_ref, pos_ref, bias_ref, embg_ref, embb_ref,
                  wqkv_ref, bqkv_ref, wo_ref, bo_ref, ln1g_ref, ln1b_ref,
                  w1_ref, b1_ref, w2_ref, b2_ref, ln2g_ref, ln2b_ref,
                  wp_ref, bp_ref, wc_ref, bc_ref, o_ref):
    """Full DistilBERTClass forward for ONE batch row (S, H) -> (8, CPAD) logits tile."""
    # --- embeddings: position add + LayerNorm (fused; no standalone call) ---
    x = _ln(x_ref[...] + pos_ref[...], embg_ref[...], embb_ref[...])      # (S, H) f32
    bias = bias_ref[...]                                                  # (1, S) additive mask

    # --- transformer layers (static unroll; weights stacked on axis 0) ---
    for l in range(L):
        xb = x.astype(jnp.bfloat16)

        # fused QKV projection: single wide MXU pass, N = 3H
        qkv = jnp.dot(xb, wqkv_ref[l],
                      preferred_element_type=jnp.float32) + bqkv_ref[l]   # (S, 3H)
        qkvb = qkv.astype(jnp.bfloat16)                                   # cast once, slice below

        heads = []
        for h in range(NH):
            # 1/sqrt(DH) is folded into wqkv/bqkv Q columns at init.
            q = qkvb[:, h * DH:(h + 1) * DH]                              # (S, DH)
            k = qkvb[:, H + h * DH:H + (h + 1) * DH]
            v = qkvb[:, 2 * H + h * DH:2 * H + (h + 1) * DH]
            # contract last dims of q and k -> no materialized K transpose
            s = lax.dot_general(q, k,
                                dimension_numbers=(((1,), (1,)), ((), ())),
                                preferred_element_type=jnp.float32) + bias  # (S, S)
            s = s - jnp.max(s, axis=-1, keepdims=True)
            e = jnp.exp(s)
            p = e * pl.reciprocal(jnp.sum(e, axis=-1, keepdims=True), approx=True)
            heads.append(jnp.dot(p.astype(jnp.bfloat16), v,
                                 preferred_element_type=jnp.float32))     # (S, DH)
        ctx = jnp.concatenate(heads, axis=-1)                             # (S, H) lane-dense

        # output projection + residual + sa_layer_norm
        a = jnp.dot(ctx.astype(jnp.bfloat16), wo_ref[l],
                    preferred_element_type=jnp.float32) + bo_ref[l]
        h1 = _ln(x + a, ln1g_ref[l], ln1b_ref[l])

        # FFN (exact GELU) + residual + output_layer_norm
        h1b = h1.astype(jnp.bfloat16)
        f = jnp.dot(h1b, w1_ref[l],
                    preferred_element_type=jnp.float32) + b1_ref[l]
        f = _gelu_exact(f)
        f2 = jnp.dot(f.astype(jnp.bfloat16), w2_ref[l],
                     preferred_element_type=jnp.float32) + b2_ref[l]
        x = _ln(h1 + f2, ln2g_ref[l], ln2b_ref[l])

    # --- classification head on the [CLS] row ---
    cls = x[0:1, :]                                                       # (1, H)
    hcls = jnp.dot(cls.astype(jnp.bfloat16), wp_ref[...],
                   preferred_element_type=jnp.float32) + bp_ref[...]
    hcls = jnp.maximum(hcls, 0.0)                                         # ReLU
    # Dropout(p=0.3) is identity at inference time.
    logits = jnp.dot(hcls.astype(jnp.bfloat16), wc_ref[...],
                     preferred_element_type=jnp.float32) + bc_ref[...]    # (1, CPAD)
    # Lane-dense full-tile store (unmasked vst); real classes live in lanes [:C].
    o_ref[...] = jnp.broadcast_to(logits, (8, CPAD))


# ----------------------------- params ---------------------------------------

def init_params(key):
    keys = jax.random.split(key, 8 + 4 * L)
    it = iter(keys)

    def nrm(shape):
        return jax.random.normal(next(it), shape, jnp.float32) * 0.02

    attn_scale = 1.0 / math.sqrt(DH)
    wqkv, bqkv, wo, bo, ln1g, ln1b = [], [], [], [], [], []
    w1, b1, w2, b2, ln2g, ln2b = [], [], [], [], [], []
    for _ in range(L):
        w = nrm((H, 3 * H))
        w = w.at[:, :H].multiply(attn_scale)            # fold 1/sqrt(DH) into Q weight cols
        bq = jnp.zeros((1, 3 * H), jnp.float32)
        bq = bq.at[:, :H].multiply(attn_scale)          # ...and into Q bias (correct for nonzero biases too)
        wqkv.append(w)
        bqkv.append(bq)
        wo.append(nrm((H, H)))
        bo.append(jnp.zeros((1, H), jnp.float32))
        ln1g.append(jnp.ones((1, H), jnp.float32))
        ln1b.append(jnp.zeros((1, H), jnp.float32))
        w1.append(nrm((H, FFN)))
        b1.append(jnp.zeros((1, FFN), jnp.float32))
        w2.append(nrm((FFN, H)))
        b2.append(jnp.zeros((1, H), jnp.float32))
        ln2g.append(jnp.ones((1, H), jnp.float32))
        ln2b.append(jnp.zeros((1, H), jnp.float32))

    # classifier weight padded to 128 output lanes (lane-dense store)
    wc = jnp.zeros((H, CPAD), jnp.float32).at[:, :C].set(nrm((H, C)))

    return {
        "word_emb": nrm((VOCAB, H)),
        "pos_emb": nrm((MAXPOS, H)),
        "emb_ln_g": jnp.ones((1, H), jnp.float32),
        "emb_ln_b": jnp.zeros((1, H), jnp.float32),
        # stacked per-layer weights (leading axis = layer)
        "wqkv": jnp.stack(wqkv).astype(jnp.bfloat16),   # (L, H, 3H)
        "bqkv": jnp.stack(bqkv),                        # (L, 1, 3H) f32
        "wo": jnp.stack(wo).astype(jnp.bfloat16),       # (L, H, H)
        "bo": jnp.stack(bo),
        "ln1_g": jnp.stack(ln1g), "ln1_b": jnp.stack(ln1b),
        "w1": jnp.stack(w1).astype(jnp.bfloat16),       # (L, H, FFN)
        "b1": jnp.stack(b1),
        "w2": jnp.stack(w2).astype(jnp.bfloat16),       # (L, FFN, H)
        "b2": jnp.stack(b2),
        "ln2_g": jnp.stack(ln2g), "ln2_b": jnp.stack(ln2b),
        # classification head ([in, out] = PyTorch weight.T)
        "wp": nrm((H, H)).astype(jnp.bfloat16),
        "bp": jnp.zeros((1, H), jnp.float32),
        "wc": wc.astype(jnp.bfloat16),                  # (H, CPAD)
        "bc": jnp.zeros((1, CPAD), jnp.float32),
    }


# ----------------------------- forward ---------------------------------------

def forward(params, input_ids, attention_mask):
    # Embedding gather + pos slice stay in XLA (not a matmul hot path).
    # TODO(synk): pull the word-embedding row gather into the kernel via
    # PrefetchScalarGridSpec + pl.Element at the real vocab / seq size.
    x = jnp.take(params["word_emb"], input_ids, axis=0)               # (B, S, H)
    pos = params["pos_emb"][:S]                                       # (S, H)

    # Additive attention-mask bias (0 = keep, -1e30 = masked), per batch row.
    bias = jnp.where(attention_mask > 0, 0.0, -1e30).astype(jnp.float32)
    bias = bias.reshape(B, 1, S)

    sq = pl.Squeezed()

    def rep(shape):
        # Weight replicated across the (B,) grid: constant index_map -> DMA'd
        # once and kept VMEM-resident across grid steps.
        return pl.BlockSpec(shape, lambda b, _s=shape: (0,) * len(_s))

    out = pl.pallas_call(
        _model_kernel,
        out_shape=jax.ShapeDtypeStruct((B, 8, CPAD), jnp.float32),
        grid=(B,),
        in_specs=[
            pl.BlockSpec((sq, S, H), lambda b: (b, 0, 0)),            # token embeddings
            rep((S, H)),                                              # position embeddings
            pl.BlockSpec((sq, 1, S), lambda b: (b, 0, 0)),            # attention-mask bias
            rep((1, H)), rep((1, H)),                                 # embedding LN g/b
            rep((L, H, 3 * H)), rep((L, 1, 3 * H)),                   # wqkv, bqkv
            rep((L, H, H)), rep((L, 1, H)),                           # wo, bo
            rep((L, 1, H)), rep((L, 1, H)),                           # ln1 g/b
            rep((L, H, FFN)), rep((L, 1, FFN)),                       # w1, b1
            rep((L, FFN, H)), rep((L, 1, H)),                         # w2, b2
            rep((L, 1, H)), rep((L, 1, H)),                           # ln2 g/b
            rep((H, H)), rep((1, H)),                                 # pre_classifier
            rep((H, CPAD)), rep((1, CPAD)),                           # classifier (padded)
        ],
        out_specs=pl.BlockSpec((sq, 8, CPAD), lambda b: (b, 0, 0)),
        compiler_params=pltpu.CompilerParams(
            dimension_semantics=("parallel",),                        # v7x: batch across 2 TCs
            vmem_limit_bytes=32 * 1024 * 1024),
    )(x, pos, bias, params["emb_ln_g"], params["emb_ln_b"],
      params["wqkv"], params["bqkv"], params["wo"], params["bo"],
      params["ln1_g"], params["ln1_b"], params["w1"], params["b1"],
      params["w2"], params["b2"], params["ln2_g"], params["ln2_b"],
      params["wp"], params["bp"], params["wc"], params["bc"])

    return out[:, 0, :C]                                              # (B, C)


# ----------------------------- main ------------------------------------------

if __name__ == "__main__":
    root = jax.random.PRNGKey(0)
    k_params, k_ids = jax.random.split(root)

    params = init_params(k_params)
    input_ids = jax.random.randint(k_ids, (B, S), 0, VOCAB, dtype=jnp.int32)
    # attention mask with ragged lengths (1 = attend, 0 = padding)
    lengths = jnp.array([S, S - 4], dtype=jnp.int32)
    attention_mask = (jnp.arange(S)[None, :] < lengths[:, None]).astype(jnp.int32)

    fwd = jax.jit(forward)
    logits = fwd(params, input_ids, attention_mask)
    jax.block_until_ready(logits)
    assert logits.shape == (B, C)
    print("KERNEL_OK")
</pallas_src>

<mosaic_0001>
module attributes {stable_mosaic.version = 11 : i64} {
  func.func @_model_kernel(%arg0: i32, %arg1: memref<1x16x128xf32, #tpu.memory_space<vmem>>, %arg2: memref<16x128xf32, #tpu.memory_space<vmem>>, %arg3: memref<1x1x16xf32, #tpu.memory_space<vmem>>, %arg4: memref<1x128xf32, #tpu.memory_space<vmem>>, %arg5: memref<1x128xf32, #tpu.memory_space<vmem>>, %arg6: memref<2x128x384xbf16, #tpu.memory_space<vmem>>, %arg7: memref<2x1x384xf32, #tpu.memory_space<vmem>>, %arg8: memref<2x128x128xbf16, #tpu.memory_space<vmem>>, %arg9: memref<2x1x128xf32, #tpu.memory_space<vmem>>, %arg10: memref<2x1x128xf32, #tpu.memory_space<vmem>>, %arg11: memref<2x1x128xf32, #tpu.memory_space<vmem>>, %arg12: memref<2x128x256xbf16, #tpu.memory_space<vmem>>, %arg13: memref<2x1x256xf32, #tpu.memory_space<vmem>>, %arg14: memref<2x256x128xbf16, #tpu.memory_space<vmem>>, %arg15: memref<2x1x128xf32, #tpu.memory_space<vmem>>, %arg16: memref<2x1x128xf32, #tpu.memory_space<vmem>>, %arg17: memref<2x1x128xf32, #tpu.memory_space<vmem>>, %arg18: memref<128x128xbf16, #tpu.memory_space<vmem>>, %arg19: memref<1x128xf32, #tpu.memory_space<vmem>>, %arg20: memref<128x128xbf16, #tpu.memory_space<vmem>>, %arg21: memref<1x128xf32, #tpu.memory_space<vmem>>, %arg22: memref<1x8x128xf32, #tpu.memory_space<vmem>>) attributes {dimension_semantics = [#tpu.dimension_semantics<parallel>], iteration_bounds = array<i64: 2>, scalar_prefetch = 0 : i64, scratch_operands = 0 : i64, tpu.core_type = #tpu.core_type<tc>, window_params = [{transform_indices = @transform_0, window_bounds = array<i64: 1, 16, 128>}, {pipeline_mode = #tpu.pipeline_mode<synchronous>, transform_indices = @transform_1, window_bounds = array<i64: 16, 128>}, {transform_indices = @transform_2, window_bounds = array<i64: 1, 1, 16>}, {pipeline_mode = #tpu.pipeline_mode<synchronous>, transform_indices = @transform_3, window_bounds = array<i64: 1, 128>}, {pipeline_mode = #tpu.pipeline_mode<synchronous>, transform_indices = @transform_4, window_bounds = array<i64: 1, 128>}, {pipeline_mode = #tpu.pipeline_mode<synchronous>, transform_indices = @transform_5, window_bounds = array<i64: 2, 128, 384>}, {pipeline_mode = #tpu.pipeline_mode<synchronous>, transform_indices = @transform_6, window_bounds = array<i64: 2, 1, 384>}, {pipeline_mode = #tpu.pipeline_mode<synchronous>, transform_indices = @transform_7, window_bounds = array<i64: 2, 128, 128>}, {pipeline_mode = #tpu.pipeline_mode<synchronous>, transform_indices = @transform_8, window_bounds = array<i64: 2, 1, 128>}, {pipeline_mode = #tpu.pipeline_mode<synchronous>, transform_indices = @transform_9, window_bounds = array<i64: 2, 1, 128>}, {pipeline_mode = #tpu.pipeline_mode<synchronous>, transform_indices = @transform_10, window_bounds = array<i64: 2, 1, 128>}, {pipeline_mode = #tpu.pipeline_mode<synchronous>, transform_indices = @transform_11, window_bounds = array<i64: 2, 128, 256>}, {pipeline_mode = #tpu.pipeline_mode<synchronous>, transform_indices = @transform_12, window_bounds = array<i64: 2, 1, 256>}, {pipeline_mode = #tpu.pipeline_mode<synchronous>, transform_indices = @transform_13, window_bounds = array<i64: 2, 256, 128>}, {pipeline_mode = #tpu.pipeline_mode<synchronous>, transform_indices = @transform_14, window_bounds = array<i64: 2, 1, 128>}, {pipeline_mode = #tpu.pipeline_mode<synchronous>, transform_indices = @transform_15, window_bounds = array<i64: 2, 1, 128>}, {pipeline_mode = #tpu.pipeline_mode<synchronous>, transform_indices = @transform_16, window_bounds = array<i64: 2, 1, 128>}, {pipeline_mode = #tpu.pipeline_mode<synchronous>, transform_indices = @transform_17, window_bounds = array<i64: 128, 128>}, {pipeline_mode = #tpu.pipeline_mode<synchronous>, transform_indices = @transform_18, window_bounds = array<i64: 1, 128>}, {pipeline_mode = #tpu.pipeline_mode<synchronous>, transform_indices = @transform_19, window_bounds = array<i64: 128, 128>}, {pipeline_mode = #tpu.pipeline_mode<synchronous>, transform_indices = @transform_20, window_bounds = array<i64: 1, 128>}, {transform_indices = @transform_21, window_bounds = array<i64: 1, 8, 128>}]} {
    %c0 = arith.constant 0 : index
    %c0_0 = arith.constant 0 : index
    %c0_1 = arith.constant 0 : index
    %0 = vector.load %arg1[%c0, %c0_0, %c0_1] : memref<1x16x128xf32, #tpu.memory_space<vmem>>, vector<1x16x128xf32>
    %1 = vector.shape_cast %0 : vector<1x16x128xf32> to vector<16x128xf32>
    %c0_2 = arith.constant 0 : index
    %c0_3 = arith.constant 0 : index
    %2 = vector.load %arg2[%c0_2, %c0_3] : memref<16x128xf32, #tpu.memory_space<vmem>>, vector<16x128xf32>
    %3 = arith.addf %1, %2 : vector<16x128xf32>
    %c0_4 = arith.constant 0 : index
    %c0_5 = arith.constant 0 : index
    %4 = vector.load %arg4[%c0_4, %c0_5] : memref<1x128xf32, #tpu.memory_space<vmem>>, vector<1x128xf32>
    %c0_6 = arith.constant 0 : index
    %c0_7 = arith.constant 0 : index
    %5 = vector.load %arg5[%c0_6, %c0_7] : memref<1x128xf32, #tpu.memory_space<vmem>>, vector<1x128xf32>
    %cst = arith.constant dense<0.000000e+00> : vector<16xf32>
    %6 = vector.multi_reduction <add>, %3, %cst [1] : vector<16x128xf32> to vector<16xf32>
    %7 = vector.shape_cast %6 : vector<16xf32> to vector<16x1xf32>
    %cst_8 = arith.constant 1.280000e+02 : f32
    %8 = vector.broadcast %cst_8 : f32 to vector<16x1xf32>
    %9 = arith.divf %7, %8 : vector<16x1xf32>
    %10 = vector.broadcast %9 : vector<16x1xf32> to vector<16x128xf32>
    %11 = arith.subf %3, %10 : vector<16x128xf32>
    %12 = arith.mulf %11, %11 : vector<16x128xf32>
    %cst_9 = arith.constant dense<0.000000e+00> : vector<16xf32>
    %13 = vector.multi_reduction <add>, %12, %cst_9 [1] : vector<16x128xf32> to vector<16xf32>
    %14 = vector.shape_cast %13 : vector<16xf32> to vector<16x1xf32>
    %cst_10 = arith.constant 1.280000e+02 : f32
    %15 = vector.broadcast %cst_10 : f32 to vector<16x1xf32>
    %16 = arith.divf %14, %15 : vector<16x1xf32>
    %17 = vector.broadcast %9 : vector<16x1xf32> to vector<16x128xf32>
    %18 = arith.subf %3, %17 : vector<16x128xf32>
    %cst_11 = arith.constant 9.99999996E-13 : f32
    %19 = vector.broadcast %cst_11 : f32 to vector<16x1xf32>
    %20 = arith.addf %16, %19 : vector<16x1xf32>
    %21 = math.rsqrt %20 : vector<16x1xf32>
    %22 = vector.broadcast %21 : vector<16x1xf32> to vector<16x128xf32>
    %23 = arith.mulf %18, %22 : vector<16x128xf32>
    %24 = vector.broadcast %4 : vector<1x128xf32> to vector<16x128xf32>
    %25 = arith.mulf %23, %24 : vector<16x128xf32>
    %26 = vector.broadcast %5 : vector<1x128xf32> to vector<16x128xf32>
    %27 = arith.addf %25, %26 : vector<16x128xf32>
    %c0_12 = arith.constant 0 : index
    %c0_13 = arith.constant 0 : index
    %c0_14 = arith.constant 0 : index
    %28 = vector.load %arg3[%c0_12, %c0_13, %c0_14] : memref<1x1x16xf32, #tpu.memory_space<vmem>>, vector<1x1x16xf32>
    %29 = vector.shape_cast %28 : vector<1x1x16xf32> to vector<1x16xf32>
    %30 = arith.truncf %27 : vector<16x128xf32> to vector<16x128xbf16>
    %c0_15 = arith.constant 0 : index
    %c0_16 = arith.constant 0 : index
    %c0_17 = arith.constant 0 : index
    %31 = vector.load %arg6[%c0_15, %c0_16, %c0_17] : memref<2x128x384xbf16, #tpu.memory_space<vmem>>, vector<1x128x384xbf16>
    %32 = vector.shape_cast %31 : vector<1x128x384xbf16> to vector<128x384xbf16>
    %cst_18 = arith.constant dense<0.000000e+00> : vector<16x384xf32>
    %33 = tpu.matmul %30, %32, %cst_18 {dimension_numbers = #tpu.dot_dimension_numbers<[1], [0], [0], [1], [0, 0, 1, 1], [], []>} : vector<16x128xbf16>, vector<128x384xbf16>, vector<16x384xf32> -> vector<16x384xf32>
    %c0_19 = arith.constant 0 : index
    %c0_20 = arith.constant 0 : index
    %c0_21 = arith.constant 0 : index
    %34 = vector.load %arg7[%c0_19, %c0_20, %c0_21] : memref<2x1x384xf32, #tpu.memory_space<vmem>>, vector<1x1x384xf32>
    %35 = vector.shape_cast %34 : vector<1x1x384xf32> to vector<1x384xf32>
    %36 = vector.broadcast %35 : vector<1x384xf32> to vector<16x384xf32>
    %37 = arith.addf %33, %36 : vector<16x384xf32>
    %38 = arith.truncf %37 : vector<16x384xf32> to vector<16x384xbf16>
    %39 = vector.extract_strided_slice %38 {offsets = [0, 0], sizes = [16, 64], strides = [1, 1]} : vector<16x384xbf16> to vector<16x64xbf16>
    %40 = vector.extract_strided_slice %38 {offsets = [0, 128], sizes = [16, 64], strides = [1, 1]} : vector<16x384xbf16> to vector<16x64xbf16>
    %41 = vector.extract_strided_slice %38 {offsets = [0, 256], sizes = [16, 64], strides = [1, 1]} : vector<16x384xbf16> to vector<16x64xbf16>
    %cst_22 = arith.constant dense<0.000000e+00> : vector<16x16xf32>
    %42 = tpu.matmul %39, %40, %cst_22 {dimension_numbers = #tpu.dot_dimension_numbers<[1], [1], [0], [0], [0, 0, 1, 0], [], []>} : vector<16x64xbf16>, vector<16x64xbf16>, vector<16x16xf32> -> vector<16x16xf32>
    %43 = vector.broadcast %29 : vector<1x16xf32> to vector<16x16xf32>
    %44 = arith.addf %42, %43 : vector<16x16xf32>
    %cst_23 = arith.constant dense<0xFF800000> : vector<16xf32>
    %45 = vector.multi_reduction <maximumf>, %44, %cst_23 [1] : vector<16x16xf32> to vector<16xf32>
    %46 = vector.shape_cast %45 : vector<16xf32> to vector<16x1xf32>
    %47 = vector.broadcast %46 : vector<16x1xf32> to vector<16x16xf32>
    %48 = arith.subf %44, %47 : vector<16x16xf32>
    %49 = math.exp %48 : vector<16x16xf32>
    %cst_24 = arith.constant dense<0.000000e+00> : vector<16xf32>
    %50 = vector.multi_reduction <add>, %49, %cst_24 [1] : vector<16x16xf32> to vector<16xf32>
    %51 = vector.shape_cast %50 : vector<16xf32> to vector<16x1xf32>
    %52 = tpu.reciprocal %51 {approx = true} : vector<16x1xf32> -> vector<16x1xf32>
    %53 = vector.broadcast %52 : vector<16x1xf32> to vector<16x16xf32>
    %54 = arith.mulf %49, %53 : vector<16x16xf32>
    %55 = arith.truncf %54 : vector<16x16xf32> to vector<16x16xbf16>
    %cst_25 = arith.constant dense<0.000000e+00> : vector<16x64xf32>
    %56 = tpu.matmul %55, %41, %cst_25 {dimension_numbers = #tpu.dot_dimension_numbers<[1], [0], [0], [1], [0, 0, 1, 1], [], []>} : vector<16x16xbf16>, vector<16x64xbf16>, vector<16x64xf32> -> vector<16x64xf32>
    %57 = vector.extract_strided_slice %38 {offsets = [0, 64], sizes = [16, 64], strides = [1, 1]} : vector<16x384xbf16> to vector<16x64xbf16>
    %58 = vector.extract_strided_slice %38 {offsets = [0, 192], sizes = [16, 64], strides = [1, 1]} : vector<16x384xbf16> to vector<16x64xbf16>
    %59 = vector.extract_strided_slice %38 {offsets = [0, 320], sizes = [16, 64], strides = [1, 1]} : vector<16x384xbf16> to vector<16x64xbf16>
    %cst_26 = arith.constant dense<0.000000e+00> : vector<16x16xf32>
    %60 = tpu.matmul %57, %58, %cst_26 {dimension_numbers = #tpu.dot_dimension_numbers<[1], [1], [0], [0], [0, 0, 1, 0], [], []>} : vector<16x64xbf16>, vector<16x64xbf16>, vector<16x16xf32> -> vector<16x16xf32>
    %61 = vector.broadcast %29 : vector<1x16xf32> to vector<16x16xf32>
    %62 = arith.addf %60, %61 : vector<16x16xf32>
    %cst_27 = arith.constant dense<0xFF800000> : vector<16xf32>
    %63 = vector.multi_reduction <maximumf>, %62, %cst_27 [1] : vector<16x16xf32> to vector<16xf32>
    %64 = vector.shape_cast %63 : vector<16xf32> to vector<16x1xf32>
    %65 = vector.broadcast %64 : vector<16x1xf32> to vector<16x16xf32>
    %66 = arith.subf %62, %65 : vector<16x16xf32>
    %67 = math.exp %66 : vector<16x16xf32>
    %cst_28 = arith.constant dense<0.000000e+00> : vector<16xf32>
    %68 = vector.multi_reduction <add>, %67, %cst_28 [1] : vector<16x16xf32> to vector<16xf32>
    %69 = vector.shape_cast %68 : vector<16xf32> to vector<16x1xf32>
    %70 = tpu.reciprocal %69 {approx = true} : vector<16x1xf32> -> vector<16x1xf32>
    %71 = vector.broadcast %70 : vector<16x1xf32> to vector<16x16xf32>
    %72 = arith.mulf %67, %71 : vector<16x16xf32>
    %73 = arith.truncf %72 : vector<16x16xf32> to vector<16x16xbf16>
    %cst_29 = arith.constant dense<0.000000e+00> : vector<16x64xf32>
    %74 = tpu.matmul %73, %59, %cst_29 {dimension_numbers = #tpu.dot_dimension_numbers<[1], [0], [0], [1], [0, 0, 1, 1], [], []>} : vector<16x16xbf16>, vector<16x64xbf16>, vector<16x64xf32> -> vector<16x64xf32>
    %75 = tpu.concatenate %56, %74 in 1 : vector<16x64xf32>, vector<16x64xf32> -> vector<16x128xf32>
    %76 = arith.truncf %75 : vector<16x128xf32> to vector<16x128xbf16>
    %c0_30 = arith.constant 0 : index
    %c0_31 = arith.constant 0 : index
    %c0_32 = arith.constant 0 : index
    %77 = vector.load %arg8[%c0_30, %c0_31, %c0_32] : memref<2x128x128xbf16, #tpu.memory_space<vmem>>, vector<1x128x128xbf16>
    %78 = vector.shape_cast %77 : vector<1x128x128xbf16> to vector<128x128xbf16>
    %cst_33 = arith.constant dense<0.000000e+00> : vector<16x128xf32>
    %79 = tpu.matmul %76, %78, %cst_33 {dimension_numbers = #tpu.dot_dimension_numbers<[1], [0], [0], [1], [0, 0, 1, 1], [], []>} : vector<16x128xbf16>, vector<128x128xbf16>, vector<16x128xf32> -> vector<16x128xf32>
    %c0_34 = arith.constant 0 : index
    %c0_35 = arith.constant 0 : index
    %c0_36 = arith.constant 0 : index
    %80 = vector.load %arg9[%c0_34, %c0_35, %c0_36] : memref<2x1x128xf32, #tpu.memory_space<vmem>>, vector<1x1x128xf32>
    %81 = vector.shape_cast %80 : vector<1x1x128xf32> to vector<1x128xf32>
    %82 = vector.broadcast %81 : vector<1x128xf32> to vector<16x128xf32>
    %83 = arith.addf %79, %82 : vector<16x128xf32>
    %84 = arith.addf %27, %83 : vector<16x128xf32>
    %c0_37 = arith.constant 0 : index
    %c0_38 = arith.constant 0 : index
    %c0_39 = arith.constant 0 : index
    %85 = vector.load %arg10[%c0_37, %c0_38, %c0_39] : memref<2x1x128xf32, #tpu.memory_space<vmem>>, vector<1x1x128xf32>
    %86 = vector.shape_cast %85 : vector<1x1x128xf32> to vector<1x128xf32>
    %c0_40 = arith.constant 0 : index
    %c0_41 = arith.constant 0 : index
    %c0_42 = arith.constant 0 : index
    %87 = vector.load %arg11[%c0_40, %c0_41, %c0_42] : memref<2x1x128xf32, #tpu.memory_space<vmem>>, vector<1x1x128xf32>
    %88 = vector.shape_cast %87 : vector<1x1x128xf32> to vector<1x128xf32>
    %cst_43 = arith.constant dense<0.000000e+00> : vector<16xf32>
    %89 = vector.multi_reduction <add>, %84, %cst_43 [1] : vector<16x128xf32> to vector<16xf32>
    %90 = vector.shape_cast %89 : vector<16xf32> to vector<16x1xf32>
    %cst_44 = arith.constant 1.280000e+02 : f32
    %91 = vector.broadcast %cst_44 : f32 to vector<16x1xf32>
    %92 = arith.divf %90, %91 : vector<16x1xf32>
    %93 = vector.broadcast %92 : vector<16x1xf32> to vector<16x128xf32>
    %94 = arith.subf %84, %93 : vector<16x128xf32>
    %95 = arith.mulf %94, %94 : vector<16x128xf32>
    %cst_45 = arith.constant dense<0.000000e+00> : vector<16xf32>
    %96 = vector.multi_reduction <add>, %95, %cst_45 [1] : vector<16x128xf32> to vector<16xf32>
    %97 = vector.shape_cast %96 : vector<16xf32> to vector<16x1xf32>
    %cst_46 = arith.constant 1.280000e+02 : f32
    %98 = vector.broadcast %cst_46 : f32 to vector<16x1xf32>
    %99 = arith.divf %97, %98 : vector<16x1xf32>
    %100 = vector.broadcast %92 : vector<16x1xf32> to vector<16x128xf32>
    %101 = arith.subf %84, %100 : vector<16x128xf32>
    %cst_47 = arith.constant 9.99999996E-13 : f32
    %102 = vector.broadcast %cst_47 : f32 to vector<16x1xf32>
    %103 = arith.addf %99, %102 : vector<16x1xf32>
    %104 = math.rsqrt %103 : vector<16x1xf32>
    %105 = vector.broadcast %104 : vector<16x1xf32> to vector<16x128xf32>
    %106 = arith.mulf %101, %105 : vector<16x128xf32>
    %107 = vector.broadcast %86 : vector<1x128xf32> to vector<16x128xf32>
    %108 = arith.mulf %106, %107 : vector<16x128xf32>
    %109 = vector.broadcast %88 : vector<1x128xf32> to vector<16x128xf32>
    %110 = arith.addf %108, %109 : vector<16x128xf32>
    %111 = arith.truncf %110 : vector<16x128xf32> to vector<16x128xbf16>
    %c0_48 = arith.constant 0 : index
    %c0_49 = arith.constant 0 : index
    %c0_50 = arith.constant 0 : index
    %112 = vector.load %arg12[%c0_48, %c0_49, %c0_50] : memref<2x128x256xbf16, #tpu.memory_space<vmem>>, vector<1x128x256xbf16>
    %113 = vector.shape_cast %112 : vector<1x128x256xbf16> to vector<128x256xbf16>
    %cst_51 = arith.constant dense<0.000000e+00> : vector<16x256xf32>
    %114 = tpu.matmul %111, %113, %cst_51 {dimension_numbers = #tpu.dot_dimension_numbers<[1], [0], [0], [1], [0, 0, 1, 1], [], []>} : vector<16x128xbf16>, vector<128x256xbf16>, vector<16x256xf32> -> vector<16x256xf32>
    %c0_52 = arith.constant 0 : index
    %c0_53 = arith.constant 0 : index
    %c0_54 = arith.constant 0 : index
    %115 = vector.load %arg13[%c0_52, %c0_53, %c0_54] : memref<2x1x256xf32, #tpu.memory_space<vmem>>, vector<1x1x256xf32>
    %116 = vector.shape_cast %115 : vector<1x1x256xf32> to vector<1x256xf32>
    %117 = vector.broadcast %116 : vector<1x256xf32> to vector<16x256xf32>
    %118 = arith.addf %114, %117 : vector<16x256xf32>
    %cst_55 = arith.constant 5.000000e-01 : f32
    %119 = vector.broadcast %cst_55 : f32 to vector<16x256xf32>
    %120 = arith.mulf %119, %118 : vector<16x256xf32>
    %cst_56 = arith.constant 0.707106769 : f32
    %121 = vector.broadcast %cst_56 : f32 to vector<16x256xf32>
    %122 = arith.mulf %118, %121 : vector<16x256xf32>
    %cst_57 = arith.constant 0.000000e+00 : f32
    %123 = vector.broadcast %cst_57 : f32 to vector<16x256xf32>
    %124 = arith.cmpf olt, %122, %123 : vector<16x256xf32>
    %cst_58 = arith.constant -1.000000e+00 : f32
    %cst_59 = arith.constant 1.000000e+00 : f32
    %125 = vector.broadcast %cst_58 : f32 to vector<16x256xf32>
    %126 = vector.broadcast %cst_59 : f32 to vector<16x256xf32>
    %127 = arith.select %124, %125, %126 : vector<16x256xi1>, vector<16x256xf32>
    %128 = math.absf %122 : vector<16x256xf32>
    %cst_60 = arith.constant 0.327591091 : f32
    %129 = vector.broadcast %cst_60 : f32 to vector<16x256xf32>
    %130 = arith.mulf %129, %128 : vector<16x256xf32>
    %cst_61 = arith.constant 1.000000e+00 : f32
    %131 = vector.broadcast %cst_61 : f32 to vector<16x256xf32>
    %132 = arith.addf %131, %130 : vector<16x256xf32>
    %133 = tpu.reciprocal %132 {approx = true} : vector<16x256xf32> -> vector<16x256xf32>
    %cst_62 = arith.constant 1.06140542 : f32
    %134 = vector.broadcast %cst_62 : f32 to vector<16x256xf32>
    %135 = arith.mulf %134, %133 : vector<16x256xf32>
    %cst_63 = arith.constant -1.45315206 : f32
    %136 = vector.broadcast %cst_63 : f32 to vector<16x256xf32>
    %137 = arith.addf %135, %136 : vector<16x256xf32>
    %138 = arith.mulf %137, %133 : vector<16x256xf32>
    %cst_64 = arith.constant 1.42141378 : f32
    %139 = vector.broadcast %cst_64 : f32 to vector<16x256xf32>
    %140 = arith.addf %138, %139 : vector<16x256xf32>
    %141 = arith.mulf %140, %133 : vector<16x256xf32>
    %cst_65 = arith.constant -0.284496725 : f32
    %142 = vector.broadcast %cst_65 : f32 to vector<16x256xf32>
    %143 = arith.addf %141, %142 : vector<16x256xf32>
    %144 = arith.mulf %143, %133 : vector<16x256xf32>
    %cst_66 = arith.constant 0.254829586 : f32
    %145 = vector.broadcast %cst_66 : f32 to vector<16x256xf32>
    %146 = arith.addf %144, %145 : vector<16x256xf32>
    %147 = arith.mulf %146, %133 : vector<16x256xf32>
    %cst_67 = arith.constant 0.000000e+00 : f32
    %148 = vector.broadcast %cst_67 : f32 to vector<16x256xf32>
    %149 = arith.subf %148, %128 : vector<16x256xf32>
    %150 = arith.mulf %149, %128 : vector<16x256xf32>
    %151 = math.exp %150 : vector<16x256xf32>
    %152 = arith.mulf %147, %151 : vector<16x256xf32>
    %cst_68 = arith.constant 1.000000e+00 : f32
    %153 = vector.broadcast %cst_68 : f32 to vector<16x256xf32>
    %154 = arith.subf %153, %152 : vector<16x256xf32>
    %155 = arith.mulf %127, %154 : vector<16x256xf32>
    %cst_69 = arith.constant 1.000000e+00 : f32
    %156 = vector.broadcast %cst_69 : f32 to vector<16x256xf32>
    %157 = arith.addf %156, %155 : vector<16x256xf32>
    %158 = arith.mulf %120, %157 : vector<16x256xf32>
    %159 = arith.truncf %158 : vector<16x256xf32> to vector<16x256xbf16>
    %c0_70 = arith.constant 0 : index
    %c0_71 = arith.constant 0 : index
    %c0_72 = arith.constant 0 : index
    %160 = vector.load %arg14[%c0_70, %c0_71, %c0_72] : memref<2x256x128xbf16, #tpu.memory_space<vmem>>, vector<1x256x128xbf16>
    %161 = vector.shape_cast %160 : vector<1x256x128xbf16> to vector<256x128xbf16>
    %cst_73 = arith.constant dense<0.000000e+00> : vector<16x128xf32>
    %162 = tpu.matmul %159, %161, %cst_73 {dimension_numbers = #tpu.dot_dimension_numbers<[1], [0], [0], [1], [0, 0, 1, 1], [], []>} : vector<16x256xbf16>, vector<256x128xbf16>, vector<16x128xf32> -> vector<16x128xf32>
    %c0_74 = arith.constant 0 : index
    %c0_75 = arith.constant 0 : index
    %c0_76 = arith.constant 0 : index
    %163 = vector.load %arg15[%c0_74, %c0_75, %c0_76] : memref<2x1x128xf32, #tpu.memory_space<vmem>>, vector<1x1x128xf32>
    %164 = vector.shape_cast %163 : vector<1x1x128xf32> to vector<1x128xf32>
    %165 = vector.broadcast %164 : vector<1x128xf32> to vector<16x128xf32>
    %166 = arith.addf %162, %165 : vector<16x128xf32>
    %167 = arith.addf %110, %166 : vector<16x128xf32>
    %c0_77 = arith.constant 0 : index
    %c0_78 = arith.constant 0 : index
    %c0_79 = arith.constant 0 : index
    %168 = vector.load %arg16[%c0_77, %c0_78, %c0_79] : memref<2x1x128xf32, #tpu.memory_space<vmem>>, vector<1x1x128xf32>
    %169 = vector.shape_cast %168 : vector<1x1x128xf32> to vector<1x128xf32>
    %c0_80 = arith.constant 0 : index
    %c0_81 = arith.constant 0 : index
    %c0_82 = arith.constant 0 : index
    %170 = vector.load %arg17[%c0_80, %c0_81, %c0_82] : memref<2x1x128xf32, #tpu.memory_space<vmem>>, vector<1x1x128xf32>
    %171 = vector.shape_cast %170 : vector<1x1x128xf32> to vector<1x128xf32>
    %cst_83 = arith.constant dense<0.000000e+00> : vector<16xf32>
    %172 = vector.multi_reduction <add>, %167, %cst_83 [1] : vector<16x128xf32> to vector<16xf32>
    %173 = vector.shape_cast %172 : vector<16xf32> to vector<16x1xf32>
    %cst_84 = arith.constant 1.280000e+02 : f32
    %174 = vector.broadcast %cst_84 : f32 to vector<16x1xf32>
    %175 = arith.divf %173, %174 : vector<16x1xf32>
    %176 = vector.broadcast %175 : vector<16x1xf32> to vector<16x128xf32>
    %177 = arith.subf %167, %176 : vector<16x128xf32>
    %178 = arith.mulf %177, %177 : vector<16x128xf32>
    %cst_85 = arith.constant dense<0.000000e+00> : vector<16xf32>
    %179 = vector.multi_reduction <add>, %178, %cst_85 [1] : vector<16x128xf32> to vector<16xf32>
    %180 = vector.shape_cast %179 : vector<16xf32> to vector<16x1xf32>
    %cst_86 = arith.constant 1.280000e+02 : f32
    %181 = vector.broadcast %cst_86 : f32 to vector<16x1xf32>
    %182 = arith.divf %180, %181 : vector<16x1xf32>
    %183 = vector.broadcast %175 : vector<16x1xf32> to vector<16x128xf32>
    %184 = arith.subf %167, %183 : vector<16x128xf32>
    %cst_87 = arith.constant 9.99999996E-13 : f32
    %185 = vector.broadcast %cst_87 : f32 to vector<16x1xf32>
    %186 = arith.addf %182, %185 : vector<16x1xf32>
    %187 = math.rsqrt %186 : vector<16x1xf32>
    %188 = vector.broadcast %187 : vector<16x1xf32> to vector<16x128xf32>
    %189 = arith.mulf %184, %188 : vector<16x128xf32>
    %190 = vector.broadcast %169 : vector<1x128xf32> to vector<16x128xf32>
    %191 = arith.mulf %189, %190 : vector<16x128xf32>
    %192 = vector.broadcast %171 : vector<1x128xf32> to vector<16x128xf32>
    %193 = arith.addf %191, %192 : vector<16x128xf32>
    %194 = arith.truncf %193 : vector<16x128xf32> to vector<16x128xbf16>
    %c1 = arith.constant 1 : index
    %c0_88 = arith.constant 0 : index
    %c0_89 = arith.constant 0 : index
    %195 = vector.load %arg6[%c1, %c0_88, %c0_89] : memref<2x128x384xbf16, #tpu.memory_space<vmem>>, vector<1x128x384xbf16>
    %196 = vector.shape_cast %195 : vector<1x128x384xbf16> to vector<128x384xbf16>
    %cst_90 = arith.constant dense<0.000000e+00> : vector<16x384xf32>
    %197 = tpu.matmul %194, %196, %cst_90 {dimension_numbers = #tpu.dot_dimension_numbers<[1], [0], [0], [1], [0, 0, 1, 1], [], []>} : vector<16x128xbf16>, vector<128x384xbf16>, vector<16x384xf32> -> vector<16x384xf32>
    %c1_91 = arith.constant 1 : index
    %c0_92 = arith.constant 0 : index
    %c0_93 = arith.constant 0 : index
    %198 = vector.load %arg7[%c1_91, %c0_92, %c0_93] : memref<2x1x384xf32, #tpu.memory_space<vmem>>, vector<1x1x384xf32>
    %199 = vector.shape_cast %198 : vector<1x1x384xf32> to vector<1x384xf32>
    %200 = vector.broadcast %199 : vector<1x384xf32> to vector<16x384xf32>
    %201 = arith.addf %197, %200 : vector<16x384xf32>
    %202 = arith.truncf %201 : vector<16x384xf32> to vector<16x384xbf16>
    %203 = vector.extract_strided_slice %202 {offsets = [0, 0], sizes = [16, 64], strides = [1, 1]} : vector<16x384xbf16> to vector<16x64xbf16>
    %204 = vector.extract_strided_slice %202 {offsets = [0, 128], sizes = [16, 64], strides = [1, 1]} : vector<16x384xbf16> to vector<16x64xbf16>
    %205 = vector.extract_strided_slice %202 {offsets = [0, 256], sizes = [16, 64], strides = [1, 1]} : vector<16x384xbf16> to vector<16x64xbf16>
    %cst_94 = arith.constant dense<0.000000e+00> : vector<16x16xf32>
    %206 = tpu.matmul %203, %204, %cst_94 {dimension_numbers = #tpu.dot_dimension_numbers<[1], [1], [0], [0], [0, 0, 1, 0], [], []>} : vector<16x64xbf16>, vector<16x64xbf16>, vector<16x16xf32> -> vector<16x16xf32>
    %207 = vector.broadcast %29 : vector<1x16xf32> to vector<16x16xf32>
    %208 = arith.addf %206, %207 : vector<16x16xf32>
    %cst_95 = arith.constant dense<0xFF800000> : vector<16xf32>
    %209 = vector.multi_reduction <maximumf>, %208, %cst_95 [1] : vector<16x16xf32> to vector<16xf32>
    %210 = vector.shape_cast %209 : vector<16xf32> to vector<16x1xf32>
    %211 = vector.broadcast %210 : vector<16x1xf32> to vector<16x16xf32>
    %212 = arith.subf %208, %211 : vector<16x16xf32>
    %213 = math.exp %212 : vector<16x16xf32>
    %cst_96 = arith.constant dense<0.000000e+00> : vector<16xf32>
    %214 = vector.multi_reduction <add>, %213, %cst_96 [1] : vector<16x16xf32> to vector<16xf32>
    %215 = vector.shape_cast %214 : vector<16xf32> to vector<16x1xf32>
    %216 = tpu.reciprocal %215 {approx = true} : vector<16x1xf32> -> vector<16x1xf32>
    %217 = vector.broadcast %216 : vector<16x1xf32> to vector<16x16xf32>
    %218 = arith.mulf %213, %217 : vector<16x16xf32>
    %219 = arith.truncf %218 : vector<16x16xf32> to vector<16x16xbf16>
    %cst_97 = arith.constant dense<0.000000e+00> : vector<16x64xf32>
    %220 = tpu.matmul %219, %205, %cst_97 {dimension_numbers = #tpu.dot_dimension_numbers<[1], [0], [0], [1], [0, 0, 1, 1], [], []>} : vector<16x16xbf16>, vector<16x64xbf16>, vector<16x64xf32> -> vector<16x64xf32>
    %221 = vector.extract_strided_slice %202 {offsets = [0, 64], sizes = [16, 64], strides = [1, 1]} : vector<16x384xbf16> to vector<16x64xbf16>
    %222 = vector.extract_strided_slice %202 {offsets = [0, 192], sizes = [16, 64], strides = [1, 1]} : vector<16x384xbf16> to vector<16x64xbf16>
    %223 = vector.extract_strided_slice %202 {offsets = [0, 320], sizes = [16, 64], strides = [1, 1]} : vector<16x384xbf16> to vector<16x64xbf16>
    %cst_98 = arith.constant dense<0.000000e+00> : vector<16x16xf32>
    %224 = tpu.matmul %221, %222, %cst_98 {dimension_numbers = #tpu.dot_dimension_numbers<[1], [1], [0], [0], [0, 0, 1, 0], [], []>} : vector<16x64xbf16>, vector<16x64xbf16>, vector<16x16xf32> -> vector<16x16xf32>
    %225 = vector.broadcast %29 : vector<1x16xf32> to vector<16x16xf32>
    %226 = arith.addf %224, %225 : vector<16x16xf32>
    %cst_99 = arith.constant dense<0xFF800000> : vector<16xf32>
    %227 = vector.multi_reduction <maximumf>, %226, %cst_99 [1] : vector<16x16xf32> to vector<16xf32>
    %228 = vector.shape_cast %227 : vector<16xf32> to vector<16x1xf32>
    %229 = vector.broadcast %228 : vector<16x1xf32> to vector<16x16xf32>
    %230 = arith.subf %226, %229 : vector<16x16xf32>
    %231 = math.exp %230 : vector<16x16xf32>
    %cst_100 = arith.constant dense<0.000000e+00> : vector<16xf32>
    %232 = vector.multi_reduction <add>, %231, %cst_100 [1] : vector<16x16xf32> to vector<16xf32>
    %233 = vector.shape_cast %232 : vector<16xf32> to vector<16x1xf32>
    %234 = tpu.reciprocal %233 {approx = true} : vector<16x1xf32> -> vector<16x1xf32>
    %235 = vector.broadcast %234 : vector<16x1xf32> to vector<16x16xf32>
    %236 = arith.mulf %231, %235 : vector<16x16xf32>
    %237 = arith.truncf %236 : vector<16x16xf32> to vector<16x16xbf16>
    %cst_101 = arith.constant dense<0.000000e+00> : vector<16x64xf32>
    %238 = tpu.matmul %237, %223, %cst_101 {dimension_numbers = #tpu.dot_dimension_numbers<[1], [0], [0], [1], [0, 0, 1, 1], [], []>} : vector<16x16xbf16>, vector<16x64xbf16>, vector<16x64xf32> -> vector<16x64xf32>
    %239 = tpu.concatenate %220, %238 in 1 : vector<16x64xf32>, vector<16x64xf32> -> vector<16x128xf32>
    %240 = arith.truncf %239 : vector<16x128xf32> to vector<16x128xbf16>
    %c1_102 = arith.constant 1 : index
    %c0_103 = arith.constant 0 : index
    %c0_104 = arith.constant 0 : index
    %241 = vector.load %arg8[%c1_102, %c0_103, %c0_104] : memref<2x128x128xbf16, #tpu.memory_space<vmem>>, vector<1x128x128xbf16>
    %242 = vector.shape_cast %241 : vector<1x128x128xbf16> to vector<128x128xbf16>
    %cst_105 = arith.constant dense<0.000000e+00> : vector<16x128xf32>
    %243 = tpu.matmul %240, %242, %cst_105 {dimension_numbers = #tpu.dot_dimension_numbers<[1], [0], [0], [1], [0, 0, 1, 1], [], []>} : vector<16x128xbf16>, vector<128x128xbf16>, vector<16x128xf32> -> vector<16x128xf32>
    %c1_106 = arith.constant 1 : index
    %c0_107 = arith.constant 0 : index
    %c0_108 = arith.constant 0 : index
    %244 = vector.load %arg9[%c1_106, %c0_107, %c0_108] : memref<2x1x128xf32, #tpu.memory_space<vmem>>, vector<1x1x128xf32>
    %245 = vector.shape_cast %244 : vector<1x1x128xf32> to vector<1x128xf32>
    %246 = vector.broadcast %245 : vector<1x128xf32> to vector<16x128xf32>
    %247 = arith.addf %243, %246 : vector<16x128xf32>
    %248 = arith.addf %193, %247 : vector<16x128xf32>
    %c1_109 = arith.constant 1 : index
    %c0_110 = arith.constant 0 : index
    %c0_111 = arith.constant 0 : index
    %249 = vector.load %arg10[%c1_109, %c0_110, %c0_111] : memref<2x1x128xf32, #tpu.memory_space<vmem>>, vector<1x1x128xf32>
    %250 = vector.shape_cast %249 : vector<1x1x128xf32> to vector<1x128xf32>
    %c1_112 = arith.constant 1 : index
    %c0_113 = arith.constant 0 : index
    %c0_114 = arith.constant 0 : index
    %251 = vector.load %arg11[%c1_112, %c0_113, %c0_114] : memref<2x1x128xf32, #tpu.memory_space<vmem>>, vector<1x1x128xf32>
    %252 = vector.shape_cast %251 : vector<1x1x128xf32> to vector<1x128xf32>
    %cst_115 = arith.constant dense<0.000000e+00> : vector<16xf32>
    %253 = vector.multi_reduction <add>, %248, %cst_115 [1] : vector<16x128xf32> to vector<16xf32>
    %254 = vector.shape_cast %253 : vector<16xf32> to vector<16x1xf32>
    %cst_116 = arith.constant 1.280000e+02 : f32
    %255 = vector.broadcast %cst_116 : f32 to vector<16x1xf32>
    %256 = arith.divf %254, %255 : vector<16x1xf32>
    %257 = vector.broadcast %256 : vector<16x1xf32> to vector<16x128xf32>
    %258 = arith.subf %248, %257 : vector<16x128xf32>
    %259 = arith.mulf %258, %258 : vector<16x128xf32>
    %cst_117 = arith.constant dense<0.000000e+00> : vector<16xf32>
    %260 = vector.multi_reduction <add>, %259, %cst_117 [1] : vector<16x128xf32> to vector<16xf32>
    %261 = vector.shape_cast %260 : vector<16xf32> to vector<16x1xf32>
    %cst_118 = arith.constant 1.280000e+02 : f32
    %262 = vector.broadcast %cst_118 : f32 to vector<16x1xf32>
    %263 = arith.divf %261, %262 : vector<16x1xf32>
    %264 = vector.broadcast %256 : vector<16x1xf32> to vector<16x128xf32>
    %265 = arith.subf %248, %264 : vector<16x128xf32>
    %cst_119 = arith.constant 9.99999996E-13 : f32
    %266 = vector.broadcast %cst_119 : f32 to vector<16x1xf32>
    %267 = arith.addf %263, %266 : vector<16x1xf32>
    %268 = math.rsqrt %267 : vector<16x1xf32>
    %269 = vector.broadcast %268 : vector<16x1xf32> to vector<16x128xf32>
    %270 = arith.mulf %265, %269 : vector<16x128xf32>
    %271 = vector.broadcast %250 : vector<1x128xf32> to vector<16x128xf32>
    %272 = arith.mulf %270, %271 : vector<16x128xf32>
    %273 = vector.broadcast %252 : vector<1x128xf32> to vector<16x128xf32>
    %274 = arith.addf %272, %273 : vector<16x128xf32>
    %275 = arith.truncf %274 : vector<16x128xf32> to vector<16x128xbf16>
    %c1_120 = arith.constant 1 : index
    %c0_121 = arith.constant 0 : index
    %c0_122 = arith.constant 0 : index
    %276 = vector.load %arg12[%c1_120, %c0_121, %c0_122] : memref<2x128x256xbf16, #tpu.memory_space<vmem>>, vector<1x128x256xbf16>
    %277 = vector.shape_cast %276 : vector<1x128x256xbf16> to vector<128x256xbf16>
    %cst_123 = arith.constant dense<0.000000e+00> : vector<16x256xf32>
    %278 = tpu.matmul %275, %277, %cst_123 {dimension_numbers = #tpu.dot_dimension_numbers<[1], [0], [0], [1], [0, 0, 1, 1], [], []>} : vector<16x128xbf16>, vector<128x256xbf16>, vector<16x256xf32> -> vector<16x256xf32>
    %c1_124 = arith.constant 1 : index
    %c0_125 = arith.constant 0 : index
    %c0_126 = arith.constant 0 : index
    %279 = vector.load %arg13[%c1_124, %c0_125, %c0_126] : memref<2x1x256xf32, #tpu.memory_space<vmem>>, vector<1x1x256xf32>
    %280 = vector.shape_cast %279 : vector<1x1x256xf32> to vector<1x256xf32>
    %281 = vector.broadcast %280 : vector<1x256xf32> to vector<16x256xf32>
    %282 = arith.addf %278, %281 : vector<16x256xf32>
    %cst_127 = arith.constant 5.000000e-01 : f32
    %283 = vector.broadcast %cst_127 : f32 to vector<16x256xf32>
    %284 = arith.mulf %283, %282 : vector<16x256xf32>
    %cst_128 = arith.constant 0.707106769 : f32
    %285 = vector.broadcast %cst_128 : f32 to vector<16x256xf32>
    %286 = arith.mulf %282, %285 : vector<16x256xf32>
    %cst_129 = arith.constant 0.000000e+00 : f32
    %287 = vector.broadcast %cst_129 : f32 to vector<16x256xf32>
    %288 = arith.cmpf olt, %286, %287 : vector<16x256xf32>
    %cst_130 = arith.constant -1.000000e+00 : f32
    %cst_131 = arith.constant 1.000000e+00 : f32
    %289 = vector.broadcast %cst_130 : f32 to vector<16x256xf32>
    %290 = vector.broadcast %cst_131 : f32 to vector<16x256xf32>
    %291 = arith.select %288, %289, %290 : vector<16x256xi1>, vector<16x256xf32>
    %292 = math.absf %286 : vector<16x256xf32>
    %cst_132 = arith.constant 0.327591091 : f32
    %293 = vector.broadcast %cst_132 : f32 to vector<16x256xf32>
    %294 = arith.mulf %293, %292 : vector<16x256xf32>
    %cst_133 = arith.constant 1.000000e+00 : f32
    %295 = vector.broadcast %cst_133 : f32 to vector<16x256xf32>
    %296 = arith.addf %295, %294 : vector<16x256xf32>
    %297 = tpu.reciprocal %296 {approx = true} : vector<16x256xf32> -> vector<16x256xf32>
    %cst_134 = arith.constant 1.06140542 : f32
    %298 = vector.broadcast %cst_134 : f32 to vector<16x256xf32>
    %299 = arith.mulf %298, %297 : vector<16x256xf32>
    %cst_135 = arith.constant -1.45315206 : f32
    %300 = vector.broadcast %cst_135 : f32 to vector<16x256xf32>
    %301 = arith.addf %299, %300 : vector<16x256xf32>
    %302 = arith.mulf %301, %297 : vector<16x256xf32>
    %cst_136 = arith.constant 1.42141378 : f32
    %303 = vector.broadcast %cst_136 : f32 to vector<16x256xf32>
    %304 = arith.addf %302, %303 : vector<16x256xf32>
    %305 = arith.mulf %304, %297 : vector<16x256xf32>
    %cst_137 = arith.constant -0.284496725 : f32
    %306 = vector.broadcast %cst_137 : f32 to vector<16x256xf32>
    %307 = arith.addf %305, %306 : vector<16x256xf32>
    %308 = arith.mulf %307, %297 : vector<16x256xf32>
    %cst_138 = arith.constant 0.254829586 : f32
    %309 = vector.broadcast %cst_138 : f32 to vector<16x256xf32>
    %310 = arith.addf %308, %309 : vector<16x256xf32>
    %311 = arith.mulf %310, %297 : vector<16x256xf32>
    %cst_139 = arith.constant 0.000000e+00 : f32
    %312 = vector.broadcast %cst_139 : f32 to vector<16x256xf32>
    %313 = arith.subf %312, %292 : vector<16x256xf32>
    %314 = arith.mulf %313, %292 : vector<16x256xf32>
    %315 = math.exp %314 : vector<16x256xf32>
    %316 = arith.mulf %311, %315 : vector<16x256xf32>
    %cst_140 = arith.constant 1.000000e+00 : f32
    %317 = vector.broadcast %cst_140 : f32 to vector<16x256xf32>
    %318 = arith.subf %317, %316 : vector<16x256xf32>
    %319 = arith.mulf %291, %318 : vector<16x256xf32>
    %cst_141 = arith.constant 1.000000e+00 : f32
    %320 = vector.broadcast %cst_141 : f32 to vector<16x256xf32>
    %321 = arith.addf %320, %319 : vector<16x256xf32>
    %322 = arith.mulf %284, %321 : vector<16x256xf32>
    %323 = arith.truncf %322 : vector<16x256xf32> to vector<16x256xbf16>
    %c1_142 = arith.constant 1 : index
    %c0_143 = arith.constant 0 : index
    %c0_144 = arith.constant 0 : index
    %324 = vector.load %arg14[%c1_142, %c0_143, %c0_144] : memref<2x256x128xbf16, #tpu.memory_space<vmem>>, vector<1x256x128xbf16>
    %325 = vector.shape_cast %324 : vector<1x256x128xbf16> to vector<256x128xbf16>
    %cst_145 = arith.constant dense<0.000000e+00> : vector<16x128xf32>
    %326 = tpu.matmul %323, %325, %cst_145 {dimension_numbers = #tpu.dot_dimension_numbers<[1], [0], [0], [1], [0, 0, 1, 1], [], []>} : vector<16x256xbf16>, vector<256x128xbf16>, vector<16x128xf32> -> vector<16x128xf32>
    %c1_146 = arith.constant 1 : index
    %c0_147 = arith.constant 0 : index
    %c0_148 = arith.constant 0 : index
    %327 = vector.load %arg15[%c1_146, %c0_147, %c0_148] : memref<2x1x128xf32, #tpu.memory_space<vmem>>, vector<1x1x128xf32>
    %328 = vector.shape_cast %327 : vector<1x1x128xf32> to vector<1x128xf32>
    %329 = vector.broadcast %328 : vector<1x128xf32> to vector<16x128xf32>
    %330 = arith.addf %326, %329 : vector<16x128xf32>
    %331 = arith.addf %274, %330 : vector<16x128xf32>
    %c1_149 = arith.constant 1 : index
    %c0_150 = arith.constant 0 : index
    %c0_151 = arith.constant 0 : index
    %332 = vector.load %arg16[%c1_149, %c0_150, %c0_151] : memref<2x1x128xf32, #tpu.memory_space<vmem>>, vector<1x1x128xf32>
    %333 = vector.shape_cast %332 : vector<1x1x128xf32> to vector<1x128xf32>
    %c1_152 = arith.constant 1 : index
    %c0_153 = arith.constant 0 : index
    %c0_154 = arith.constant 0 : index
    %334 = vector.load %arg17[%c1_152, %c0_153, %c0_154] : memref<2x1x128xf32, #tpu.memory_space<vmem>>, vector<1x1x128xf32>
    %335 = vector.shape_cast %334 : vector<1x1x128xf32> to vector<1x128xf32>
    %cst_155 = arith.constant dense<0.000000e+00> : vector<16xf32>
    %336 = vector.multi_reduction <add>, %331, %cst_155 [1] : vector<16x128xf32> to vector<16xf32>
    %337 = vector.shape_cast %336 : vector<16xf32> to vector<16x1xf32>
    %cst_156 = arith.constant 1.280000e+02 : f32
    %338 = vector.broadcast %cst_156 : f32 to vector<16x1xf32>
    %339 = arith.divf %337, %338 : vector<16x1xf32>
    %340 = vector.broadcast %339 : vector<16x1xf32> to vector<16x128xf32>
    %341 = arith.subf %331, %340 : vector<16x128xf32>
    %342 = arith.mulf %341, %341 : vector<16x128xf32>
    %cst_157 = arith.constant dense<0.000000e+00> : vector<16xf32>
    %343 = vector.multi_reduction <add>, %342, %cst_157 [1] : vector<16x128xf32> to vector<16xf32>
    %344 = vector.shape_cast %343 : vector<16xf32> to vector<16x1xf32>
    %cst_158 = arith.constant 1.280000e+02 : f32
    %345 = vector.broadcast %cst_158 : f32 to vector<16x1xf32>
    %346 = arith.divf %344, %345 : vector<16x1xf32>
    %347 = vector.broadcast %339 : vector<16x1xf32> to vector<16x128xf32>
    %348 = arith.subf %331, %347 : vector<16x128xf32>
    %cst_159 = arith.constant 9.99999996E-13 : f32
    %349 = vector.broadcast %cst_159 : f32 to vector<16x1xf32>
    %350 = arith.addf %346, %349 : vector<16x1xf32>
    %351 = math.rsqrt %350 : vector<16x1xf32>
    %352 = vector.broadcast %351 : vector<16x1xf32> to vector<16x128xf32>
    %353 = arith.mulf %348, %352 : vector<16x128xf32>
    %354 = vector.broadcast %333 : vector<1x128xf32> to vector<16x128xf32>
    %355 = arith.mulf %353, %354 : vector<16x128xf32>
    %356 = vector.broadcast %335 : vector<1x128xf32> to vector<16x128xf32>
    %357 = arith.addf %355, %356 : vector<16x128xf32>
    %358 = vector.extract_strided_slice %357 {offsets = [0, 0], sizes = [1, 128], strides = [1, 1]} : vector<16x128xf32> to vector<1x128xf32>
    %359 = arith.truncf %358 : vector<1x128xf32> to vector<1x128xbf16>
    %c0_160 = arith.constant 0 : index
    %c0_161 = arith.constant 0 : index
    %360 = vector.load %arg18[%c0_160, %c0_161] : memref<128x128xbf16, #tpu.memory_space<vmem>>, vector<128x128xbf16>
    %cst_162 = arith.constant dense<0.000000e+00> : vector<1x128xf32>
    %361 = tpu.matmul %359, %360, %cst_162 {dimension_numbers = #tpu.dot_dimension_numbers<[1], [0], [0], [1], [0, 0, 1, 1], [], []>} : vector<1x128xbf16>, vector<128x128xbf16>, vector<1x128xf32> -> vector<1x128xf32>
    %c0_163 = arith.constant 0 : index
    %c0_164 = arith.constant 0 : index
    %362 = vector.load %arg19[%c0_163, %c0_164] : memref<1x128xf32, #tpu.memory_space<vmem>>, vector<1x128xf32>
    %363 = arith.addf %361, %362 : vector<1x128xf32>
    %cst_165 = arith.constant 0.000000e+00 : f32
    %364 = vector.broadcast %cst_165 : f32 to vector<1x128xf32>
    %365 = arith.maximumf %363, %364 : vector<1x128xf32>
    %366 = arith.truncf %365 : vector<1x128xf32> to vector<1x128xbf16>
    %c0_166 = arith.constant 0 : index
    %c0_167 = arith.constant 0 : index
    %367 = vector.load %arg20[%c0_166, %c0_167] : memref<128x128xbf16, #tpu.memory_space<vmem>>, vector<128x128xbf16>
    %cst_168 = arith.constant dense<0.000000e+00> : vector<1x128xf32>
    %368 = tpu.matmul %366, %367, %cst_168 {dimension_numbers = #tpu.dot_dimension_numbers<[1], [0], [0], [1], [0, 0, 1, 1], [], []>} : vector<1x128xbf16>, vector<128x128xbf16>, vector<1x128xf32> -> vector<1x128xf32>
    %c0_169 = arith.constant 0 : index
    %c0_170 = arith.constant 0 : index
    %369 = vector.load %arg21[%c0_169, %c0_170] : memref<1x128xf32, #tpu.memory_space<vmem>>, vector<1x128xf32>
    %370 = arith.addf %368, %369 : vector<1x128xf32>
    %371 = vector.shape_cast %370 : vector<1x128xf32> to vector<1x128xf32>
    %372 = vector.broadcast %371 : vector<1x128xf32> to vector<8x128xf32>
    %c0_171 = arith.constant 0 : index
    %c0_172 = arith.constant 0 : index
    %c0_173 = arith.constant 0 : index
    %373 = vector.load %arg22[%c0_171, %c0_172, %c0_173] : memref<1x8x128xf32, #tpu.memory_space<vmem>>, vector<1x8x128xf32>
    %374 = vector.shape_cast %373 : vector<1x8x128xf32> to vector<8x128xf32>
    %375 = vector.shape_cast %372 : vector<8x128xf32> to vector<1x8x128xf32>
    tpu.vector_store %arg22[%c0_171, %c0_172, %c0_173], %375 {strides = array<i32>} : memref<1x8x128xf32, #tpu.memory_space<vmem>>, vector<1x8x128xf32>,
    return
  }
  func.func @transform_0(%arg0: i32) -> (i32, i32, i32) {
    %c0_i32 = arith.constant 0 : i32
    %c0_i32_0 = arith.constant 0 : i32
    %c0_i32_1 = arith.constant 0 : i32
    return %arg0, %c0_i32, %c0_i32_0 : i32, i32, i32
  }
  func.func @transform_1(%arg0: i32) -> (i32, i32) {
    %c0_i32 = arith.constant 0 : i32
    %c0_i32_0 = arith.constant 0 : i32
    %c0_i32_1 = arith.constant 0 : i32
    return %c0_i32, %c0_i32_0 : i32, i32
  }
  func.func @transform_2(%arg0: i32) -> (i32, i32, i32) {
    %c0_i32 = arith.constant 0 : i32
    %c0_i32_0 = arith.constant 0 : i32
    %c0_i32_1 = arith.constant 0 : i32
    return %arg0, %c0_i32, %c0_i32_0 : i32, i32, i32
  }
  func.func @transform_3(%arg0: i32) -> (i32, i32) {
    %c0_i32 = arith.constant 0 : i32
    %c0_i32_0 = arith.constant 0 : i32
    %c0_i32_1 = arith.constant 0 : i32
    return %c0_i32, %c0_i32_0 : i32, i32
  }
  func.func @transform_4(%arg0: i32) -> (i32, i32) {
    %c0_i32 = arith.constant 0 : i32
    %c0_i32_0 = arith.constant 0 : i32
    %c0_i32_1 = arith.constant 0 : i32
    return %c0_i32, %c0_i32_0 : i32, i32
  }
  func.func @transform_5(%arg0: i32) -> (i32, i32, i32) {
    %c0_i32 = arith.constant 0 : i32
    %c0_i32_0 = arith.constant 0 : i32
    %c0_i32_1 = arith.constant 0 : i32
    %c0_i32_2 = arith.constant 0 : i32
    return %c0_i32, %c0_i32_0, %c0_i32_1 : i32, i32, i32
  }
  func.func @transform_6(%arg0: i32) -> (i32, i32, i32) {
    %c0_i32 = arith.constant 0 : i32
    %c0_i32_0 = arith.constant 0 : i32
    %c0_i32_1 = arith.constant 0 : i32
    %c0_i32_2 = arith.constant 0 : i32
    return %c0_i32, %c0_i32_0, %c0_i32_1 : i32, i32, i32
  }
  func.func @transform_7(%arg0: i32) -> (i32, i32, i32) {
    %c0_i32 = arith.constant 0 : i32
    %c0_i32_0 = arith.constant 0 : i32
    %c0_i32_1 = arith.constant 0 : i32
    %c0_i32_2 = arith.constant 0 : i32
    return %c0_i32, %c0_i32_0, %c0_i32_1 : i32, i32, i32
  }
  func.func @transform_8(%arg0: i32) -> (i32, i32, i32) {
    %c0_i32 = arith.constant 0 : i32
    %c0_i32_0 = arith.constant 0 : i32
    %c0_i32_1 = arith.constant 0 : i32
    %c0_i32_2 = arith.constant 0 : i32
    return %c0_i32, %c0_i32_0, %c0_i32_1 : i32, i32, i32
  }
  func.func @transform_9(%arg0: i32) -> (i32, i32, i32) {
    %c0_i32 = arith.constant 0 : i32
    %c0_i32_0 = arith.constant 0 : i32
    %c0_i32_1 = arith.constant 0 : i32
    %c0_i32_2 = arith.constant 0 : i32
    return %c0_i32, %c0_i32_0, %c0_i32_1 : i32, i32, i32
  }
  func.func @transform_10(%arg0: i32) -> (i32, i32, i32) {
    %c0_i32 = arith.constant 0 : i32
    %c0_i32_0 = arith.constant 0 : i32
    %c0_i32_1 = arith.constant 0 : i32
    %c0_i32_2 = arith.constant 0 : i32
    return %c0_i32, %c0_i32_0, %c0_i32_1 : i32, i32, i32
  }
  func.func @transform_11(%arg0: i32) -> (i32, i32, i32) {
    %c0_i32 = arith.constant 0 : i32
    %c0_i32_0 = arith.constant 0 : i32
    %c0_i32_1 = arith.constant 0 : i32
    %c0_i32_2 = arith.constant 0 : i32
    return %c0_i32, %c0_i32_0, %c0_i32_1 : i32, i32, i32
  }
  func.func @transform_12(%arg0: i32) -> (i32, i32, i32) {
    %c0_i32 = arith.constant 0 : i32
    %c0_i32_0 = arith.constant 0 : i32
    %c0_i32_1 = arith.constant 0 : i32
    %c0_i32_2 = arith.constant 0 : i32
    return %c0_i32, %c0_i32_0, %c0_i32_1 : i32, i32, i32
  }
  func.func @transform_13(%arg0: i32) -> (i32, i32, i32) {
    %c0_i32 = arith.constant 0 : i32
    %c0_i32_0 = arith.constant 0 : i32
    %c0_i32_1 = arith.constant 0 : i32
    %c0_i32_2 = arith.constant 0 : i32
    return %c0_i32, %c0_i32_0, %c0_i32_1 : i32, i32, i32
  }
  func.func @transform_14(%arg0: i32) -> (i32, i32, i32) {
    %c0_i32 = arith.constant 0 : i32
    %c0_i32_0 = arith.constant 0 : i32
    %c0_i32_1 = arith.constant 0 : i32
    %c0_i32_2 = arith.constant 0 : i32
    return %c0_i32, %c0_i32_0, %c0_i32_1 : i32, i32, i32
  }
  func.func @transform_15(%arg0: i32) -> (i32, i32, i32) {
    %c0_i32 = arith.constant 0 : i32
    %c0_i32_0 = arith.constant 0 : i32
    %c0_i32_1 = arith.constant 0 : i32
    %c0_i32_2 = arith.constant 0 : i32
    return %c0_i32, %c0_i32_0, %c0_i32_1 : i32, i32, i32
  }
  func.func @transform_16(%arg0: i32) -> (i32, i32, i32) {
    %c0_i32 = arith.constant 0 : i32
    %c0_i32_0 = arith.constant 0 : i32
    %c0_i32_1 = arith.constant 0 : i32
    %c0_i32_2 = arith.constant 0 : i32
    return %c0_i32, %c0_i32_0, %c0_i32_1 : i32, i32, i32
  }
  func.func @transform_17(%arg0: i32) -> (i32, i32) {
    %c0_i32 = arith.constant 0 : i32
    %c0_i32_0 = arith.constant 0 : i32
    %c0_i32_1 = arith.constant 0 : i32
    return %c0_i32, %c0_i32_0 : i32, i32
  }
  func.func @transform_18(%arg0: i32) -> (i32, i32) {
    %c0_i32 = arith.constant 0 : i32
    %c0_i32_0 = arith.constant 0 : i32
    %c0_i32_1 = arith.constant 0 : i32
    return %c0_i32, %c0_i32_0 : i32, i32
  }
  func.func @transform_19(%arg0: i32) -> (i32, i32) {
    %c0_i32 = arith.constant 0 : i32
    %c0_i32_0 = arith.constant 0 : i32
    %c0_i32_1 = arith.constant 0 : i32
    return %c0_i32, %c0_i32_0 : i32, i32
  }
  func.func @transform_20(%arg0: i32) -> (i32, i32) {
    %c0_i32 = arith.constant 0 : i32
    %c0_i32_0 = arith.constant 0 : i32
    %c0_i32_1 = arith.constant 0 : i32
    return %c0_i32, %c0_i32_0 : i32, i32
  }
  func.func @transform_21(%arg0: i32) -> (i32, i32, i32) {
    %c0_i32 = arith.constant 0 : i32
    %c0_i32_0 = arith.constant 0 : i32
    %c0_i32_1 = arith.constant 0 : i32
    return %arg0, %c0_i32, %c0_i32_0 : i32, i32, i32
  }
}

</mosaic_0001>

<llo_original>
// kernel: forward.1
$region0: #{forward.1}
  #allocation0 [shape = 'u32[]', space=smem, size = 0x4, offset = 0x4, fixed_abs, tag = 'smem constant byte address 0x4 - core index']
  #allocation1 [shape = 'u32[144,128]{1,0:T(1,128)}', space=vmem, size = 0x12000, scoped, tag = 'internal scratch']
  %s0 = inlined_call_operand.vmem [shape: f32[2,16,128], index: 0, kind: input, shape index: {}]
  %s1 = inlined_call_operand.vmem [shape: f32[16,128], index: 1, kind: input, shape index: {}]
  %s2 = inlined_call_operand.vmem [shape: f32[2,1,16], index: 2, kind: input, shape index: {}]
  %s3 = inlined_call_operand.vmem [shape: f32[1,128], index: 3, kind: input, shape index: {}]
  %s4 = inlined_call_operand.vmem [shape: f32[1,128], index: 4, kind: input, shape index: {}]
  %s5 = inlined_call_operand.vmem [shape: bf16[2,128,384], index: 5, kind: input, shape index: {}]
  %s6 = inlined_call_operand.vmem [shape: f32[2,1,384], index: 6, kind: input, shape index: {}]
  %s7 = inlined_call_operand.hbm [shape: bf16[2,128,128], index: 7, kind: input, shape index: {}]
  %s8 = inlined_call_operand.vmem [shape: f32[2,1,128], index: 8, kind: input, shape index: {}]
  %s9 = inlined_call_operand.vmem [shape: f32[2,1,128], index: 9, kind: input, shape index: {}]
  %s10 = inlined_call_operand.vmem [shape: f32[2,1,128], index: 10, kind: input, shape index: {}]
  %s11 = inlined_call_operand.hbm [shape: bf16[2,128,256], index: 11, kind: input, shape index: {}]
  %s12 = inlined_call_operand.vmem [shape: f32[2,1,256], index: 12, kind: input, shape index: {}]
  %s13 = inlined_call_operand.hbm [shape: bf16[2,256,128], index: 13, kind: input, shape index: {}]
  %s14 = inlined_call_operand.vmem [shape: f32[2,1,128], index: 14, kind: input, shape index: {}]
  %s15 = inlined_call_operand.vmem [shape: f32[2,1,128], index: 15, kind: input, shape index: {}]
  %s16 = inlined_call_operand.vmem [shape: f32[2,1,128], index: 16, kind: input, shape index: {}]
  %s17 = inlined_call_operand.hbm [shape: bf16[128,128], index: 17, kind: input, shape index: {}]
  %s18 = inlined_call_operand.vmem [shape: f32[1,128], index: 18, kind: input, shape index: {}]
  %s19 = inlined_call_operand.hbm [shape: bf16[128,128], index: 19, kind: input, shape index: {}]
  %s20 = inlined_call_operand.vmem [shape: f32[1,128], index: 20, kind: input, shape index: {}]
  %s21 = inlined_call_operand.vmem [shape: f32[2,8,128], index: 21, kind: output, shape index: {}]
  %s22 = sld [smem:[#allocation0]]
  $region137: #{forward.1} parent=0
    _
  %s24 = ssub.s32 1, %s22
  %s25 = scalar_select 0, %s24, %s22
  $region1: #{forward.1} parent=0
    #allocation2 [shape = 'u8[65536]{0}', space=vmem, size = 0x10000, scoped, tag = 'input window, operand 7, single buffered']
    #allocation3 [shape = 's32[2]{0}', space=sflag, size = 0x8, scoped, tag = 'scoped memory for forward.1']
    #allocation4 [shape = 'u8[131072]{0}', space=vmem, size = 0x20000, scoped, tag = 'input window, operand 11, single buffered']
    #allocation5 [shape = 's32[1]{0}', space=sflag, size = 0x4, scoped, tag = 'scoped memory for forward.1']
    #allocation6 [shape = 'u8[131072]{0}', space=vmem, size = 0x20000, scoped, tag = 'input window, operand 13, single buffered']
    #allocation7 [shape = 'u8[32768]{0}', space=vmem, size = 0x8000, scoped, tag = 'input window, operand 17, single buffered']
    #allocation8 [shape = 's32[1]{0}', space=sflag, size = 0x4, scoped, tag = 'scoped memory for forward.1']
    #allocation9 [shape = 'u8[32768]{0}', space=vmem, size = 0x8000, scoped, tag = 'input window, operand 19, single buffered']
    %26 = vsyncpa [#allocation3], 0
    %27 = vsyncpa [#allocation5], 0
    %28 = vsyncpa [#allocation8], 0
    loop: start=0, step=1, limit=4
    $region2: #{forward.1} parent=1 // loop_pre_header
      _
    $region3: #{forward.1} parent=1 // loop_header
      %s30 = sphi 0, %s34
      %p31 = scmp.ge.s32.totalorder %s30, 4
      %s40 = sphi 0, %s42
      %s43 = sphi 0, %s40
      %s44 = sphi 0, %s43
      %s60 = sphi 0, %s44
      %s64 = sphi 0, %s64
      %s66 = sphi 0, %s64
      %s67 = sphi 0, %s66
      %s81 = sphi 0, %s67
      %s87 = sphi 0, %s89
      %s90 = sphi 0, %s87
      %s91 = sphi 0, %s90
      %s107 = sphi 0, %s91
      %s111 = sphi 0, %s111
      %s113 = sphi 0, %s111
      %s114 = sphi 0, %s113
      %s128 = sphi 0, %s114
      %s132 = sphi 0, %s132
      %s134 = sphi 0, %s132
      %s135 = sphi 0, %s134
      %s149 = sphi 0, %s135
      %s153 = sphi 0, %s153
      %s155 = sphi 0, %s153
      %s156 = sphi 0, %s155
      %s170 = sphi 0, %s156
      %s174 = sphi 0, %s174
      %s176 = sphi 0, %s174
      %s177 = sphi 0, %s176
      %s191 = sphi 0, %s177
      %s195 = sphi 0, %s195
      %s197 = sphi 0, %s195
      %s198 = sphi 0, %s197
      %s212 = sphi 0, %s198
      %s216 = sphi 0, %s216
      %s218 = sphi 0, %s216
      %s219 = sphi 0, %s218
      %s233 = sphi 0, %s219
      %s237 = sphi 0, %s237
      %s239 = sphi 0, %s237
      %s240 = sphi 0, %s239
      %s254 = sphi 0, %s240
      %s258 = sphi 0, %s258
      %s260 = sphi 0, %s258
      %s261 = sphi 0, %s260
      %s275 = sphi 0, %s261
      %s279 = sphi 0, %s279
      %s281 = sphi 0, %s279
      %s282 = sphi 0, %s281
      %s296 = sphi 0, %s282
      %s300 = sphi 0, %s300
      %s302 = sphi 0, %s300
      %s303 = sphi 0, %s302
      %s317 = sphi 0, %s303
      %s321 = sphi 0, %s321
      %s323 = sphi 0, %s321
      %s324 = sphi 0, %s323
      %s338 = sphi 0, %s324
      %s342 = sphi 0, %s342
      %s344 = sphi 0, %s342
      %s345 = sphi 0, %s344
      %s359 = sphi 0, %s345
      %s363 = sphi 0, %s363
      %s365 = sphi 0, %s363
      %s366 = sphi 0, %s365
      %s380 = sphi 0, %s366
      %s384 = sphi 0, %s384
      %s386 = sphi 0, %s384
      %s387 = sphi 0, %s386
      %s401 = sphi 0, %s387
      %s405 = sphi 0, %s405
      %s407 = sphi 0, %s405
      %s408 = sphi 0, %s407
      %s422 = sphi 0, %s408
      %s426 = sphi 0, %s426
      %s428 = sphi 0, %s426
      %s429 = sphi 0, %s428
      %s443 = sphi 0, %s429
      %s447 = sphi 0, %s447
      %s449 = sphi 0, %s447
      %s450 = sphi 0, %s449
      %s464 = sphi 0, %s450
      %s468 = sphi 0, %s468
      %s470 = sphi 0, %s468
      %s471 = sphi 0, %s470
      %s485 = sphi 0, %s471
      %s491 = sphi 0, %s493
      %s494 = sphi 0, %s491
      %s495 = sphi 0, %s494
      %s511 = sphi 0, %s495
    $region4: #{forward.1} parent=1 // loop_header_branch
      %33 = sbr.rel (%p31) target = $region8
    $region5: #{forward.1} parent=1 // loop_body
      %s35 = ssub.s32 %s30, 1
      %s36 = ssub.s32 %s30, 2
      %s37 = sadd.s32 %s30, 1
      %s38 = ssub.s32 %s30, %s37
      %p39 = scmp.eq.s32.totalorder %s38, 0
      %s41 = sadd.s32 %s40, 1
      %s42 = scalar_select %p39, %s40, %s41
      %p45 = pneg %p39
      %p46 = scmp.eq.s32.totalorder %s30, 1
      %p47 = por %p45, %p46
      %p48 = scmp.ne.s32.totalorder %s40, %s43
      %p49 = scmp.eq.s32.totalorder %s30, 0
      %p50 = por %p48, %p49
      %p51 = scmp.ne.s32.totalorder %s40, %s43
      %p52 = scmp.eq.s32.totalorder %s35, 1
      %p53 = por %p51, %p52
      %p54 = scmp.ne.s32.totalorder %s43, %s44
      %p55 = scmp.eq.s32.totalorder %s35, 0
      %p56 = por %p54, %p55
      %p57 = scmp.ne.s32.totalorder %s43, %s44
      %p58 = scmp.eq.s32.totalorder %s36, 1
      %p59 = por %p57, %p58
      %p61 = scmp.ne.s32.totalorder %s44, %s60
      %p62 = scmp.eq.s32.totalorder %s36, 0
      %p63 = por %p61, %p62
      %s65 = sadd.s32 %s64, 1
      %p68 = scmp.eq.s32.totalorder %s30, 1
      %p69 = scmp.ne.s32.totalorder %s64, %s66
      %p70 = scmp.eq.s32.totalorder %s30, 0
      %p71 = por %p69, %p70
      %p72 = scmp.ne.s32.totalorder %s64, %s66
      %p73 = scmp.eq.s32.totalorder %s35, 1
      %p74 = por %p72, %p73
      %p75 = scmp.ne.s32.totalorder %s66, %s67
      %p76 = scmp.eq.s32.totalorder %s35, 0
      %p77 = por %p75, %p76
      %p78 = scmp.ne.s32.totalorder %s66, %s67
      %p79 = scmp.eq.s32.totalorder %s36, 1
      %p80 = por %p78, %p79
      %p82 = scmp.ne.s32.totalorder %s67, %s81
      %p83 = scmp.eq.s32.totalorder %s36, 0
      %p84 = por %p82, %p83
      %s85 = ssub.s32 %s30, %s37
      %p86 = scmp.eq.s32.totalorder %s85, 0
      %s88 = sadd.s32 %s87, 1
      %s89 = scalar_select %p86, %s87, %s88
      %p92 = pneg %p86
      %p93 = scmp.eq.s32.totalorder %s30, 1
      %p94 = por %p92, %p93
      %p95 = scmp.ne.s32.totalorder %s87, %s90
      %p96 = scmp.eq.s32.totalorder %s30, 0
      %p97 = por %p95, %p96
      %p98 = scmp.ne.s32.totalorder %s87, %s90
      %p99 = scmp.eq.s32.totalorder %s35, 1
      %p100 = por %p98, %p99
      %p101 = scmp.ne.s32.totalorder %s90, %s91
      %p102 = scmp.eq.s32.totalorder %s35, 0
      %p103 = por %p101, %p102
      %p104 = scmp.ne.s32.totalorder %s90, %s91
      %p105 = scmp.eq.s32.totalorder %s36, 1
      %p106 = por %p104, %p105
      %p108 = scmp.ne.s32.totalorder %s91, %s107
      %p109 = scmp.eq.s32.totalorder %s36, 0
      %p110 = por %p108, %p109
      %s112 = sadd.s32 %s111, 1
      %p115 = scmp.eq.s32.totalorder %s30, 1
      %p116 = scmp.ne.s32.totalorder %s111, %s113
      %p117 = scmp.eq.s32.totalorder %s30, 0
      %p118 = por %p116, %p117
      %p119 = scmp.ne.s32.totalorder %s111, %s113
      %p120 = scmp.eq.s32.totalorder %s35, 1
      %p121 = por %p119, %p120
      %p122 = scmp.ne.s32.totalorder %s113, %s114
      %p123 = scmp.eq.s32.totalorder %s35, 0
      %p124 = por %p122, %p123
      %p125 = scmp.ne.s32.totalorder %s113, %s114
      %p126 = scmp.eq.s32.totalorder %s36, 1
      %p127 = por %p125, %p126
      %p129 = scmp.ne.s32.totalorder %s114, %s128
      %p130 = scmp.eq.s32.totalorder %s36, 0
      %p131 = por %p129, %p130
      %s133 = sadd.s32 %s132, 1
      %p136 = scmp.eq.s32.totalorder %s30, 1
      %p137 = scmp.ne.s32.totalorder %s132, %s134
      %p138 = scmp.eq.s32.totalorder %s30, 0
      %p139 = por %p137, %p138
      %p140 = scmp.ne.s32.totalorder %s132, %s134
      %p141 = scmp.eq.s32.totalorder %s35, 1
      %p142 = por %p140, %p141
      %p143 = scmp.ne.s32.totalorder %s134, %s135
      %p144 = scmp.eq.s32.totalorder %s35, 0
      %p145 = por %p143, %p144
      %p146 = scmp.ne.s32.totalorder %s134, %s135
      %p147 = scmp.eq.s32.totalorder %s36, 1
      %p148 = por %p146, %p147
      %p150 = scmp.ne.s32.totalorder %s135, %s149
      %p151 = scmp.eq.s32.totalorder %s36, 0
      %p152 = por %p150, %p151
      %s154 = sadd.s32 %s153, 1
      %p157 = scmp.eq.s32.totalorder %s30, 1
      %p158 = scmp.ne.s32.totalorder %s153, %s155
      %p159 = scmp.eq.s32.totalorder %s30, 0
      %p160 = por %p158, %p159
      %p161 = scmp.ne.s32.totalorder %s153, %s155
      %p162 = scmp.eq.s32.totalorder %s35, 1
      %p163 = por %p161, %p162
      %p164 = scmp.ne.s32.totalorder %s155, %s156
      %p165 = scmp.eq.s32.totalorder %s35, 0
      %p166 = por %p164, %p165
      %p167 = scmp.ne.s32.totalorder %s155, %s156
      %p168 = scmp.eq.s32.totalorder %s36, 1
      %p169 = por %p167, %p168
      %p171 = scmp.ne.s32.totalorder %s156, %s170
      %p172 = scmp.eq.s32.totalorder %s36, 0
      %p173 = por %p171, %p172
      %s175 = sadd.s32 %s174, 1
      %p178 = scmp.eq.s32.totalorder %s30, 1
      %p179 = scmp.ne.s32.totalorder %s174, %s176
      %p180 = scmp.eq.s32.totalorder %s30, 0
      %p181 = por %p179, %p180
      %p182 = scmp.ne.s32.totalorder %s174, %s176
      %p183 = scmp.eq.s32.totalorder %s35, 1
      %p184 = por %p182, %p183
      %p185 = scmp.ne.s32.totalorder %s176, %s177
      %p186 = scmp.eq.s32.totalorder %s35, 0
      %p187 = por %p185, %p186
      %p188 = scmp.ne.s32.totalorder %s176, %s177
      %p189 = scmp.eq.s32.totalorder %s36, 1
      %p190 = por %p188, %p189
      %p192 = scmp.ne.s32.totalorder %s177, %s191
      %p193 = scmp.eq.s32.totalorder %s36, 0
      %p194 = por %p192, %p193
      %s196 = sadd.s32 %s195, 1
      %p199 = scmp.eq.s32.totalorder %s30, 1
      %p200 = scmp.ne.s32.totalorder %s195, %s197
      %p201 = scmp.eq.s32.totalorder %s30, 0
      %p202 = por %p200, %p201
      %p203 = scmp.ne.s32.totalorder %s195, %s197
      %p204 = scmp.eq.s32.totalorder %s35, 1
      %p205 = por %p203, %p204
      %p206 = scmp.ne.s32.totalorder %s197, %s198
      %p207 = scmp.eq.s32.totalorder %s35, 0
      %p208 = por %p206, %p207
      %p209 = scmp.ne.s32.totalorder %s197, %s198
      %p210 = scmp.eq.s32.totalorder %s36, 1
      %p211 = por %p209, %p210
      %p213 = scmp.ne.s32.totalorder %s198, %s212
      %p214 = scmp.eq.s32.totalorder %s36, 0
      %p215 = por %p213, %p214
      %s217 = sadd.s32 %s216, 1
      %p220 = scmp.eq.s32.totalorder %s30, 1
      %p221 = scmp.ne.s32.totalorder %s216, %s218
      %p222 = scmp.eq.s32.totalorder %s30, 0
      %p223 = por %p221, %p222
      %p224 = scmp.ne.s32.totalorder %s216, %s218
      %p225 = scmp.eq.s32.totalorder %s35, 1
      %p226 = por %p224, %p225
      %p227 = scmp.ne.s32.totalorder %s218, %s219
      %p228 = scmp.eq.s32.totalorder %s35, 0
      %p229 = por %p227, %p228
      %p230 = scmp.ne.s32.totalorder %s218, %s219
      %p231 = scmp.eq.s32.totalorder %s36, 1
      %p232 = por %p230, %p231
      %p234 = scmp.ne.s32.totalorder %s219, %s233
      %p235 = scmp.eq.s32.totalorder %s36, 0
      %p236 = por %p234, %p235
      %s238 = sadd.s32 %s237, 1
      %p241 = scmp.eq.s32.totalorder %s30, 1
      %p242 = scmp.ne.s32.totalorder %s237, %s239
      %p243 = scmp.eq.s32.totalorder %s30, 0
      %p244 = por %p242, %p243
      %p245 = scmp.ne.s32.totalorder %s237, %s239
      %p246 = scmp.eq.s32.totalorder %s35, 1
      %p247 = por %p245, %p246
      %p248 = scmp.ne.s32.totalorder %s239, %s240
      %p249 = scmp.eq.s32.totalorder %s35, 0
      %p250 = por %p248, %p249
      %p251 = scmp.ne.s32.totalorder %s239, %s240
      %p252 = scmp.eq.s32.totalorder %s36, 1
      %p253 = por %p251, %p252
      %p255 = scmp.ne.s32.totalorder %s240, %s254
      %p256 = scmp.eq.s32.totalorder %s36, 0
      %p257 = por %p255, %p256
      %s259 = sadd.s32 %s258, 1
      %p262 = scmp.eq.s32.totalorder %s30, 1
      %p263 = scmp.ne.s32.totalorder %s258, %s260
      %p264 = scmp.eq.s32.totalorder %s30, 0
      %p265 = por %p263, %p264
      %p266 = scmp.ne.s32.totalorder %s258, %s260
      %p267 = scmp.eq.s32.totalorder %s35, 1
      %p268 = por %p266, %p267
      %p269 = scmp.ne.s32.totalorder %s260, %s261
      %p270 = scmp.eq.s32.totalorder %s35, 0
      %p271 = por %p269, %p270
      %p272 = scmp.ne.s32.totalorder %s260, %s261
      %p273 = scmp.eq.s32.totalorder %s36, 1
      %p274 = por %p272, %p273
      %p276 = scmp.ne.s32.totalorder %s261, %s275
      %p277 = scmp.eq.s32.totalorder %s36, 0
      %p278 = por %p276, %p277
      %s280 = sadd.s32 %s279, 1
      %p283 = scmp.eq.s32.totalorder %s30, 1
      %p284 = scmp.ne.s32.totalorder %s279, %s281
      %p285 = scmp.eq.s32.totalorder %s30, 0
      %p286 = por %p284, %p285
      %p287 = scmp.ne.s32.totalorder %s279, %s281
      %p288 = scmp.eq.s32.totalorder %s35, 1
      %p289 = por %p287, %p288
      %p290 = scmp.ne.s32.totalorder %s281, %s282
      %p291 = scmp.eq.s32.totalorder %s35, 0
      %p292 = por %p290, %p291
      %p293 = scmp.ne.s32.totalorder %s281, %s282
      %p294 = scmp.eq.s32.totalorder %s36, 1
      %p295 = por %p293, %p294
      %p297 = scmp.ne.s32.totalorder %s282, %s296
      %p298 = scmp.eq.s32.totalorder %s36, 0
      %p299 = por %p297, %p298
      %s301 = sadd.s32 %s300, 1
      %p304 = scmp.eq.s32.totalorder %s30, 1
      %p305 = scmp.ne.s32.totalorder %s300, %s302
      %p306 = scmp.eq.s32.totalorder %s30, 0
      %p307 = por %p305, %p306
      %p308 = scmp.ne.s32.totalorder %s300, %s302
      %p309 = scmp.eq.s32.totalorder %s35, 1
      %p310 = por %p308, %p309
      %p311 = scmp.ne.s32.totalorder %s302, %s303
      %p312 = scmp.eq.s32.totalorder %s35, 0
      %p313 = por %p311, %p312
      %p314 = scmp.ne.s32.totalorder %s302, %s303
      %p315 = scmp.eq.s32.totalorder %s36, 1
      %p316 = por %p314, %p315
      %p318 = scmp.ne.s32.totalorder %s303, %s317
      %p319 = scmp.eq.s32.totalorder %s36, 0
      %p320 = por %p318, %p319
      %s322 = sadd.s32 %s321, 1
      %p325 = scmp.eq.s32.totalorder %s30, 1
      %p326 = scmp.ne.s32.totalorder %s321, %s323
      %p327 = scmp.eq.s32.totalorder %s30, 0
      %p328 = por %p326, %p327
      %p329 = scmp.ne.s32.totalorder %s321, %s323
      %p330 = scmp.eq.s32.totalorder %s35, 1
      %p331 = por %p329, %p330
      %p332 = scmp.ne.s32.totalorder %s323, %s324
      %p333 = scmp.eq.s32.totalorder %s35, 0
      %p334 = por %p332, %p333
      %p335 = scmp.ne.s32.totalorder %s323, %s324
      %p336 = scmp.eq.s32.totalorder %s36, 1
      %p337 = por %p335, %p336
      %p339 = scmp.ne.s32.totalorder %s324, %s338
      %p340 = scmp.eq.s32.totalorder %s36, 0
      %p341 = por %p339, %p340
      %s343 = sadd.s32 %s342, 1
      %p346 = scmp.eq.s32.totalorder %s30, 1
      %p347 = scmp.ne.s32.totalorder %s342, %s344
      %p348 = scmp.eq.s32.totalorder %s30, 0
      %p349 = por %p347, %p348
      %p350 = scmp.ne.s32.totalorder %s342, %s344
      %p351 = scmp.eq.s32.totalorder %s35, 1
      %p352 = por %p350, %p351
      %p353 = scmp.ne.s32.totalorder %s344, %s345
      %p354 = scmp.eq.s32.totalorder %s35, 0
      %p355 = por %p353, %p354
      %p356 = scmp.ne.s32.totalorder %s344, %s345
      %p357 = scmp.eq.s32.totalorder %s36, 1
      %p358 = por %p356, %p357
      %p360 = scmp.ne.s32.totalorder %s345, %s359
      %p361 = scmp.eq.s32.totalorder %s36, 0
      %p362 = por %p360, %p361
      %s364 = sadd.s32 %s363, 1
      %p367 = scmp.eq.s32.totalorder %s30, 1
      %p368 = scmp.ne.s32.totalorder %s363, %s365
      %p369 = scmp.eq.s32.totalorder %s30, 0
      %p370 = por %p368, %p369
      %p371 = scmp.ne.s32.totalorder %s363, %s365
      %p372 = scmp.eq.s32.totalorder %s35, 1
      %p373 = por %p371, %p372
      %p374 = scmp.ne.s32.totalorder %s365, %s366
      %p375 = scmp.eq.s32.totalorder %s35, 0
      %p376 = por %p374, %p375
      %p377 = scmp.ne.s32.totalorder %s365, %s366
      %p378 = scmp.eq.s32.totalorder %s36, 1
      %p379 = por %p377, %p378
      %p381 = scmp.ne.s32.totalorder %s366, %s380
      %p382 = scmp.eq.s32.totalorder %s36, 0
      %p383 = por %p381, %p382
      %s385 = sadd.s32 %s384, 1
      %p388 = scmp.eq.s32.totalorder %s30, 1
      %p389 = scmp.ne.s32.totalorder %s384, %s386
      %p390 = scmp.eq.s32.totalorder %s30, 0
      %p391 = por %p389, %p390
      %p392 = scmp.ne.s32.totalorder %s384, %s386
      %p393 = scmp.eq.s32.totalorder %s35, 1
      %p394 = por %p392, %p393
      %p395 = scmp.ne.s32.totalorder %s386, %s387
      %p396 = scmp.eq.s32.totalorder %s35, 0
      %p397 = por %p395, %p396
      %p398 = scmp.ne.s32.totalorder %s386, %s387
      %p399 = scmp.eq.s32.totalorder %s36, 1
      %p400 = por %p398, %p399
      %p402 = scmp.ne.s32.totalorder %s387, %s401
      %p403 = scmp.eq.s32.totalorder %s36, 0
      %p404 = por %p402, %p403
      %s406 = sadd.s32 %s405, 1
      %p409 = scmp.eq.s32.totalorder %s30, 1
      %p410 = scmp.ne.s32.totalorder %s405, %s407
      %p411 = scmp.eq.s32.totalorder %s30, 0
      %p412 = por %p410, %p411
      %p413 = scmp.ne.s32.totalorder %s405, %s407
      %p414 = scmp.eq.s32.totalorder %s35, 1
      %p415 = por %p413, %p414
      %p416 = scmp.ne.s32.totalorder %s407, %s408
      %p417 = scmp.eq.s32.totalorder %s35, 0
      %p418 = por %p416, %p417
      %p419 = scmp.ne.s32.totalorder %s407, %s408
      %p420 = scmp.eq.s32.totalorder %s36, 1
      %p421 = por %p419, %p420
      %p423 = scmp.ne.s32.totalorder %s408, %s422
      %p424 = scmp.eq.s32.totalorder %s36, 0
      %p425 = por %p423, %p424
      %s427 = sadd.s32 %s426, 1
      %p430 = scmp.eq.s32.totalorder %s30, 1
      %p431 = scmp.ne.s32.totalorder %s426, %s428
      %p432 = scmp.eq.s32.totalorder %s30, 0
      %p433 = por %p431, %p432
      %p434 = scmp.ne.s32.totalorder %s426, %s428
      %p435 = scmp.eq.s32.totalorder %s35, 1
      %p436 = por %p434, %p435
      %p437 = scmp.ne.s32.totalorder %s428, %s429
      %p438 = scmp.eq.s32.totalorder %s35, 0
      %p439 = por %p437, %p438
      %p440 = scmp.ne.s32.totalorder %s428, %s429
      %p441 = scmp.eq.s32.totalorder %s36, 1
      %p442 = por %p440, %p441
      %p444 = scmp.ne.s32.totalorder %s429, %s443
      %p445 = scmp.eq.s32.totalorder %s36, 0
      %p446 = por %p444, %p445
      %s448 = sadd.s32 %s447, 1
      %p451 = scmp.eq.s32.totalorder %s30, 1
      %p452 = scmp.ne.s32.totalorder %s447, %s449
      %p453 = scmp.eq.s32.totalorder %s30, 0
      %p454 = por %p452, %p453
      %p455 = scmp.ne.s32.totalorder %s447, %s449
      %p456 = scmp.eq.s32.totalorder %s35, 1
      %p457 = por %p455, %p456
      %p458 = scmp.ne.s32.totalorder %s449, %s450
      %p459 = scmp.eq.s32.totalorder %s35, 0
      %p460 = por %p458, %p459
      %p461 = scmp.ne.s32.totalorder %s449, %s450
      %p462 = scmp.eq.s32.totalorder %s36, 1
      %p463 = por %p461, %p462
      %p465 = scmp.ne.s32.totalorder %s450, %s464
      %p466 = scmp.eq.s32.totalorder %s36, 0
      %p467 = por %p465, %p466
      %s469 = sadd.s32 %s468, 1
      %p472 = scmp.eq.s32.totalorder %s30, 1
      %p473 = scmp.ne.s32.totalorder %s468, %s470
      %p474 = scmp.eq.s32.totalorder %s30, 0
      %p475 = por %p473, %p474
      %p476 = scmp.ne.s32.totalorder %s468, %s470
      %p477 = scmp.eq.s32.totalorder %s35, 1
      %p478 = por %p476, %p477
      %p479 = scmp.ne.s32.totalorder %s470, %s471
      %p480 = scmp.eq.s32.totalorder %s35, 0
      %p481 = por %p479, %p480
      %p482 = scmp.ne.s32.totalorder %s470, %s471
      %p483 = scmp.eq.s32.totalorder %s36, 1
      %p484 = por %p482, %p483
      %p486 = scmp.ne.s32.totalorder %s471, %s485
      %p487 = scmp.eq.s32.totalorder %s36, 0
      %p488 = por %p486, %p487
      %s489 = ssub.s32 %s30, %s37
      %p490 = scmp.eq.s32.totalorder %s489, 0
      %s492 = sadd.s32 %s491, 1
      %s493 = scalar_select %p490, %s491, %s492
      %p496 = pneg %p490
      %p497 = scmp.eq.s32.totalorder %s30, 1
      %p498 = por %p496, %p497
      %p499 = scmp.ne.s32.totalorder %s491, %s494
      %p500 = scmp.eq.s32.totalorder %s30, 0
      %p501 = por %p499, %p500
      %p502 = scmp.ne.s32.totalorder %s491, %s494
      %p503 = scmp.eq.s32.totalorder %s35, 1
      %p504 = por %p502, %p503
      %p505 = scmp.ne.s32.totalorder %s494, %s495
      %p506 = scmp.eq.s32.totalorder %s35, 0
      %p507 = por %p505, %p506
      %p508 = scmp.ne.s32.totalorder %s494, %s495
      %p509 = scmp.eq.s32.totalorder %s36, 1
      %p510 = por %p508, %p509
      %p512 = scmp.ne.s32.totalorder %s495, %s511
      %p513 = scmp.eq.s32.totalorder %s36, 0
      %p514 = por %p512, %p513
      %p515 = scmp.le.s32.totalorder 1, %s30
      %p516 = scmp.lt.s32.totalorder %s30, 3
      %p517 = pnand %p515, %p516
      %p518 = pneg %p517
      // Predicated region
      $region9: #{forward.1} parent=5 // pred_check
        _
      $region10: #{forward.1} parent=5 // pred_check_branch
        %520 = sbr.rel (%p517) target = $region12
      $region11: #{forward.1} parent=5 // pred_region
        %s521 = ssub.s32 %s30, 1
        // Predicated region
        $region13: #{forward.1} parent=11 // pred_check
          %p522 = pneg %p77
        $region14: #{forward.1} parent=11 // pred_check_branch
          %524 = sbr.rel (%p522) target = $region16
        $region15: #{forward.1} parent=11 // pred_region
          _
        $region16: #{forward.1} parent=11 // pred_fallthru
          _
        // Predicated region
        $region17: #{forward.1} parent=11 // pred_check
          %p525 = pneg %p124
        $region18: #{forward.1} parent=11 // pred_check_branch
          %527 = sbr.rel (%p525) target = $region20
        $region19: #{forward.1} parent=11 // pred_region
          _
        $region20: #{forward.1} parent=11 // pred_fallthru
          _
        // Predicated region
        $region21: #{forward.1} parent=11 // pred_check
          %p528 = pneg %p145
        $region22: #{forward.1} parent=11 // pred_check_branch
          %530 = sbr.rel (%p528) target = $region24
        $region23: #{forward.1} parent=11 // pred_region
          _
        $region24: #{forward.1} parent=11 // pred_fallthru
          _
        // Predicated region
        $region25: #{forward.1} parent=11 // pred_check
          %p531 = pneg %p166
        $region26: #{forward.1} parent=11 // pred_check_branch
          %533 = sbr.rel (%p531) target = $region28
        $region27: #{forward.1} parent=11 // pred_region
          _
        $region28: #{forward.1} parent=11 // pred_fallthru
          _
        // Predicated region
        $region29: #{forward.1} parent=11 // pred_check
          %p534 = pneg %p187
        $region30: #{forward.1} parent=11 // pred_check_branch
          %536 = sbr.rel (%p534) target = $region32
        $region31: #{forward.1} parent=11 // pred_region
          _
        $region32: #{forward.1} parent=11 // pred_fallthru
          _
        // Predicated region
        $region33: #{forward.1} parent=11 // pred_check
          %p537 = pneg %p208
        $region34: #{forward.1} parent=11 // pred_check_branch
          %539 = sbr.rel (%p537) target = $region36
        $region35: #{forward.1} parent=11 // pred_region
          %s541 = ssub.s32 2048, 2048
          %542 = vsyncadd [#allocation3], %s541
          %s543 = sshll.u32 [#allocation2], 4
          %s544 = int_to_ptr.vmem [resolvable:$true] %s543
          %549 = dma.hbm_to_vmem [thread:$0]  %s7, 2048, %s544, [#allocation3], 64, 64, 4
        $region36: #{forward.1} parent=11 // pred_fallthru
          _
        // Predicated region
        $region37: #{forward.1} parent=11 // pred_check
          %p550 = pneg %p229
        $region38: #{forward.1} parent=11 // pred_check_branch
          %552 = sbr.rel (%p550) target = $region40
        $region39: #{forward.1} parent=11 // pred_region
          _
        $region40: #{forward.1} parent=11 // pred_fallthru
          _
        // Predicated region
        $region41: #{forward.1} parent=11 // pred_check
          %p553 = pneg %p250
        $region42: #{forward.1} parent=11 // pred_check_branch
          %555 = sbr.rel (%p553) target = $region44
        $region43: #{forward.1} parent=11 // pred_region
          _
        $region44: #{forward.1} parent=11 // pred_fallthru
          _
        // Predicated region
        $region45: #{forward.1} parent=11 // pred_check
          %p556 = pneg %p271
        $region46: #{forward.1} parent=11 // pred_check_branch
          %558 = sbr.rel (%p556) target = $region48
        $region47: #{forward.1} parent=11 // pred_region
          _
        $region48: #{forward.1} parent=11 // pred_fallthru
          _
        // Predicated region
        $region49: #{forward.1} parent=11 // pred_check
          %p559 = pneg %p292
        $region50: #{forward.1} parent=11 // pred_check_branch
          %561 = sbr.rel (%p559) target = $region52
        $region51: #{forward.1} parent=11 // pred_region
          %s563 = ssub.s32 4096, 4096
          %564 = vsyncadd [#allocation5], %s563
          %s565 = sshll.u32 [#allocation4], 4
          %s566 = int_to_ptr.vmem [resolvable:$true] %s565
          %571 = dma.hbm_to_vmem [thread:$0]  %s11, 4096, %s566, [#allocation5], 128, 128, 8
        $region52: #{forward.1} parent=11 // pred_fallthru
          _
        // Predicated region
        $region53: #{forward.1} parent=11 // pred_check
          %p572 = pneg %p313
        $region54: #{forward.1} parent=11 // pred_check_branch
          %574 = sbr.rel (%p572) target = $region56
        $region55: #{forward.1} parent=11 // pred_region
          _
        $region56: #{forward.1} parent=11 // pred_fallthru
          _
        // Predicated region
        $region57: #{forward.1} parent=11 // pred_check
          %p575 = pneg %p334
        $region58: #{forward.1} parent=11 // pred_check_branch
          %577 = sbr.rel (%p575) target = $region60
        $region59: #{forward.1} parent=11 // pred_region
          %s579 = ssub.s32 4096, 4096
          %580 = vsyncadd [#allocation5], %s579
          %s581 = sshll.u32 [#allocation6], 4
          %s582 = int_to_ptr.vmem [resolvable:$true] %s581
          %587 = dma.hbm_to_vmem [thread:$0]  %s13, 4096, %s582, [#allocation5], 64, 64, 4
        $region60: #{forward.1} parent=11 // pred_fallthru
          _
        // Predicated region
        $region61: #{forward.1} parent=11 // pred_check
          %p588 = pneg %p355
        $region62: #{forward.1} parent=11 // pred_check_branch
          %590 = sbr.rel (%p588) target = $region64
        $region63: #{forward.1} parent=11 // pred_region
          _
        $region64: #{forward.1} parent=11 // pred_fallthru
          _
        // Predicated region
        $region65: #{forward.1} parent=11 // pred_check
          %p591 = pneg %p376
        $region66: #{forward.1} parent=11 // pred_check_branch
          %593 = sbr.rel (%p591) target = $region68
        $region67: #{forward.1} parent=11 // pred_region
          _
        $region68: #{forward.1} parent=11 // pred_fallthru
          _
        // Predicated region
        $region69: #{forward.1} parent=11 // pred_check
          %p594 = pneg %p397
        $region70: #{forward.1} parent=11 // pred_check_branch
          %596 = sbr.rel (%p594) target = $region72
        $region71: #{forward.1} parent=11 // pred_region
          _
        $region72: #{forward.1} parent=11 // pred_fallthru
          _
        // Predicated region
        $region73: #{forward.1} parent=11 // pred_check
          %p597 = pneg %p418
        $region74: #{forward.1} parent=11 // pred_check_branch
          %599 = sbr.rel (%p597) target = $region76
        $region75: #{forward.1} parent=11 // pred_region
          %s601 = ssub.s32 1024, 1024
          %602 = vsyncadd [#allocation8], %s601
          %s603 = sshll.u32 [#allocation7], 4
          %s604 = int_to_ptr.vmem [resolvable:$true] %s603
          %609 = dma.hbm_to_vmem [thread:$0]  %s17, 1024, %s604, [#allocation8], 64, 64, 4
        $region76: #{forward.1} parent=11 // pred_fallthru
          _
        // Predicated region
        $region77: #{forward.1} parent=11 // pred_check
          %p610 = pneg %p439
        $region78: #{forward.1} parent=11 // pred_check_branch
          %612 = sbr.rel (%p610) target = $region80
        $region79: #{forward.1} parent=11 // pred_region
          _
        $region80: #{forward.1} parent=11 // pred_fallthru
          _
        // Predicated region
        $region81: #{forward.1} parent=11 // pred_check
          %p613 = pneg %p460
        $region82: #{forward.1} parent=11 // pred_check_branch
          %615 = sbr.rel (%p613) target = $region84
        $region83: #{forward.1} parent=11 // pred_region
          %s617 = ssub.s32 1024, 1024
          %618 = vsyncadd [#allocation8], %s617
          %s619 = sshll.u32 [#allocation9], 4
          %s620 = int_to_ptr.vmem [resolvable:$true] %s619
          %625 = dma.hbm_to_vmem [thread:$0]  %s19, 1024, %s620, [#allocation8], 64, 64, 4
        $region84: #{forward.1} parent=11 // pred_fallthru
          _
        // Predicated region
        $region85: #{forward.1} parent=11 // pred_check
          %p626 = pneg %p481
        $region86: #{forward.1} parent=11 // pred_check_branch
          %628 = sbr.rel (%p626) target = $region88
        $region87: #{forward.1} parent=11 // pred_region
          _
        $region88: #{forward.1} parent=11 // pred_fallthru
          _
      $region12: #{forward.1} parent=5 // pred_fallthru
        _
      %p629 = scmp.lt.s32.totalorder %s30, 2
      // Predicated region
      $region89: #{forward.1} parent=5 // pred_check
        %p630 = pneg %p629
      $region90: #{forward.1} parent=5 // pred_check_branch
        %632 = sbr.rel (%p630) target = $region92
      $region91: #{forward.1} parent=5 // pred_region
        // Predicated region
        $region93: #{forward.1} parent=91 // pred_check
          %p633 = pneg %p50
        $region94: #{forward.1} parent=91 // pred_check_branch
          %635 = sbr.rel (%p633) target = $region96
        $region95: #{forward.1} parent=91 // pred_region
          %p636 = scmp.lt.s32.totalorder %s30, 1
          %s637 = scalar_select %p636, %s30, 1
          %s638 = smul.addr %s637, 2
          %s639 = smul.addr %s638, 8
          %s640 = scalar_lea.vmem %s0, %s639
        $region96: #{forward.1} parent=91 // pred_fallthru
          _
        // Predicated region
        $region97: #{forward.1} parent=91 // pred_check
          %p641 = pneg %p97
        $region98: #{forward.1} parent=91 // pred_check_branch
          %643 = sbr.rel (%p641) target = $region100
        $region99: #{forward.1} parent=91 // pred_region
          %p644 = scmp.lt.s32.totalorder %s30, 1
          %s645 = scalar_select %p644, %s30, 1
          %s646 = scalar_lea.vmem %s2, %s645
        $region100: #{forward.1} parent=91 // pred_fallthru
          _
      $region92: #{forward.1} parent=5 // pred_fallthru
        _
      %p647 = scmp.le.s32.totalorder 1, %s30
      %p648 = scmp.lt.s32.totalorder %s30, 3
      %p649 = pnand %p647, %p648
      %p650 = pneg %p649
      // Predicated region
      $region101: #{forward.1} parent=5 // pred_check
        _
      $region102: #{forward.1} parent=5 // pred_check_branch
        %652 = sbr.rel (%p649) target = $region104
      $region103: #{forward.1} parent=5 // pred_region
        %s653 = ssub.s32 %s30, 1
        // Predicated region
        $region105: #{forward.1} parent=103 // pred_check
          %p654 = pneg %p208
        $region106: #{forward.1} parent=103 // pred_check_branch
          %656 = sbr.rel (%p654) target = $region108
        $region107: #{forward.1} parent=103 // pred_region
          %657 = dma.done [#allocation3], 2048
        $region108: #{forward.1} parent=103 // pred_fallthru
          _
        // Predicated region
        $region109: #{forward.1} parent=103 // pred_check
          %p658 = pneg %p292
        $region110: #{forward.1} parent=103 // pred_check_branch
          %660 = sbr.rel (%p658) target = $region112
        $region111: #{forward.1} parent=103 // pred_region
          %661 = dma.done [#allocation5], 4096
        $region112: #{forward.1} parent=103 // pred_fallthru
          _
        // Predicated region
        $region113: #{forward.1} parent=103 // pred_check
          %p662 = pneg %p334
        $region114: #{forward.1} parent=103 // pred_check_branch
          %664 = sbr.rel (%p662) target = $region116
        $region115: #{forward.1} parent=103 // pred_region
          %665 = dma.done [#allocation5], 4096
        $region116: #{forward.1} parent=103 // pred_fallthru
          _
        // Predicated region
        $region117: #{forward.1} parent=103 // pred_check
          %p666 = pneg %p418
        $region118: #{forward.1} parent=103 // pred_check_branch
          %668 = sbr.rel (%p666) target = $region120
        $region119: #{forward.1} parent=103 // pred_region
          %669 = dma.done [#allocation8], 1024
        $region120: #{forward.1} parent=103 // pred_fallthru
          _
        // Predicated region
        $region121: #{forward.1} parent=103 // pred_check
          %p670 = pneg %p460
        $region122: #{forward.1} parent=103 // pred_check_branch
          %672 = sbr.rel (%p670) target = $region124
        $region123: #{forward.1} parent=103 // pred_region
          %673 = dma.done [#allocation8], 1024
        $region124: #{forward.1} parent=103 // pred_fallthru
          _
        %p674 = scmp.lt.s32.totalorder %s35, 1
        %s675 = scalar_select %p674, %s35, 1
        %s676 = smul.addr %s675, 2
        %s677 = smul.addr %s676, 8
        %s678 = scalar_lea.vmem %s0, %s677
        %p679 = pneg %p56
        %p680 = pneg %p53
        %p681 = pneg %p77
        %p682 = pneg %p74
        %p683 = scmp.lt.s32.totalorder %s35, 1
        %s684 = scalar_select %p683, %s35, 1
        %s685 = scalar_lea.vmem %s2, %s684
        %p686 = pneg %p103
        %p687 = pneg %p100
        %p688 = pneg %p124
        %p689 = pneg %p121
        %p690 = pneg %p145
        %p691 = pneg %p142
        %p692 = pneg %p166
        %p693 = pneg %p163
        %p694 = pneg %p187
        %p695 = pneg %p184
        %p696 = pneg %p208
        %p697 = pneg %p205
        %p698 = pneg %p229
        %p699 = pneg %p226
        %p700 = pneg %p250
        %p701 = pneg %p247
        %p702 = pneg %p271
        %p703 = pneg %p268
        %p704 = pneg %p292
        %p705 = pneg %p289
        %p706 = pneg %p313
        %p707 = pneg %p310
        %p708 = pneg %p334
        %p709 = pneg %p331
        %p710 = pneg %p355
        %p711 = pneg %p352
        %p712 = pneg %p376
        %p713 = pneg %p373
        %p714 = pneg %p397
        %p715 = pneg %p394
        %p716 = pneg %p418
        %p717 = pneg %p415
        %p718 = pneg %p439
        %p719 = pneg %p436
        %p720 = pneg %p460
        %p721 = pneg %p457
        %p722 = pneg %p481
        %p723 = pneg %p478
        %p724 = pneg %p507
        %p725 = pneg %p504
        %p726 = scmp.lt.s32.totalorder %s35, 1
        %s727 = scalar_select %p726, %s35, 1
        %s728 = smul.addr %s727, 8
        %s729 = scalar_lea.vmem %s21, %s728
        %p730 = scmp.lt.s32.totalorder %s35, 1
        %s731 = scalar_select %p730, %s35, 1
        %s732 = smul.addr %s731, 2
        %s733 = smul.addr %s732, 8
        %s734 = scalar_lea.vmem %s0, %s733
        %p735 = scmp.lt.s32.totalorder %s35, 1
        %s736 = scalar_select %p735, %s35, 1
        %s737 = scalar_lea.vmem %s2, %s736
        %p738 = scmp.lt.s32.totalorder %s35, 1
        %s739 = scalar_select %p738, %s35, 1
        %s740 = smul.addr %s739, 8
        %s741 = scalar_lea.vmem %s21, %s740
        %v743 = vld [vmem:[%s734] sm:$0xff]
        %v744 = vld [vmem:[%s734 + $0x8] sm:$0xff]
        %v745 = vld [vmem:[%s1] sm:$0xff]
        %v746 = vld [vmem:[%s1 + $0x8] sm:$0xff]
        %v747 = vadd.f32 %v743, %v745
        %v748 = vadd.f32 %v744, %v746
        %v749 = vld [vmem:[%s3] sm:$0x1]
        %v750 = vld [vmem:[%s4] sm:$0x1]
        %751 = vadd.xlane.f32.xlu0 %v747
        %v752 = vpop.xlane.xlu0 %751
        %753 = vadd.xlane.f32.xlu0 %v748
        %v754 = vpop.xlane.xlu0 %753
        %v755 = vrcp.pop 128.0
        %v756 = vmul.f32 %v752, %v755
        %v757 = vmul.f32 %v754, %v755
        %v758 = vsub.f32 %v747, %v756
        %v759 = vsub.f32 %v748, %v757
        %v760 = vmul.f32 %v758, %v758
        %v761 = vmul.f32 %v759, %v759
        %762 = vadd.xlane.f32.xlu0 %v760
        %v763 = vpop.xlane.xlu0 %762
        %764 = vadd.xlane.f32.xlu0 %v761
        %v765 = vpop.xlane.xlu0 %764
        %v766 = vmul.f32 %v763, %v755
        %v767 = vmul.f32 %v765, %v755
        %v768 = vadd.f32 %v766, 1e-12
        %v769 = vadd.f32 %v767, 1e-12
        %v770 = vrsqrt.pop %v768
        %v771 = vrsqrt.pop %v769
        %v772 = vmul.f32 %v758, %v770
        %v773 = vmul.f32 %v759, %v771
        %v775 = vlaneseq
        %v776 = vshrl.u32 %v775, 7
        %v777 = vsub.s32 0, %v776
        %v778 = vrot.slane %v749, %v777
        %v780 = vmul.f32 %v772, %v778
        %v781 = vmul.f32 %v773, %v778
        %v783 = vlaneseq
        %v784 = vshrl.u32 %v783, 7
        %v785 = vsub.s32 0, %v784
        %v786 = vrot.slane %v750, %v785
        %v788 = vadd.f32 %v780, %v786
        %v789 = vadd.f32 %v781, %v786
        %v790 = vld [vmem:[%s737] sm:$0x1]
        %v791 = vpack.c.bf16 %v789, %v788
        %v792 = vld [vmem:[%s5] sm:$0xff]
        %v793 = vld [vmem:[%s5 + $0x8] sm:$0xf]
        %v794 = vld [vmem:[%s5 + $0xc] sm:$0xff]
        %v795 = vld [vmem:[%s5 + $0x14] sm:$0xf]
        %v796 = vld [vmem:[%s5 + $0x18] sm:$0xff]
        %v797 = vld [vmem:[%s5 + $0x20] sm:$0xf]
        %v798 = vld [vmem:[%s5 + $0x24] sm:$0xff]
        %v799 = vld [vmem:[%s5 + $0x2c] sm:$0xf]
        %v800 = vld [vmem:[%s5 + $0x30] sm:$0xff]
        %v801 = vld [vmem:[%s5 + $0x38] sm:$0xf]
        %v802 = vld [vmem:[%s5 + $0x3c] sm:$0xff]
        %v803 = vld [vmem:[%s5 + $0x44] sm:$0xf]
        %v804 = vld [vmem:[%s5 + $0x48] sm:$0xff]
        %v805 = vld [vmem:[%s5 + $0x50] sm:$0xf]
        %v806 = vld [vmem:[%s5 + $0x54] sm:$0xff]
        %v807 = vld [vmem:[%s5 + $0x5c] sm:$0xf]
        %v808 = vld [vmem:[%s5 + $0x60] sm:$0xff]
        %v809 = vld [vmem:[%s5 + $0x68] sm:$0xf]
        %v810 = vld [vmem:[%s5 + $0x6c] sm:$0xff]
        %v811 = vld [vmem:[%s5 + $0x74] sm:$0xf]
        %v812 = vld [vmem:[%s5 + $0x78] sm:$0xff]
        %v813 = vld [vmem:[%s5 + $0x80] sm:$0xf]
        %v814 = vld [vmem:[%s5 + $0x84] sm:$0xff]
        %v815 = vld [vmem:[%s5 + $0x8c] sm:$0xf]
        %v816 = vld [vmem:[%s5 + $0x90] sm:$0xff]
        %v817 = vld [vmem:[%s5 + $0x98] sm:$0xf]
        %v818 = vld [vmem:[%s5 + $0x9c] sm:$0xff]
        %v819 = vld [vmem:[%s5 + $0xa4] sm:$0xf]
        %v820 = vld [vmem:[%s5 + $0xa8] sm:$0xff]
        %v821 = vld [vmem:[%s5 + $0xb0] sm:$0xf]
        %v822 = vld [vmem:[%s5 + $0xb4] sm:$0xff]
        %v823 = vld [vmem:[%s5 + $0xbc] sm:$0xf]
        %v824 = vld [vmem:[%s6] sm:$0x7]
        %v826 = vlaneseq
        %v827 = vshrl.u32 %v826, 7
        %v828 = vsub.s32 0, %v827
        %v829 = vrot.slane %v824, %v828
        %v830 = vlaneseq
        %v831 = vshrl.u32 %v830, 7
        %v832 = vsub.s32 1, %v831
        %v833 = vrot.slane %v824, %v832
        %v834 = vlaneseq
        %v835 = vshrl.u32 %v834, 7
        %v836 = vsub.s32 2, %v835
        %v837 = vrot.slane %v824, %v836
        %v873 = vunpack.c.l.b16 %v792
        %v874 = vunpack.c.h.b16 %v792
        %v875 = vunpack.c.l.b16 %v793
        %v876 = vunpack.c.l.b16 %v794
        %v877 = vunpack.c.h.b16 %v794
        %v878 = vunpack.c.l.b16 %v795
        %v879 = vunpack.c.l.b16 %v796
        %v880 = vunpack.c.h.b16 %v796
        %v881 = vunpack.c.l.b16 %v797
        %v882 = vunpack.c.l.b16 %v798
        %v883 = vunpack.c.h.b16 %v798
        %v884 = vunpack.c.l.b16 %v799
        %v885 = vunpack.c.l.b16 %v800
        %v886 = vunpack.c.h.b16 %v800
        %v887 = vunpack.c.l.b16 %v801
        %v888 = vunpack.c.l.b16 %v802
        %v889 = vunpack.c.h.b16 %v802
        %v890 = vunpack.c.l.b16 %v803
        %v891 = vunpack.c.l.b16 %v804
        %v892 = vunpack.c.h.b16 %v804
        %v893 = vunpack.c.l.b16 %v805
        %v894 = vunpack.c.l.b16 %v806
        %v895 = vunpack.c.h.b16 %v806
        %v896 = vunpack.c.l.b16 %v807
        %v897 = vunpack.c.l.b16 %v808
        %v898 = vunpack.c.h.b16 %v808
        %v899 = vunpack.c.l.b16 %v809
        %v900 = vunpack.c.l.b16 %v810
        %v901 = vunpack.c.h.b16 %v810
        %v902 = vunpack.c.l.b16 %v811
        %v903 = vunpack.c.l.b16 %v812
        %v904 = vunpack.c.h.b16 %v812
        %v905 = vunpack.c.l.b16 %v813
        %v906 = vunpack.c.l.b16 %v814
        %v907 = vunpack.c.h.b16 %v814
        %v908 = vunpack.c.l.b16 %v815
        %v909 = vunpack.c.l.b16 %v816
        %v910 = vunpack.c.h.b16 %v816
        %v911 = vunpack.c.l.b16 %v817
        %v912 = vunpack.c.l.b16 %v818
        %v913 = vunpack.c.h.b16 %v818
        %v914 = vunpack.c.l.b16 %v819
        %v915 = vunpack.c.l.b16 %v820
        %v916 = vunpack.c.h.b16 %v820
        %v917 = vunpack.c.l.b16 %v821
        %v918 = vunpack.c.l.b16 %v822
        %v919 = vunpack.c.h.b16 %v822
        %v920 = vunpack.c.l.b16 %v823
        %v921 = vpack.c.b16 %v876, %v873
        %v922 = vpack.c.b16 %v877, %v874
        %v923 = vpack.c.b16 %v878, %v875
        %v924 = vpack.c.b16 %v882, %v879
        %v925 = vpack.c.b16 %v883, %v880
        %v926 = vpack.c.b16 %v884, %v881
        %v927 = vpack.c.b16 %v888, %v885
        %v928 = vpack.c.b16 %v889, %v886
        %v929 = vpack.c.b16 %v890, %v887
        %v930 = vpack.c.b16 %v894, %v891
        %v931 = vpack.c.b16 %v895, %v892
        %v932 = vpack.c.b16 %v896, %v893
        %v933 = vpack.c.b16 %v900, %v897
        %v934 = vpack.c.b16 %v901, %v898
        %v935 = vpack.c.b16 %v902, %v899
        %v936 = vpack.c.b16 %v906, %v903
        %v937 = vpack.c.b16 %v907, %v904
        %v938 = vpack.c.b16 %v908, %v905
        %v939 = vpack.c.b16 %v912, %v909
        %v940 = vpack.c.b16 %v913, %v910
        %v941 = vpack.c.b16 %v914, %v911
        %v942 = vpack.c.b16 %v918, %v915
        %v943 = vpack.c.b16 %v919, %v916
        %v944 = vpack.c.b16 %v920, %v917
        %969 = vmatprep.subr.bf16.mxu0 %v922
        %970 = vmatpush1.bf16.msra.mxu0 %v921
        %971 = vmatprep.subr.bf16.mxu0 %v925
        %972 = vmatpush1.bf16.msra.mxu0 %v924
        %973 = vmatprep.subr.bf16.mxu0 %v928
        %974 = vmatpush1.bf16.msra.mxu0 %v927
        %975 = vmatprep.subr.bf16.mxu0 %v931
        %976 = vmatpush1.bf16.msra.mxu0 %v930
        %977 = vmatprep.subr.bf16.mxu0 %v934
        %978 = vmatpush1.bf16.msra.mxu0 %v933
        %979 = vmatprep.subr.bf16.mxu0 %v937
        %980 = vmatpush1.bf16.msra.mxu0 %v936
        %981 = vmatprep.subr.bf16.mxu0 %v940
        %982 = vmatpush1.bf16.msra.mxu0 %v939
        %983 = vmatprep.subr.bf16.mxu0 %v943
        %984 = vmatpush1.bf16.msra.mxu0 %v942
        %985 = vmatprep.subr.bf16.mxu0 0
        %986 = vmatpush1.bf16.msra.mxu0 0
        %987 = vmatprep.subr.bf16.mxu0 0
        %988 = vmatpush1.bf16.msra.mxu0 0
        %989 = vmatprep.subr.bf16.mxu0 0
        %990 = vmatpush1.bf16.msra.mxu0 0
        %991 = vmatprep.subr.bf16.mxu0 0
        %992 = vmatpush1.bf16.msra.mxu0 0
        %993 = vmatprep.subr.bf16.mxu0 0
        %994 = vmatpush1.bf16.msra.mxu0 0
        %995 = vmatprep.subr.bf16.mxu0 0
        %996 = vmatpush1.bf16.msra.mxu0 0
        %997 = vmatprep.subr.bf16.mxu0 0
        %998 = vmatpush1.bf16.msra.mxu0 0
        %999 = vmatprep.subr.bf16.mxu0 0
        %1000 = vmatpush1.bf16.msra.mxu0 0
        %1001 = vmatprep.mubr.bf16.mxu0 0
        %1002 = vmatmul.mubr.bf16.gmra.mrb[0].mxu0 %v791
        %v1003 = vpop.f32.mrb[0].mxu0
        %v1004 = vadd.f32 %v829, %v1003
        %v1005 = vpop.f32.mrb[0].mxu0
        %v1006 = vadd.f32 %v833, %v1005
        %v1007 = vpop.f32.mrb[0].mxu0
        %v1008 = vadd.f32 %v829, %v1007
        %v1009 = vpop.f32.mrb[0].mxu0
        %v1010 = vadd.f32 %v833, %v1009
        %1011 = vdwg.mxu0
        %1012 = vmatprep.subr.bf16.mxu0 0
        %1013 = vmatpush1.bf16.msra.mxu0 %v923
        %1014 = vmatprep.subr.bf16.mxu0 0
        %1015 = vmatpush1.bf16.msra.mxu0 %v926
        %1016 = vmatprep.subr.bf16.mxu0 0
        %1017 = vmatpush1.bf16.msra.mxu0 %v929
        %1018 = vmatprep.subr.bf16.mxu0 0
        %1019 = vmatpush1.bf16.msra.mxu0 %v932
        %1020 = vmatprep.subr.bf16.mxu0 0
        %1021 = vmatpush1.bf16.msra.mxu0 %v935
        %1022 = vmatprep.subr.bf16.mxu0 0
        %1023 = vmatpush1.bf16.msra.mxu0 %v938
        %1024 = vmatprep.subr.bf16.mxu0 0
        %1025 = vmatpush1.bf16.msra.mxu0 %v941
        %1026 = vmatprep.subr.bf16.mxu0 0
        %1027 = vmatpush1.bf16.msra.mxu0 %v944
        %1028 = vmatprep.subr.bf16.mxu0 0
        %1029 = vmatpush1.bf16.msra.mxu0 0
        %1030 = vmatprep.subr.bf16.mxu0 0
        %1031 = vmatpush1.bf16.msra.mxu0 0
        %1032 = vmatprep.subr.bf16.mxu0 0
        %1033 = vmatpush1.bf16.msra.mxu0 0
        %1034 = vmatprep.subr.bf16.mxu0 0
        %1035 = vmatpush1.bf16.msra.mxu0 0
        %1036 = vmatprep.subr.bf16.mxu0 0
        %1037 = vmatpush1.bf16.msra.mxu0 0
        %1038 = vmatprep.subr.bf16.mxu0 0
        %1039 = vmatpush1.bf16.msra.mxu0 0
        %1040 = vmatprep.subr.bf16.mxu0 0
        %1041 = vmatpush1.bf16.msra.mxu0 0
        %1042 = vmatprep.subr.bf16.mxu0 0
        %1043 = vmatpush1.bf16.msra.mxu0 0
        %1044 = vmatprep.mubr.bf16.mxu0 0
        %1045 = vmatmul.mubr.bf16.gmra.mrb[0].mxu0 %v791
        %v1046 = vpop.f32.mrb[0].mxu0
        %v1047 = vadd.f32 %v837, %v1046
        %v1048 = vpop.f32.mrb[0].mxu0
        %v1049 = vpop.f32.mrb[0].mxu0
        %v1050 = vadd.f32 %v837, %v1049
        %v1051 = vpop.f32.mrb[0].mxu0
        %1052 = vdwg.mxu0
        %v1053 = vpack.c.bf16 %v1008, %v1004
        %v1054 = vpack.c.bf16 %v1010, %v1006
        %v1055 = vpack.c.bf16 %v1050, %v1047
        %v1057 = vlaneseq
        %v1058 = vshrl.u32 %v1057, 7
        %v1059 = vsub.s32 0, %v1058
        %v1060 = vrot.slane %v790, %v1059
        %vm1062 = vcmask 523264
        %v1064 = vsel %vm1062, %v1053, 0
        %v1067 = vsel %vm1062, %v1054, 0
        %1069 = vmatprep.subr.bf16.mxu0 0
        %1070 = vmatpush1.bf16.xpose.msra.mxu0 %v1067
        %1071 = vmatprep.subr.bf16.mxu0 0
        %1072 = vmatpush1.bf16.xpose.msra.mxu0 0
        %1073 = vmatprep.subr.bf16.mxu0 0
        %1074 = vmatpush1.bf16.xpose.msra.mxu0 0
        %1075 = vmatprep.subr.bf16.mxu0 0
        %1076 = vmatpush1.bf16.xpose.msra.mxu0 0
        %1077 = vmatprep.subr.bf16.mxu0 0
        %1078 = vmatpush1.bf16.xpose.msra.mxu0 0
        %1079 = vmatprep.subr.bf16.mxu0 0
        %1080 = vmatpush1.bf16.xpose.msra.mxu0 0
        %1081 = vmatprep.subr.bf16.mxu0 0
        %1082 = vmatpush1.bf16.xpose.msra.mxu0 0
        %1083 = vmatprep.subr.bf16.mxu0 0
        %1084 = vmatpush1.bf16.xpose.msra.mxu0 0
        %1085 = vmatprep.subr.bf16.mxu0 0
        %1086 = vmatpush1.bf16.xpose.msra.mxu0 0
        %1087 = vmatprep.subr.bf16.mxu0 0
        %1088 = vmatpush1.bf16.xpose.msra.mxu0 0
        %1089 = vmatprep.subr.bf16.mxu0 0
        %1090 = vmatpush1.bf16.xpose.msra.mxu0 0
        %1091 = vmatprep.subr.bf16.mxu0 0
        %1092 = vmatpush1.bf16.xpose.msra.mxu0 0
        %1093 = vmatprep.subr.bf16.mxu0 0
        %1094 = vmatpush1.bf16.xpose.msra.mxu0 0
        %1095 = vmatprep.subr.bf16.mxu0 0
        %1096 = vmatpush1.bf16.xpose.msra.mxu0 0
        %1097 = vmatprep.subr.bf16.mxu0 0
        %1098 = vmatpush1.bf16.xpose.msra.mxu0 0
        %1099 = vmatprep.subr.bf16.mxu0 0
        %1100 = vmatpush1.bf16.xpose.msra.mxu0 0
        %1101 = vmatprep.mubr.bf16.mxu0 0
        %1102 = vmatmul.mubr.bf16.gmra.mrb[0].mxu0 %v1064
        %v1103 = vpop.f32.mrb[0].mxu0
        %v1104 = vadd.f32 %v1060, %v1103
        %v1105 = vpop.f32.mrb[0].mxu0
        %v1106 = vpop.f32.mrb[0].mxu0
        %v1107 = vadd.f32 %v1060, %v1106
        %v1108 = vpop.f32.mrb[0].mxu0
        %1109 = vdwg.mxu0
        %vm1110 = vcmask 130048
        %v1111 = vsel %vm1110, %v1104, -inf
        %1112 = vmax.xlane.f32.xlu0 %v1111
        %v1113 = vpop.xlane.xlu0 %1112
        %v1114 = vsel %vm1110, %v1107, -inf
        %1115 = vmax.xlane.f32.xlu0 %v1114
        %v1116 = vpop.xlane.xlu0 %1115
        %v1117 = vsub.f32 %v1104, %v1113
        %v1118 = vsub.f32 %v1107, %v1116
        %v1119 = vmul.f32 %v1117, 1.442695
        %v1120 = vpow.pop %v1119
        %v1121 = vmul.f32 %v1118, 1.442695
        %v1122 = vpow.pop %v1121
        %v1123 = vsel %vm1110, %v1120, 0.0
        %1124 = vadd.xlane.f32.xlu0 %v1123
        %v1125 = vpop.xlane.xlu0 %1124
        %v1126 = vsel %vm1110, %v1122, 0.0
        %1127 = vadd.xlane.f32.xlu0 %v1126
        %v1128 = vpop.xlane.xlu0 %1127
        %v1129 = vrcp.pop %v1125
        %v1130 = vrcp.pop %v1128
        %v1131 = vmul.f32 %v1120, %v1129
        %v1132 = vmul.f32 %v1122, %v1130
        %v1133 = vpack.c.bf16 %v1132, %v1131
        %v1135 = vsel %vm1110, %v1133, 0
        %1137 = vmatprep.subr.bf16.mxu0 0
        %1138 = vmatpush1.bf16.msra.mxu0 %v1055
        %1139 = vmatprep.subr.bf16.mxu0 0
        %1140 = vmatpush1.bf16.msra.mxu0 0
        %1141 = vmatprep.subr.bf16.mxu0 0
        %1142 = vmatpush1.bf16.msra.mxu0 0
        %1143 = vmatprep.subr.bf16.mxu0 0
        %1144 = vmatpush1.bf16.msra.mxu0 0
        %1145 = vmatprep.subr.bf16.mxu0 0
        %1146 = vmatpush1.bf16.msra.mxu0 0
        %1147 = vmatprep.subr.bf16.mxu0 0
        %1148 = vmatpush1.bf16.msra.mxu0 0
        %1149 = vmatprep.subr.bf16.mxu0 0
        %1150 = vmatpush1.bf16.msra.mxu0 0
        %1151 = vmatprep.subr.bf16.mxu0 0
        %1152 = vmatpush1.bf16.msra.mxu0 0
        %1153 = vmatprep.subr.bf16.mxu0 0
        %1154 = vmatpush1.bf16.msra.mxu0 0
        %1155 = vmatprep.subr.bf16.mxu0 0
        %1156 = vmatpush1.bf16.msra.mxu0 0
        %1157 = vmatprep.subr.bf16.mxu0 0
        %1158 = vmatpush1.bf16.msra.mxu0 0
        %1159 = vmatprep.subr.bf16.mxu0 0
        %1160 = vmatpush1.bf16.msra.mxu0 0
        %1161 = vmatprep.subr.bf16.mxu0 0
        %1162 = vmatpush1.bf16.msra.mxu0 0
        %1163 = vmatprep.subr.bf16.mxu0 0
        %1164 = vmatpush1.bf16.msra.mxu0 0
        %1165 = vmatprep.subr.bf16.mxu0 0
        %1166 = vmatpush1.bf16.msra.mxu0 0
        %1167 = vmatprep.subr.bf16.mxu0 0
        %1168 = vmatpush1.bf16.msra.mxu0 0
        %1169 = vmatprep.mubr.bf16.mxu0 0
        %1170 = vmatmul.mubr.bf16.gmra.mrb[0].mxu0 %v1135
        %v1171 = vpop.f32.mrb[0].mxu0
        %v1172 = vadd.f32 0.0, %v1171
        %v1173 = vpop.f32.mrb[0].mxu0
        %v1174 = vpop.f32.mrb[0].mxu0
        %v1175 = vadd.f32 0.0, %v1174
        %v1176 = vpop.f32.mrb[0].mxu0
        %1177 = vdwg.mxu0
        %1179 = vrot.lane.b32.xlu0 %v1053, 64
        %v1180 = vpop.permute.xlu0 %1179
        %1182 = vrot.lane.b32.xlu0 %v1054, 64
        %v1183 = vpop.permute.xlu0 %1182
        %v1185 = vsel %vm1062, %v1180, 0
        %v1188 = vsel %vm1062, %v1183, 0
        %1190 = vmatprep.subr.bf16.mxu0 0
        %1191 = vmatpush1.bf16.xpose.msra.mxu0 %v1188
        %1192 = vmatprep.subr.bf16.mxu0 0
        %1193 = vmatpush1.bf16.xpose.msra.mxu0 0
        %1194 = vmatprep.subr.bf16.mxu0 0
        %1195 = vmatpush1.bf16.xpose.msra.mxu0 0
        %1196 = vmatprep.subr.bf16.mxu0 0
        %1197 = vmatpush1.bf16.xpose.msra.mxu0 0
        %1198 = vmatprep.subr.bf16.mxu0 0
        %1199 = vmatpush1.bf16.xpose.msra.mxu0 0
        %1200 = vmatprep.subr.bf16.mxu0 0
        %1201 = vmatpush1.bf16.xpose.msra.mxu0 0
        %1202 = vmatprep.subr.bf16.mxu0 0
        %1203 = vmatpush1.bf16.xpose.msra.mxu0 0
        %1204 = vmatprep.subr.bf16.mxu0 0
        %1205 = vmatpush1.bf16.xpose.msra.mxu0 0
        %1206 = vmatprep.subr.bf16.mxu0 0
        %1207 = vmatpush1.bf16.xpose.msra.mxu0 0
        %1208 = vmatprep.subr.bf16.mxu0 0
        %1209 = vmatpush1.bf16.xpose.msra.mxu0 0
        %1210 = vmatprep.subr.bf16.mxu0 0
        %1211 = vmatpush1.bf16.xpose.msra.mxu0 0
        %1212 = vmatprep.subr.bf16.mxu0 0
        %1213 = vmatpush1.bf16.xpose.msra.mxu0 0
        %1214 = vmatprep.subr.bf16.mxu0 0
        %1215 = vmatpush1.bf16.xpose.msra.mxu0 0
        %1216 = vmatprep.subr.bf16.mxu0 0
        %1217 = vmatpush1.bf16.xpose.msra.mxu0 0
        %1218 = vmatprep.subr.bf16.mxu0 0
        %1219 = vmatpush1.bf16.xpose.msra.mxu0 0
        %1220 = vmatprep.subr.bf16.mxu0 0
        %1221 = vmatpush1.bf16.xpose.msra.mxu0 0
        %1222 = vmatprep.mubr.bf16.mxu0 0
        %1223 = vmatmul.mubr.bf16.gmra.mrb[0].mxu0 %v1185
        %v1224 = vpop.f32.mrb[0].mxu0
        %v1225 = vadd.f32 %v1060, %v1224
        %v1226 = vpop.f32.mrb[0].mxu0
        %v1227 = vpop.f32.mrb[0].mxu0
        %v1228 = vadd.f32 %v1060, %v1227
        %v1229 = vpop.f32.mrb[0].mxu0
        %1230 = vdwg.mxu0
        %v1231 = vsel %vm1110, %v1225, -inf
        %1232 = vmax.xlane.f32.xlu0 %v1231
        %v1233 = vpop.xlane.xlu0 %1232
        %v1234 = vsel %vm1110, %v1228, -inf
        %1235 = vmax.xlane.f32.xlu0 %v1234
        %v1236 = vpop.xlane.xlu0 %1235
        %v1237 = vsub.f32 %v1225, %v1233
        %v1238 = vsub.f32 %v1228, %v1236
        %v1239 = vmul.f32 %v1237, 1.442695
        %v1240 = vpow.pop %v1239
        %v1241 = vmul.f32 %v1238, 1.442695
        %v1242 = vpow.pop %v1241
        %v1243 = vsel %vm1110, %v1240, 0.0
        %1244 = vadd.xlane.f32.xlu0 %v1243
        %v1245 = vpop.xlane.xlu0 %1244
        %v1246 = vsel %vm1110, %v1242, 0.0
        %1247 = vadd.xlane.f32.xlu0 %v1246
        %v1248 = vpop.xlane.xlu0 %1247
        %v1249 = vrcp.pop %v1245
        %v1250 = vrcp.pop %v1248
        %v1251 = vmul.f32 %v1240, %v1249
        %v1252 = vmul.f32 %v1242, %v1250
        %v1253 = vpack.c.bf16 %v1252, %v1251
        %1255 = vrot.lane.b32.xlu0 %v1055, 64
        %v1256 = vpop.permute.xlu0 %1255
        %v1259 = vsel %vm1110, %v1253, 0
        %1261 = vmatprep.subr.bf16.mxu0 0
        %1262 = vmatpush1.bf16.msra.mxu0 %v1256
        %1263 = vmatprep.subr.bf16.mxu0 0
        %1264 = vmatpush1.bf16.msra.mxu0 0
        %1265 = vmatprep.subr.bf16.mxu0 0
        %1266 = vmatpush1.bf16.msra.mxu0 0
        %1267 = vmatprep.subr.bf16.mxu0 0
        %1268 = vmatpush1.bf16.msra.mxu0 0
        %1269 = vmatprep.subr.bf16.mxu0 0
        %1270 = vmatpush1.bf16.msra.mxu0 0
        %1271 = vmatprep.subr.bf16.mxu0 0
        %1272 = vmatpush1.bf16.msra.mxu0 0
        %1273 = vmatprep.subr.bf16.mxu0 0
        %1274 = vmatpush1.bf16.msra.mxu0 0
        %1275 = vmatprep.subr.bf16.mxu0 0
        %1276 = vmatpush1.bf16.msra.mxu0 0
        %1277 = vmatprep.subr.bf16.mxu0 0
        %1278 = vmatpush1.bf16.msra.mxu0 0
        %1279 = vmatprep.subr.bf16.mxu0 0
        %1280 = vmatpush1.bf16.msra.mxu0 0
        %1281 = vmatprep.subr.bf16.mxu0 0
        %1282 = vmatpush1.bf16.msra.mxu0 0
        %1283 = vmatprep.subr.bf16.mxu0 0
        %1284 = vmatpush1.bf16.msra.mxu0 0
        %1285 = vmatprep.subr.bf16.mxu0 0
        %1286 = vmatpush1.bf16.msra.mxu0 0
        %1287 = vmatprep.subr.bf16.mxu0 0
        %1288 = vmatpush1.bf16.msra.mxu0 0
        %1289 = vmatprep.subr.bf16.mxu0 0
        %1290 = vmatpush1.bf16.msra.mxu0 0
        %1291 = vmatprep.subr.bf16.mxu0 0
        %1292 = vmatpush1.bf16.msra.mxu0 0
        %1293 = vmatprep.mubr.bf16.mxu0 0
        %1294 = vmatmul.mubr.bf16.gmra.mrb[0].mxu0 %v1259
        %v1295 = vpop.f32.mrb[0].mxu0
        %v1296 = vadd.f32 0.0, %v1295
        %v1297 = vpop.f32.mrb[0].mxu0
        %v1298 = vpop.f32.mrb[0].mxu0
        %v1299 = vadd.f32 0.0, %v1298
        %v1300 = vpop.f32.mrb[0].mxu0
        %1301 = vdwg.mxu0
        %1304 = vrot.lane.b32.xlu0 %v1296, 64
        %v1305 = vpop.permute.xlu0 %1304
        %1306 = vrot.lane.b32.xlu0 %v1299, 64
        %v1307 = vpop.permute.xlu0 %1306
        %v1310 = vsel %vm1062, %v1172, %v1305
        %v1311 = vsel %vm1062, %v1175, %v1307
        %v1312 = vpack.c.bf16 %v1311, %v1310
        %v1313 = vld [vmem:[#allocation2] sm:$0xf]
        %v1314 = vld [vmem:[#allocation2 + $0x4] sm:$0xf]
        %v1315 = vld [vmem:[#allocation2 + $0x8] sm:$0xf]
        %v1316 = vld [vmem:[#allocation2 + $0xc] sm:$0xf]
        %v1317 = vld [vmem:[#allocation2 + $0x10] sm:$0xf]
        %v1318 = vld [vmem:[#allocation2 + $0x14] sm:$0xf]
        %v1319 = vld [vmem:[#allocation2 + $0x18] sm:$0xf]
        %v1320 = vld [vmem:[#allocation2 + $0x1c] sm:$0xf]
        %v1321 = vld [vmem:[#allocation2 + $0x20] sm:$0xf]
        %v1322 = vld [vmem:[#allocation2 + $0x24] sm:$0xf]
        %v1323 = vld [vmem:[#allocation2 + $0x28] sm:$0xf]
        %v1324 = vld [vmem:[#allocation2 + $0x2c] sm:$0xf]
        %v1325 = vld [vmem:[#allocation2 + $0x30] sm:$0xf]
        %v1326 = vld [vmem:[#allocation2 + $0x34] sm:$0xf]
        %v1327 = vld [vmem:[#allocation2 + $0x38] sm:$0xf]
        %v1328 = vld [vmem:[#allocation2 + $0x3c] sm:$0xf]
        %v1329 = vld [vmem:[%s8] sm:$0x1]
        %v1331 = vlaneseq
        %v1332 = vshrl.u32 %v1331, 7
        %v1333 = vsub.s32 0, %v1332
        %v1334 = vrot.slane %v1329, %v1333
        %v1352 = vunpack.c.l.b16 %v1313
        %v1353 = vunpack.c.l.b16 %v1314
        %v1354 = vunpack.c.l.b16 %v1315
        %v1355 = vunpack.c.l.b16 %v1316
        %v1356 = vunpack.c.l.b16 %v1317
        %v1357 = vunpack.c.l.b16 %v1318
        %v1358 = vunpack.c.l.b16 %v1319
        %v1359 = vunpack.c.l.b16 %v1320
        %v1360 = vunpack.c.l.b16 %v1321
        %v1361 = vunpack.c.l.b16 %v1322
        %v1362 = vunpack.c.l.b16 %v1323
        %v1363 = vunpack.c.l.b16 %v1324
        %v1364 = vunpack.c.l.b16 %v1325
        %v1365 = vunpack.c.l.b16 %v1326
        %v1366 = vunpack.c.l.b16 %v1327
        %v1367 = vunpack.c.l.b16 %v1328
        %v1368 = vpack.c.b16 %v1353, %v1352
        %v1369 = vpack.c.b16 %v1355, %v1354
        %v1370 = vpack.c.b16 %v1357, %v1356
        %v1371 = vpack.c.b16 %v1359, %v1358
        %v1372 = vpack.c.b16 %v1361, %v1360
        %v1373 = vpack.c.b16 %v1363, %v1362
        %v1374 = vpack.c.b16 %v1365, %v1364
        %v1375 = vpack.c.b16 %v1367, %v1366
        %1384 = vmatprep.subr.bf16.mxu0 0
        %1385 = vmatpush1.bf16.msra.mxu0 %v1368
        %1386 = vmatprep.subr.bf16.mxu0 0
        %1387 = vmatpush1.bf16.msra.mxu0 %v1369
        %1388 = vmatprep.subr.bf16.mxu0 0
        %1389 = vmatpush1.bf16.msra.mxu0 %v1370
        %1390 = vmatprep.subr.bf16.mxu0 0
        %1391 = vmatpush1.bf16.msra.mxu0 %v1371
        %1392 = vmatprep.subr.bf16.mxu0 0
        %1393 = vmatpush1.bf16.msra.mxu0 %v1372
        %1394 = vmatprep.subr.bf16.mxu0 0
        %1395 = vmatpush1.bf16.msra.mxu0 %v1373
        %1396 = vmatprep.subr.bf16.mxu0 0
        %1397 = vmatpush1.bf16.msra.mxu0 %v1374
        %1398 = vmatprep.subr.bf16.mxu0 0
        %1399 = vmatpush1.bf16.msra.mxu0 %v1375
        %1400 = vmatprep.subr.bf16.mxu0 0
        %1401 = vmatpush1.bf16.msra.mxu0 0
        %1402 = vmatprep.subr.bf16.mxu0 0
        %1403 = vmatpush1.bf16.msra.mxu0 0
        %1404 = vmatprep.subr.bf16.mxu0 0
        %1405 = vmatpush1.bf16.msra.mxu0 0
        %1406 = vmatprep.subr.bf16.mxu0 0
        %1407 = vmatpush1.bf16.msra.mxu0 0
        %1408 = vmatprep.subr.bf16.mxu0 0
        %1409 = vmatpush1.bf16.msra.mxu0 0
        %1410 = vmatprep.subr.bf16.mxu0 0
        %1411 = vmatpush1.bf16.msra.mxu0 0
        %1412 = vmatprep.subr.bf16.mxu0 0
        %1413 = vmatpush1.bf16.msra.mxu0 0
        %1414 = vmatprep.subr.bf16.mxu0 0
        %1415 = vmatpush1.bf16.msra.mxu0 0
        %1416 = vmatprep.mubr.bf16.mxu0 0
        %1417 = vmatmul.mubr.bf16.gmra.mrb[0].mxu0 %v1312
        %v1418 = vpop.f32.mrb[0].mxu0
        %v1419 = vadd.f32 %v1334, %v1418
        %v1420 = vpop.f32.mrb[0].mxu0
        %v1421 = vpop.f32.mrb[0].mxu0
        %v1422 = vadd.f32 %v1334, %v1421
        %v1423 = vpop.f32.mrb[0].mxu0
        %1424 = vdwg.mxu0
        %v1425 = vadd.f32 %v788, %v1419
        %v1426 = vadd.f32 %v789, %v1422
        %v1427 = vld [vmem:[%s9] sm:$0x1]
        %v1428 = vld [vmem:[%s10] sm:$0x1]
        %1429 = vadd.xlane.f32.xlu0 %v1425
        %v1430 = vpop.xlane.xlu0 %1429
        %1431 = vadd.xlane.f32.xlu0 %v1426
        %v1432 = vpop.xlane.xlu0 %1431
        %v1433 = vmul.f32 %v1430, %v755
        %v1434 = vmul.f32 %v1432, %v755
        %v1435 = vsub.f32 %v1425, %v1433
        %v1436 = vsub.f32 %v1426, %v1434
        %v1437 = vmul.f32 %v1435, %v1435
        %v1438 = vmul.f32 %v1436, %v1436
        %1439 = vadd.xlane.f32.xlu0 %v1437
        %v1440 = vpop.xlane.xlu0 %1439
        %1441 = vadd.xlane.f32.xlu0 %v1438
        %v1442 = vpop.xlane.xlu0 %1441
        %v1443 = vmul.f32 %v1440, %v755
        %v1444 = vmul.f32 %v1442, %v755
        %v1445 = vadd.f32 %v1443, 1e-12
        %v1446 = vadd.f32 %v1444, 1e-12
        %v1447 = vrsqrt.pop %v1445
        %v1448 = vrsqrt.pop %v1446
        %v1449 = vmul.f32 %v1435, %v1447
        %v1450 = vmul.f32 %v1436, %v1448
        %v1452 = vlaneseq
        %v1453 = vshrl.u32 %v1452, 7
        %v1454 = vsub.s32 0, %v1453
        %v1455 = vrot.slane %v1427, %v1454
        %v1457 = vmul.f32 %v1449, %v1455
        %v1458 = vmul.f32 %v1450, %v1455
        %v1460 = vlaneseq
        %v1461 = vshrl.u32 %v1460, 7
        %v1462 = vsub.s32 0, %v1461
        %v1463 = vrot.slane %v1428, %v1462
        %v1465 = vadd.f32 %v1457, %v1463
        %v1466 = vadd.f32 %v1458, %v1463
        %v1467 = vpack.c.bf16 %v1466, %v1465
        %v1468 = vld [vmem:[#allocation4] sm:$0xff]
        %v1469 = vld [vmem:[#allocation4 + $0x8] sm:$0xff]
        %v1470 = vld [vmem:[#allocation4 + $0x10] sm:$0xff]
        %v1471 = vld [vmem:[#allocation4 + $0x18] sm:$0xff]
        %v1472 = vld [vmem:[#allocation4 + $0x20] sm:$0xff]
        %v1473 = vld [vmem:[#allocation4 + $0x28] sm:$0xff]
        %v1474 = vld [vmem:[#allocation4 + $0x30] sm:$0xff]
        %v1475 = vld [vmem:[#allocation4 + $0x38] sm:$0xff]
        %v1476 = vld [vmem:[#allocation4 + $0x40] sm:$0xff]
        %v1477 = vld [vmem:[#allocation4 + $0x48] sm:$0xff]
        %v1478 = vld [vmem:[#allocation4 + $0x50] sm:$0xff]
        %v1479 = vld [vmem:[#allocation4 + $0x58] sm:$0xff]
        %v1480 = vld [vmem:[#allocation4 + $0x60] sm:$0xff]
        %v1481 = vld [vmem:[#allocation4 + $0x68] sm:$0xff]
        %v1482 = vld [vmem:[#allocation4 + $0x70] sm:$0xff]
        %v1483 = vld [vmem:[#allocation4 + $0x78] sm:$0xff]
        %v1484 = vld [vmem:[%s12] sm:$0x3]
        %v1486 = vlaneseq
        %v1487 = vshrl.u32 %v1486, 7
        %v1488 = vsub.s32 0, %v1487
        %v1489 = vrot.slane %v1484, %v1488
        %v1490 = vlaneseq
        %v1491 = vshrl.u32 %v1490, 7
        %v1492 = vsub.s32 1, %v1491
        %v1493 = vrot.slane %v1484, %v1492
        %v1512 = vunpack.c.l.b16 %v1468
        %v1513 = vunpack.c.h.b16 %v1468
        %v1514 = vunpack.c.l.b16 %v1469
        %v1515 = vunpack.c.h.b16 %v1469
        %v1516 = vunpack.c.l.b16 %v1470
        %v1517 = vunpack.c.h.b16 %v1470
        %v1518 = vunpack.c.l.b16 %v1471
        %v1519 = vunpack.c.h.b16 %v1471
        %v1520 = vunpack.c.l.b16 %v1472
        %v1521 = vunpack.c.h.b16 %v1472
        %v1522 = vunpack.c.l.b16 %v1473
        %v1523 = vunpack.c.h.b16 %v1473
        %v1524 = vunpack.c.l.b16 %v1474
        %v1525 = vunpack.c.h.b16 %v1474
        %v1526 = vunpack.c.l.b16 %v1475
        %v1527 = vunpack.c.h.b16 %v1475
        %v1528 = vunpack.c.l.b16 %v1476
        %v1529 = vunpack.c.h.b16 %v1476
        %v1530 = vunpack.c.l.b16 %v1477
        %v1531 = vunpack.c.h.b16 %v1477
        %v1532 = vunpack.c.l.b16 %v1478
        %v1533 = vunpack.c.h.b16 %v1478
        %v1534 = vunpack.c.l.b16 %v1479
        %v1535 = vunpack.c.h.b16 %v1479
        %v1536 = vunpack.c.l.b16 %v1480
        %v1537 = vunpack.c.h.b16 %v1480
        %v1538 = vunpack.c.l.b16 %v1481
        %v1539 = vunpack.c.h.b16 %v1481
        %v1540 = vunpack.c.l.b16 %v1482
        %v1541 = vunpack.c.h.b16 %v1482
        %v1542 = vunpack.c.l.b16 %v1483
        %v1543 = vunpack.c.h.b16 %v1483
        %v1544 = vpack.c.b16 %v1514, %v1512
        %v1545 = vpack.c.b16 %v1515, %v1513
        %v1546 = vpack.c.b16 %v1518, %v1516
        %v1547 = vpack.c.b16 %v1519, %v1517
        %v1548 = vpack.c.b16 %v1522, %v1520
        %v1549 = vpack.c.b16 %v1523, %v1521
        %v1550 = vpack.c.b16 %v1526, %v1524
        %v1551 = vpack.c.b16 %v1527, %v1525
        %v1552 = vpack.c.b16 %v1530, %v1528
        %v1553 = vpack.c.b16 %v1531, %v1529
        %v1554 = vpack.c.b16 %v1534, %v1532
        %v1555 = vpack.c.b16 %v1535, %v1533
        %v1556 = vpack.c.b16 %v1538, %v1536
        %v1557 = vpack.c.b16 %v1539, %v1537
        %v1558 = vpack.c.b16 %v1542, %v1540
        %v1559 = vpack.c.b16 %v1543, %v1541
        %1576 = vmatprep.subr.bf16.mxu0 %v1545
        %1577 = vmatpush1.bf16.msra.mxu0 %v1544
        %1578 = vmatprep.subr.bf16.mxu0 %v1547
        %1579 = vmatpush1.bf16.msra.mxu0 %v1546
        %1580 = vmatprep.subr.bf16.mxu0 %v1549
        %1581 = vmatpush1.bf16.msra.mxu0 %v1548
        %1582 = vmatprep.subr.bf16.mxu0 %v1551
        %1583 = vmatpush1.bf16.msra.mxu0 %v1550
        %1584 = vmatprep.subr.bf16.mxu0 %v1553
        %1585 = vmatpush1.bf16.msra.mxu0 %v1552
        %1586 = vmatprep.subr.bf16.mxu0 %v1555
        %1587 = vmatpush1.bf16.msra.mxu0 %v1554
        %1588 = vmatprep.subr.bf16.mxu0 %v1557
        %1589 = vmatpush1.bf16.msra.mxu0 %v1556
        %1590 = vmatprep.subr.bf16.mxu0 %v1559
        %1591 = vmatpush1.bf16.msra.mxu0 %v1558
        %1592 = vmatprep.subr.bf16.mxu0 0
        %1593 = vmatpush1.bf16.msra.mxu0 0
        %1594 = vmatprep.subr.bf16.mxu0 0
        %1595 = vmatpush1.bf16.msra.mxu0 0
        %1596 = vmatprep.subr.bf16.mxu0 0
        %1597 = vmatpush1.bf16.msra.mxu0 0
        %1598 = vmatprep.subr.bf16.mxu0 0
        %1599 = vmatpush1.bf16.msra.mxu0 0
        %1600 = vmatprep.subr.bf16.mxu0 0
        %1601 = vmatpush1.bf16.msra.mxu0 0
        %1602 = vmatprep.subr.bf16.mxu0 0
        %1603 = vmatpush1.bf16.msra.mxu0 0
        %1604 = vmatprep.subr.bf16.mxu0 0
        %1605 = vmatpush1.bf16.msra.mxu0 0
        %1606 = vmatprep.subr.bf16.mxu0 0
        %1607 = vmatpush1.bf16.msra.mxu0 0
        %1608 = vmatprep.mubr.bf16.mxu0 0
        %1609 = vmatmul.mubr.bf16.gmra.mrb[0].mxu0 %v1467
        %v1610 = vpop.f32.mrb[0].mxu0
        %v1611 = vadd.f32 %v1489, %v1610
        %v1612 = vpop.f32.mrb[0].mxu0
        %v1613 = vadd.f32 %v1493, %v1612
        %v1614 = vpop.f32.mrb[0].mxu0
        %v1615 = vadd.f32 %v1489, %v1614
        %v1616 = vpop.f32.mrb[0].mxu0
        %v1617 = vadd.f32 %v1493, %v1616
        %1618 = vdwg.mxu0
        %v1619 = vmul.f32 %v1611, 0.5
        %v1620 = vmul.f32 %v1613, 0.5
        %v1621 = vmul.f32 %v1615, 0.5
        %v1622 = vmul.f32 %v1617, 0.5
        %v1623 = vmul.f32 %v1611, 0.70710677
        %v1624 = vmul.f32 %v1613, 0.70710677
        %v1625 = vmul.f32 %v1615, 0.70710677
        %v1626 = vmul.f32 %v1617, 0.70710677
        %vm1627 = vcmp.lt.f32.partialorder %v1623, 0.0
        %vm1628 = vcmp.lt.f32.partialorder %v1624, 0.0
        %vm1629 = vcmp.lt.f32.partialorder %v1625, 0.0
        %vm1630 = vcmp.lt.f32.partialorder %v1626, 0.0
        %v1631 = vsel %vm1627, -1.0, 1.0
        %v1632 = vsel %vm1628, -1.0, 1.0
        %v1633 = vsel %vm1629, -1.0, 1.0
        %v1634 = vsel %vm1630, -1.0, 1.0
        %v1635 = vand.u32 2147483647, %v1623
        %v1636 = vand.u32 2147483647, %v1624
        %v1637 = vand.u32 2147483647, %v1625
        %v1638 = vand.u32 2147483647, %v1626
        %v1639 = vmul.f32 %v1635, 0.3275911
        %v1640 = vmul.f32 %v1636, 0.3275911
        %v1641 = vmul.f32 %v1637, 0.3275911
        %v1642 = vmul.f32 %v1638, 0.3275911
        %v1643 = vadd.f32 %v1639, 1.0
        %v1644 = vadd.f32 %v1640, 1.0
        %v1645 = vadd.f32 %v1641, 1.0
        %v1646 = vadd.f32 %v1642, 1.0
        %v1647 = vrcp.pop %v1643
        %v1648 = vrcp.pop %v1644
        %v1649 = vrcp.pop %v1645
        %v1650 = vrcp.pop %v1646
        %v1651 = vmul.f32 %v1647, 1.0614054
        %v1652 = vmul.f32 %v1648, 1.0614054
        %v1653 = vmul.f32 %v1649, 1.0614054
        %v1654 = vmul.f32 %v1650, 1.0614054
        %v1655 = vadd.f32 %v1651, -1.4531521
        %v1656 = vadd.f32 %v1652, -1.4531521
        %v1657 = vadd.f32 %v1653, -1.4531521
        %v1658 = vadd.f32 %v1654, -1.4531521
        %v1659 = vmul.f32 %v1655, %v1647
        %v1660 = vmul.f32 %v1656, %v1648
        %v1661 = vmul.f32 %v1657, %v1649
        %v1662 = vmul.f32 %v1658, %v1650
        %v1663 = vadd.f32 %v1659, 1.4214138
        %v1664 = vadd.f32 %v1660, 1.4214138
        %v1665 = vadd.f32 %v1661, 1.4214138
        %v1666 = vadd.f32 %v1662, 1.4214138
        %v1667 = vmul.f32 %v1663, %v1647
        %v1668 = vmul.f32 %v1664, %v1648
        %v1669 = vmul.f32 %v1665, %v1649
        %v1670 = vmul.f32 %v1666, %v1650
        %v1671 = vadd.f32 %v1667, -0.28449672
        %v1672 = vadd.f32 %v1668, -0.28449672
        %v1673 = vadd.f32 %v1669, -0.28449672
        %v1674 = vadd.f32 %v1670, -0.28449672
        %v1675 = vmul.f32 %v1671, %v1647
        %v1676 = vmul.f32 %v1672, %v1648
        %v1677 = vmul.f32 %v1673, %v1649
        %v1678 = vmul.f32 %v1674, %v1650
        %v1679 = vadd.f32 %v1675, 0.2548296
        %v1680 = vadd.f32 %v1676, 0.2548296
        %v1681 = vadd.f32 %v1677, 0.2548296
        %v1682 = vadd.f32 %v1678, 0.2548296
        %v1683 = vmul.f32 %v1679, %v1647
        %v1684 = vmul.f32 %v1680, %v1648
        %v1685 = vmul.f32 %v1681, %v1649
        %v1686 = vmul.f32 %v1682, %v1650
        %v1687 = vsub.f32 0.0, %v1635
        %v1688 = vsub.f32 0.0, %v1636
        %v1689 = vsub.f32 0.0, %v1637
        %v1690 = vsub.f32 0.0, %v1638
        %v1691 = vmul.f32 %v1687, %v1635
        %v1692 = vmul.f32 %v1688, %v1636
        %v1693 = vmul.f32 %v1689, %v1637
        %v1694 = vmul.f32 %v1690, %v1638
        %v1695 = vmul.f32 %v1691, 1.442695
        %v1696 = vpow.pop %v1695
        %v1697 = vmul.f32 %v1692, 1.442695
        %v1698 = vpow.pop %v1697
        %v1699 = vmul.f32 %v1693, 1.442695
        %v1700 = vpow.pop %v1699
        %v1701 = vmul.f32 %v1694, 1.442695
        %v1702 = vpow.pop %v1701
        %v1703 = vmul.f32 %v1683, %v1696
        %v1704 = vmul.f32 %v1684, %v1698
        %v1705 = vmul.f32 %v1685, %v1700
        %v1706 = vmul.f32 %v1686, %v1702
        %v1707 = vsub.f32 1.0, %v1703
        %v1708 = vsub.f32 1.0, %v1704
        %v1709 = vsub.f32 1.0, %v1705
        %v1710 = vsub.f32 1.0, %v1706
        %v1711 = vmul.f32 %v1631, %v1707
        %v1712 = vmul.f32 %v1632, %v1708
        %v1713 = vmul.f32 %v1633, %v1709
        %v1714 = vmul.f32 %v1634, %v1710
        %v1715 = vadd.f32 %v1711, 1.0
        %v1716 = vadd.f32 %v1712, 1.0
        %v1717 = vadd.f32 %v1713, 1.0
        %v1718 = vadd.f32 %v1714, 1.0
        %v1719 = vmul.f32 %v1619, %v1715
        %v1720 = vmul.f32 %v1620, %v1716
        %v1721 = vmul.f32 %v1621, %v1717
        %v1722 = vmul.f32 %v1622, %v1718
        %v1723 = vpack.c.bf16 %v1721, %v1719
        %v1724 = vpack.c.bf16 %v1722, %v1720
        %v1725 = vld [vmem:[#allocation6] sm:$0xf]
        %v1726 = vld [vmem:[#allocation6 + $0x4] sm:$0xf]
        %v1727 = vld [vmem:[#allocation6 + $0x8] sm:$0xf]
        %v1728 = vld [vmem:[#allocation6 + $0xc] sm:$0xf]
        %v1729 = vld [vmem:[#allocation6 + $0x10] sm:$0xf]
        %v1730 = vld [vmem:[#allocation6 + $0x14] sm:$0xf]
        %v1731 = vld [vmem:[#allocation6 + $0x18] sm:$0xf]
        %v1732 = vld [vmem:[#allocation6 + $0x1c] sm:$0xf]
        %v1733 = vld [vmem:[#allocation6 + $0x20] sm:$0xf]
        %v1734 = vld [vmem:[#allocation6 + $0x24] sm:$0xf]
        %v1735 = vld [vmem:[#allocation6 + $0x28] sm:$0xf]
        %v1736 = vld [vmem:[#allocation6 + $0x2c] sm:$0xf]
        %v1737 = vld [vmem:[#allocation6 + $0x30] sm:$0xf]
        %v1738 = vld [vmem:[#allocation6 + $0x34] sm:$0xf]
        %v1739 = vld [vmem:[#allocation6 + $0x38] sm:$0xf]
        %v1740 = vld [vmem:[#allocation6 + $0x3c] sm:$0xf]
        %v1741 = vld [vmem:[#allocation6 + $0x40] sm:$0xf]
        %v1742 = vld [vmem:[#allocation6 + $0x44] sm:$0xf]
        %v1743 = vld [vmem:[#allocation6 + $0x48] sm:$0xf]
        %v1744 = vld [vmem:[#allocation6 + $0x4c] sm:$0xf]
        %v1745 = vld [vmem:[#allocation6 + $0x50] sm:$0xf]
        %v1746 = vld [vmem:[#allocation6 + $0x54] sm:$0xf]
        %v1747 = vld [vmem:[#allocation6 + $0x58] sm:$0xf]
        %v1748 = vld [vmem:[#allocation6 + $0x5c] sm:$0xf]
        %v1749 = vld [vmem:[#allocation6 + $0x60] sm:$0xf]
        %v1750 = vld [vmem:[#allocation6 + $0x64] sm:$0xf]
        %v1751 = vld [vmem:[#allocation6 + $0x68] sm:$0xf]
        %v1752 = vld [vmem:[#allocation6 + $0x6c] sm:$0xf]
        %v1753 = vld [vmem:[#allocation6 + $0x70] sm:$0xf]
        %v1754 = vld [vmem:[#allocation6 + $0x74] sm:$0xf]
        %v1755 = vld [vmem:[#allocation6 + $0x78] sm:$0xf]
        %v1756 = vld [vmem:[#allocation6 + $0x7c] sm:$0xf]
        %v1757 = vld [vmem:[%s14] sm:$0x1]
        %v1759 = vlaneseq
        %v1760 = vshrl.u32 %v1759, 7
        %v1761 = vsub.s32 0, %v1760
        %v1762 = vrot.slane %v1757, %v1761
        %v1796 = vunpack.c.l.b16 %v1725
        %v1797 = vunpack.c.l.b16 %v1726
        %v1798 = vunpack.c.l.b16 %v1727
        %v1799 = vunpack.c.l.b16 %v1728
        %v1800 = vunpack.c.l.b16 %v1729
        %v1801 = vunpack.c.l.b16 %v1730
        %v1802 = vunpack.c.l.b16 %v1731
        %v1803 = vunpack.c.l.b16 %v1732
        %v1804 = vunpack.c.l.b16 %v1733
        %v1805 = vunpack.c.l.b16 %v1734
        %v1806 = vunpack.c.l.b16 %v1735
        %v1807 = vunpack.c.l.b16 %v1736
        %v1808 = vunpack.c.l.b16 %v1737
        %v1809 = vunpack.c.l.b16 %v1738
        %v1810 = vunpack.c.l.b16 %v1739
        %v1811 = vunpack.c.l.b16 %v1740
        %v1812 = vunpack.c.l.b16 %v1741
        %v1813 = vunpack.c.l.b16 %v1742
        %v1814 = vunpack.c.l.b16 %v1743
        %v1815 = vunpack.c.l.b16 %v1744
        %v1816 = vunpack.c.l.b16 %v1745
        %v1817 = vunpack.c.l.b16 %v1746
        %v1818 = vunpack.c.l.b16 %v1747
        %v1819 = vunpack.c.l.b16 %v1748
        %v1820 = vunpack.c.l.b16 %v1749
        %v1821 = vunpack.c.l.b16 %v1750
        %v1822 = vunpack.c.l.b16 %v1751
        %v1823 = vunpack.c.l.b16 %v1752
        %v1824 = vunpack.c.l.b16 %v1753
        %v1825 = vunpack.c.l.b16 %v1754
        %v1826 = vunpack.c.l.b16 %v1755
        %v1827 = vunpack.c.l.b16 %v1756
        %v1828 = vpack.c.b16 %v1797, %v1796
        %v1829 = vpack.c.b16 %v1799, %v1798
        %v1830 = vpack.c.b16 %v1801, %v1800
        %v1831 = vpack.c.b16 %v1803, %v1802
        %v1832 = vpack.c.b16 %v1805, %v1804
        %v1833 = vpack.c.b16 %v1807, %v1806
        %v1834 = vpack.c.b16 %v1809, %v1808
        %v1835 = vpack.c.b16 %v1811, %v1810
        %v1836 = vpack.c.b16 %v1813, %v1812
        %v1837 = vpack.c.b16 %v1815, %v1814
        %v1838 = vpack.c.b16 %v1817, %v1816
        %v1839 = vpack.c.b16 %v1819, %v1818
        %v1840 = vpack.c.b16 %v1821, %v1820
        %v1841 = vpack.c.b16 %v1823, %v1822
        %v1842 = vpack.c.b16 %v1825, %v1824
        %v1843 = vpack.c.b16 %v1827, %v1826
        %1860 = vmatprep.subr.bf16.mxu0 0
        %1861 = vmatpush1.bf16.msra.mxu0 %v1828
        %1862 = vmatprep.subr.bf16.mxu0 0
        %1863 = vmatpush1.bf16.msra.mxu0 %v1829
        %1864 = vmatprep.subr.bf16.mxu0 0
        %1865 = vmatpush1.bf16.msra.mxu0 %v1830
        %1866 = vmatprep.subr.bf16.mxu0 0
        %1867 = vmatpush1.bf16.msra.mxu0 %v1831
        %1868 = vmatprep.subr.bf16.mxu0 0
        %1869 = vmatpush1.bf16.msra.mxu0 %v1832
        %1870 = vmatprep.subr.bf16.mxu0 0
        %1871 = vmatpush1.bf16.msra.mxu0 %v1833
        %1872 = vmatprep.subr.bf16.mxu0 0
        %1873 = vmatpush1.bf16.msra.mxu0 %v1834
        %1874 = vmatprep.subr.bf16.mxu0 0
        %1875 = vmatpush1.bf16.msra.mxu0 %v1835
        %1876 = vmatprep.subr.bf16.mxu0 0
        %1877 = vmatpush1.bf16.msra.mxu0 %v1836
        %1878 = vmatprep.subr.bf16.mxu0 0
        %1879 = vmatpush1.bf16.msra.mxu0 %v1837
        %1880 = vmatprep.subr.bf16.mxu0 0
        %1881 = vmatpush1.bf16.msra.mxu0 %v1838
        %1882 = vmatprep.subr.bf16.mxu0 0
        %1883 = vmatpush1.bf16.msra.mxu0 %v1839
        %1884 = vmatprep.subr.bf16.mxu0 0
        %1885 = vmatpush1.bf16.msra.mxu0 %v1840
        %1886 = vmatprep.subr.bf16.mxu0 0
        %1887 = vmatpush1.bf16.msra.mxu0 %v1841
        %1888 = vmatprep.subr.bf16.mxu0 0
        %1889 = vmatpush1.bf16.msra.mxu0 %v1842
        %1890 = vmatprep.subr.bf16.mxu0 0
        %1891 = vmatpush1.bf16.msra.mxu0 %v1843
        %1892 = vmatprep.mubr.bf16.mxu0 %v1724
        %1893 = vmatmul.mubr.bf16.gmra.mrb[0].mxu0 %v1723
        %v1894 = vpop.f32.mrb[0].mxu0
        %v1895 = vadd.f32 %v1762, %v1894
        %v1896 = vpop.f32.mrb[0].mxu0
        %v1897 = vpop.f32.mrb[0].mxu0
        %v1898 = vadd.f32 %v1762, %v1897
        %v1899 = vpop.f32.mrb[0].mxu0
        %1900 = vdwg.mxu0
        %v1901 = vadd.f32 %v1465, %v1895
        %v1902 = vadd.f32 %v1466, %v1898
        %v1903 = vld [vmem:[%s15] sm:$0x1]
        %v1904 = vld [vmem:[%s16] sm:$0x1]
        %1905 = vadd.xlane.f32.xlu0 %v1901
        %v1906 = vpop.xlane.xlu0 %1905
        %1907 = vadd.xlane.f32.xlu0 %v1902
        %v1908 = vpop.xlane.xlu0 %1907
        %v1909 = vmul.f32 %v1906, %v755
        %v1910 = vmul.f32 %v1908, %v755
        %v1911 = vsub.f32 %v1901, %v1909
        %v1912 = vsub.f32 %v1902, %v1910
        %v1913 = vmul.f32 %v1911, %v1911
        %v1914 = vmul.f32 %v1912, %v1912
        %1915 = vadd.xlane.f32.xlu0 %v1913
        %v1916 = vpop.xlane.xlu0 %1915
        %1917 = vadd.xlane.f32.xlu0 %v1914
        %v1918 = vpop.xlane.xlu0 %1917
        %v1919 = vmul.f32 %v1916, %v755
        %v1920 = vmul.f32 %v1918, %v755
        %v1921 = vadd.f32 %v1919, 1e-12
        %v1922 = vadd.f32 %v1920, 1e-12
        %v1923 = vrsqrt.pop %v1921
        %v1924 = vrsqrt.pop %v1922
        %v1925 = vmul.f32 %v1911, %v1923
        %v1926 = vmul.f32 %v1912, %v1924
        %v1928 = vlaneseq
        %v1929 = vshrl.u32 %v1928, 7
        %v1930 = vsub.s32 0, %v1929
        %v1931 = vrot.slane %v1903, %v1930
        %v1933 = vmul.f32 %v1925, %v1931
        %v1934 = vmul.f32 %v1926, %v1931
        %v1936 = vlaneseq
        %v1937 = vshrl.u32 %v1936, 7
        %v1938 = vsub.s32 0, %v1937
        %v1939 = vrot.slane %v1904, %v1938
        %v1941 = vadd.f32 %v1933, %v1939
        %v1942 = vadd.f32 %v1934, %v1939
        %v1943 = vpack.c.bf16 %v1942, %v1941
        %s1944 = scalar_lea.vmem %s5, 192
        %v1945 = vld [vmem:[%s1944] sm:$0xff]
        %v1946 = vld [vmem:[%s1944 + $0x8] sm:$0xf]
        %v1947 = vld [vmem:[%s1944 + $0xc] sm:$0xff]
        %v1948 = vld [vmem:[%s1944 + $0x14] sm:$0xf]
        %v1949 = vld [vmem:[%s1944 + $0x18] sm:$0xff]
        %v1950 = vld [vmem:[%s1944 + $0x20] sm:$0xf]
        %v1951 = vld [vmem:[%s1944 + $0x24] sm:$0xff]
        %v1952 = vld [vmem:[%s1944 + $0x2c] sm:$0xf]
        %v1953 = vld [vmem:[%s1944 + $0x30] sm:$0xff]
        %v1954 = vld [vmem:[%s1944 + $0x38] sm:$0xf]
        %v1955 = vld [vmem:[%s1944 + $0x3c] sm:$0xff]
        %v1956 = vld [vmem:[%s1944 + $0x44] sm:$0xf]
        %v1957 = vld [vmem:[%s1944 + $0x48] sm:$0xff]
        %v1958 = vld [vmem:[%s1944 + $0x50] sm:$0xf]
        %v1959 = vld [vmem:[%s1944 + $0x54] sm:$0xff]
        %v1960 = vld [vmem:[%s1944 + $0x5c] sm:$0xf]
        %v1961 = vld [vmem:[%s1944 + $0x60] sm:$0xff]
        %v1962 = vld [vmem:[%s1944 + $0x68] sm:$0xf]
        %v1963 = vld [vmem:[%s1944 + $0x6c] sm:$0xff]
        %v1964 = vld [vmem:[%s1944 + $0x74] sm:$0xf]
        %v1965 = vld [vmem:[%s1944 + $0x78] sm:$0xff]
        %v1966 = vld [vmem:[%s1944 + $0x80] sm:$0xf]
        %v1967 = vld [vmem:[%s1944 + $0x84] sm:$0xff]
        %v1968 = vld [vmem:[%s1944 + $0x8c] sm:$0xf]
        %v1969 = vld [vmem:[%s1944 + $0x90] sm:$0xff]
        %v1970 = vld [vmem:[%s1944 + $0x98] sm:$0xf]
        %v1971 = vld [vmem:[%s1944 + $0x9c] sm:$0xff]
        %v1972 = vld [vmem:[%s1944 + $0xa4] sm:$0xf]
        %v1973 = vld [vmem:[%s1944 + $0xa8] sm:$0xff]
        %v1974 = vld [vmem:[%s1944 + $0xb0] sm:$0xf]
        %v1975 = vld [vmem:[%s1944 + $0xb4] sm:$0xff]
        %v1976 = vld [vmem:[%s1944 + $0xbc] sm:$0xf]
        %s1977 = scalar_lea.vmem %s6, 3
        %v1978 = vld [vmem:[%s1977] sm:$0x7]
        %v1980 = vlaneseq
        %v1981 = vshrl.u32 %v1980, 7
        %v1982 = vsub.s32 0, %v1981
        %v1983 = vrot.slane %v1978, %v1982
        %v1984 = vlaneseq
        %v1985 = vshrl.u32 %v1984, 7
        %v1986 = vsub.s32 1, %v1985
        %v1987 = vrot.slane %v1978, %v1986
        %v1988 = vlaneseq
        %v1989 = vshrl.u32 %v1988, 7
        %v1990 = vsub.s32 2, %v1989
        %v1991 = vrot.slane %v1978, %v1990
        %v2027 = vunpack.c.l.b16 %v1945
        %v2028 = vunpack.c.h.b16 %v1945
        %v2029 = vunpack.c.l.b16 %v1946
        %v2030 = vunpack.c.l.b16 %v1947
        %v2031 = vunpack.c.h.b16 %v1947
        %v2032 = vunpack.c.l.b16 %v1948
        %v2033 = vunpack.c.l.b16 %v1949
        %v2034 = vunpack.c.h.b16 %v1949
        %v2035 = vunpack.c.l.b16 %v1950
        %v2036 = vunpack.c.l.b16 %v1951
        %v2037 = vunpack.c.h.b16 %v1951
        %v2038 = vunpack.c.l.b16 %v1952
        %v2039 = vunpack.c.l.b16 %v1953
        %v2040 = vunpack.c.h.b16 %v1953
        %v2041 = vunpack.c.l.b16 %v1954
        %v2042 = vunpack.c.l.b16 %v1955
        %v2043 = vunpack.c.h.b16 %v1955
        %v2044 = vunpack.c.l.b16 %v1956
        %v2045 = vunpack.c.l.b16 %v1957
        %v2046 = vunpack.c.h.b16 %v1957
        %v2047 = vunpack.c.l.b16 %v1958
        %v2048 = vunpack.c.l.b16 %v1959
        %v2049 = vunpack.c.h.b16 %v1959
        %v2050 = vunpack.c.l.b16 %v1960
        %v2051 = vunpack.c.l.b16 %v1961
        %v2052 = vunpack.c.h.b16 %v1961
        %v2053 = vunpack.c.l.b16 %v1962
        %v2054 = vunpack.c.l.b16 %v1963
        %v2055 = vunpack.c.h.b16 %v1963
        %v2056 = vunpack.c.l.b16 %v1964
        %v2057 = vunpack.c.l.b16 %v1965
        %v2058 = vunpack.c.h.b16 %v1965
        %v2059 = vunpack.c.l.b16 %v1966
        %v2060 = vunpack.c.l.b16 %v1967
        %v2061 = vunpack.c.h.b16 %v1967
        %v2062 = vunpack.c.l.b16 %v1968
        %v2063 = vunpack.c.l.b16 %v1969
        %v2064 = vunpack.c.h.b16 %v1969
        %v2065 = vunpack.c.l.b16 %v1970
        %v2066 = vunpack.c.l.b16 %v1971
        %v2067 = vunpack.c.h.b16 %v1971
        %v2068 = vunpack.c.l.b16 %v1972
        %v2069 = vunpack.c.l.b16 %v1973
        %v2070 = vunpack.c.h.b16 %v1973
        %v2071 = vunpack.c.l.b16 %v1974
        %v2072 = vunpack.c.l.b16 %v1975
        %v2073 = vunpack.c.h.b16 %v1975
        %v2074 = vunpack.c.l.b16 %v1976
        %v2075 = vpack.c.b16 %v2030, %v2027
        %v2076 = vpack.c.b16 %v2031, %v2028
        %v2077 = vpack.c.b16 %v2032, %v2029
        %v2078 = vpack.c.b16 %v2036, %v2033
        %v2079 = vpack.c.b16 %v2037, %v2034
        %v2080 = vpack.c.b16 %v2038, %v2035
        %v2081 = vpack.c.b16 %v2042, %v2039
        %v2082 = vpack.c.b16 %v2043, %v2040
        %v2083 = vpack.c.b16 %v2044, %v2041
        %v2084 = vpack.c.b16 %v2048, %v2045
        %v2085 = vpack.c.b16 %v2049, %v2046
        %v2086 = vpack.c.b16 %v2050, %v2047
        %v2087 = vpack.c.b16 %v2054, %v2051
        %v2088 = vpack.c.b16 %v2055, %v2052
        %v2089 = vpack.c.b16 %v2056, %v2053
        %v2090 = vpack.c.b16 %v2060, %v2057
        %v2091 = vpack.c.b16 %v2061, %v2058
        %v2092 = vpack.c.b16 %v2062, %v2059
        %v2093 = vpack.c.b16 %v2066, %v2063
        %v2094 = vpack.c.b16 %v2067, %v2064
        %v2095 = vpack.c.b16 %v2068, %v2065
        %v2096 = vpack.c.b16 %v2072, %v2069
        %v2097 = vpack.c.b16 %v2073, %v2070
        %v2098 = vpack.c.b16 %v2074, %v2071
        %2123 = vmatprep.subr.bf16.mxu0 %v2076
        %2124 = vmatpush1.bf16.msra.mxu0 %v2075
        %2125 = vmatprep.subr.bf16.mxu0 %v2079
        %2126 = vmatpush1.bf16.msra.mxu0 %v2078
        %2127 = vmatprep.subr.bf16.mxu0 %v2082
        %2128 = vmatpush1.bf16.msra.mxu0 %v2081
        %2129 = vmatprep.subr.bf16.mxu0 %v2085
        %2130 = vmatpush1.bf16.msra.mxu0 %v2084
        %2131 = vmatprep.subr.bf16.mxu0 %v2088
        %2132 = vmatpush1.bf16.msra.mxu0 %v2087
        %2133 = vmatprep.subr.bf16.mxu0 %v2091
        %2134 = vmatpush1.bf16.msra.mxu0 %v2090
        %2135 = vmatprep.subr.bf16.mxu0 %v2094
        %2136 = vmatpush1.bf16.msra.mxu0 %v2093
        %2137 = vmatprep.subr.bf16.mxu0 %v2097
        %2138 = vmatpush1.bf16.msra.mxu0 %v2096
        %2139 = vmatprep.subr.bf16.mxu0 0
        %2140 = vmatpush1.bf16.msra.mxu0 0
        %2141 = vmatprep.subr.bf16.mxu0 0
        %2142 = vmatpush1.bf16.msra.mxu0 0
        %2143 = vmatprep.subr.bf16.mxu0 0
        %2144 = vmatpush1.bf16.msra.mxu0 0
        %2145 = vmatprep.subr.bf16.mxu0 0
        %2146 = vmatpush1.bf16.msra.mxu0 0
        %2147 = vmatprep.subr.bf16.mxu0 0
        %2148 = vmatpush1.bf16.msra.mxu0 0
        %2149 = vmatprep.subr.bf16.mxu0 0
        %2150 = vmatpush1.bf16.msra.mxu0 0
        %2151 = vmatprep.subr.bf16.mxu0 0
        %2152 = vmatpush1.bf16.msra.mxu0 0
        %2153 = vmatprep.subr.bf16.mxu0 0
        %2154 = vmatpush1.bf16.msra.mxu0 0
        %2155 = vmatprep.mubr.bf16.mxu0 0
        %2156 = vmatmul.mubr.bf16.gmra.mrb[0].mxu0 %v1943
        %v2157 = vpop.f32.mrb[0].mxu0
        %v2158 = vadd.f32 %v1983, %v2157
        %v2159 = vpop.f32.mrb[0].mxu0
        %v2160 = vadd.f32 %v1987, %v2159
        %v2161 = vpop.f32.mrb[0].mxu0
        %v2162 = vadd.f32 %v1983, %v2161
        %v2163 = vpop.f32.mrb[0].mxu0
        %v2164 = vadd.f32 %v1987, %v2163
        %2165 = vdwg.mxu0
        %2166 = vmatprep.subr.bf16.mxu0 0
        %2167 = vmatpush1.bf16.msra.mxu0 %v2077
        %2168 = vmatprep.subr.bf16.mxu0 0
        %2169 = vmatpush1.bf16.msra.mxu0 %v2080
        %2170 = vmatprep.subr.bf16.mxu0 0
        %2171 = vmatpush1.bf16.msra.mxu0 %v2083
        %2172 = vmatprep.subr.bf16.mxu0 0
        %2173 = vmatpush1.bf16.msra.mxu0 %v2086
        %2174 = vmatprep.subr.bf16.mxu0 0
        %2175 = vmatpush1.bf16.msra.mxu0 %v2089
        %2176 = vmatprep.subr.bf16.mxu0 0
        %2177 = vmatpush1.bf16.msra.mxu0 %v2092
        %2178 = vmatprep.subr.bf16.mxu0 0
        %2179 = vmatpush1.bf16.msra.mxu0 %v2095
        %2180 = vmatprep.subr.bf16.mxu0 0
        %2181 = vmatpush1.bf16.msra.mxu0 %v2098
        %2182 = vmatprep.subr.bf16.mxu0 0
        %2183 = vmatpush1.bf16.msra.mxu0 0
        %2184 = vmatprep.subr.bf16.mxu0 0
        %2185 = vmatpush1.bf16.msra.mxu0 0
        %2186 = vmatprep.subr.bf16.mxu0 0
        %2187 = vmatpush1.bf16.msra.mxu0 0
        %2188 = vmatprep.subr.bf16.mxu0 0
        %2189 = vmatpush1.bf16.msra.mxu0 0
        %2190 = vmatprep.subr.bf16.mxu0 0
        %2191 = vmatpush1.bf16.msra.mxu0 0
        %2192 = vmatprep.subr.bf16.mxu0 0
        %2193 = vmatpush1.bf16.msra.mxu0 0
        %2194 = vmatprep.subr.bf16.mxu0 0
        %2195 = vmatpush1.bf16.msra.mxu0 0
        %2196 = vmatprep.subr.bf16.mxu0 0
        %2197 = vmatpush1.bf16.msra.mxu0 0
        %2198 = vmatprep.mubr.bf16.mxu0 0
        %2199 = vmatmul.mubr.bf16.gmra.mrb[0].mxu0 %v1943
        %v2200 = vpop.f32.mrb[0].mxu0
        %v2201 = vadd.f32 %v1991, %v2200
        %v2202 = vpop.f32.mrb[0].mxu0
        %v2203 = vpop.f32.mrb[0].mxu0
        %v2204 = vadd.f32 %v1991, %v2203
        %v2205 = vpop.f32.mrb[0].mxu0
        %2206 = vdwg.mxu0
        %v2207 = vpack.c.bf16 %v2162, %v2158
        %v2208 = vpack.c.bf16 %v2164, %v2160
        %v2209 = vpack.c.bf16 %v2204, %v2201
        %v2211 = vsel %vm1062, %v2207, 0
        %v2214 = vsel %vm1062, %v2208, 0
        %2216 = vmatprep.subr.bf16.mxu0 0
        %2217 = vmatpush1.bf16.xpose.msra.mxu0 %v2214
        %2218 = vmatprep.subr.bf16.mxu0 0
        %2219 = vmatpush1.bf16.xpose.msra.mxu0 0
        %2220 = vmatprep.subr.bf16.mxu0 0
        %2221 = vmatpush1.bf16.xpose.msra.mxu0 0
        %2222 = vmatprep.subr.bf16.mxu0 0
        %2223 = vmatpush1.bf16.xpose.msra.mxu0 0
        %2224 = vmatprep.subr.bf16.mxu0 0
        %2225 = vmatpush1.bf16.xpose.msra.mxu0 0
        %2226 = vmatprep.subr.bf16.mxu0 0
        %2227 = vmatpush1.bf16.xpose.msra.mxu0 0
        %2228 = vmatprep.subr.bf16.mxu0 0
        %2229 = vmatpush1.bf16.xpose.msra.mxu0 0
        %2230 = vmatprep.subr.bf16.mxu0 0
        %2231 = vmatpush1.bf16.xpose.msra.mxu0 0
        %2232 = vmatprep.subr.bf16.mxu0 0
        %2233 = vmatpush1.bf16.xpose.msra.mxu0 0
        %2234 = vmatprep.subr.bf16.mxu0 0
        %2235 = vmatpush1.bf16.xpose.msra.mxu0 0
        %2236 = vmatprep.subr.bf16.mxu0 0
        %2237 = vmatpush1.bf16.xpose.msra.mxu0 0
        %2238 = vmatprep.subr.bf16.mxu0 0
        %2239 = vmatpush1.bf16.xpose.msra.mxu0 0
        %2240 = vmatprep.subr.bf16.mxu0 0
        %2241 = vmatpush1.bf16.xpose.msra.mxu0 0
        %2242 = vmatprep.subr.bf16.mxu0 0
        %2243 = vmatpush1.bf16.xpose.msra.mxu0 0
        %2244 = vmatprep.subr.bf16.mxu0 0
        %2245 = vmatpush1.bf16.xpose.msra.mxu0 0
        %2246 = vmatprep.subr.bf16.mxu0 0
        %2247 = vmatpush1.bf16.xpose.msra.mxu0 0
        %2248 = vmatprep.mubr.bf16.mxu0 0
        %2249 = vmatmul.mubr.bf16.gmra.mrb[0].mxu0 %v2211
        %v2250 = vpop.f32.mrb[0].mxu0
        %v2251 = vadd.f32 %v1060, %v2250
        %v2252 = vpop.f32.mrb[0].mxu0
        %v2253 = vpop.f32.mrb[0].mxu0
        %v2254 = vadd.f32 %v1060, %v2253
        %v2255 = vpop.f32.mrb[0].mxu0
        %2256 = vdwg.mxu0
        %v2257 = vsel %vm1110, %v2251, -inf
        %2258 = vmax.xlane.f32.xlu0 %v2257
        %v2259 = vpop.xlane.xlu0 %2258
        %v2260 = vsel %vm1110, %v2254, -inf
        %2261 = vmax.xlane.f32.xlu0 %v2260
        %v2262 = vpop.xlane.xlu0 %2261
        %v2263 = vsub.f32 %v2251, %v2259
        %v2264 = vsub.f32 %v2254, %v2262
        %v2265 = vmul.f32 %v2263, 1.442695
        %v2266 = vpow.pop %v2265
        %v2267 = vmul.f32 %v2264, 1.442695
        %v2268 = vpow.pop %v2267
        %v2269 = vsel %vm1110, %v2266, 0.0
        %2270 = vadd.xlane.f32.xlu0 %v2269
        %v2271 = vpop.xlane.xlu0 %2270
        %v2272 = vsel %vm1110, %v2268, 0.0
        %2273 = vadd.xlane.f32.xlu0 %v2272
        %v2274 = vpop.xlane.xlu0 %2273
        %v2275 = vrcp.pop %v2271
        %v2276 = vrcp.pop %v2274
        %v2277 = vmul.f32 %v2266, %v2275
        %v2278 = vmul.f32 %v2268, %v2276
        %v2279 = vpack.c.bf16 %v2278, %v2277
        %v2281 = vsel %vm1110, %v2279, 0
        %2283 = vmatprep.subr.bf16.mxu0 0
        %2284 = vmatpush1.bf16.msra.mxu0 %v2209
        %2285 = vmatprep.subr.bf16.mxu0 0
        %2286 = vmatpush1.bf16.msra.mxu0 0
        %2287 = vmatprep.subr.bf16.mxu0 0
        %2288 = vmatpush1.bf16.msra.mxu0 0
        %2289 = vmatprep.subr.bf16.mxu0 0
        %2290 = vmatpush1.bf16.msra.mxu0 0
        %2291 = vmatprep.subr.bf16.mxu0 0
        %2292 = vmatpush1.bf16.msra.mxu0 0
        %2293 = vmatprep.subr.bf16.mxu0 0
        %2294 = vmatpush1.bf16.msra.mxu0 0
        %2295 = vmatprep.subr.bf16.mxu0 0
        %2296 = vmatpush1.bf16.msra.mxu0 0
        %2297 = vmatprep.subr.bf16.mxu0 0
        %2298 = vmatpush1.bf16.msra.mxu0 0
        %2299 = vmatprep.subr.bf16.mxu0 0
        %2300 = vmatpush1.bf16.msra.mxu0 0
        %2301 = vmatprep.subr.bf16.mxu0 0
        %2302 = vmatpush1.bf16.msra.mxu0 0
        %2303 = vmatprep.subr.bf16.mxu0 0
        %2304 = vmatpush1.bf16.msra.mxu0 0
        %2305 = vmatprep.subr.bf16.mxu0 0
        %2306 = vmatpush1.bf16.msra.mxu0 0
        %2307 = vmatprep.subr.bf16.mxu0 0
        %2308 = vmatpush1.bf16.msra.mxu0 0
        %2309 = vmatprep.subr.bf16.mxu0 0
        %2310 = vmatpush1.bf16.msra.mxu0 0
        %2311 = vmatprep.subr.bf16.mxu0 0
        %2312 = vmatpush1.bf16.msra.mxu0 0
        %2313 = vmatprep.subr.bf16.mxu0 0
        %2314 = vmatpush1.bf16.msra.mxu0 0
        %2315 = vmatprep.mubr.bf16.mxu0 0
        %2316 = vmatmul.mubr.bf16.gmra.mrb[0].mxu0 %v2281
        %v2317 = vpop.f32.mrb[0].mxu0
        %v2318 = vadd.f32 0.0, %v2317
        %v2319 = vpop.f32.mrb[0].mxu0
        %v2320 = vpop.f32.mrb[0].mxu0
        %v2321 = vadd.f32 0.0, %v2320
        %v2322 = vpop.f32.mrb[0].mxu0
        %2323 = vdwg.mxu0
        %2325 = vrot.lane.b32.xlu0 %v2207, 64
        %v2326 = vpop.permute.xlu0 %2325
        %2328 = vrot.lane.b32.xlu0 %v2208, 64
        %v2329 = vpop.permute.xlu0 %2328
        %v2331 = vsel %vm1062, %v2326, 0
        %v2334 = vsel %vm1062, %v2329, 0
        %2336 = vmatprep.subr.bf16.mxu0 0
        %2337 = vmatpush1.bf16.xpose.msra.mxu0 %v2334
        %2338 = vmatprep.subr.bf16.mxu0 0
        %2339 = vmatpush1.bf16.xpose.msra.mxu0 0
        %2340 = vmatprep.subr.bf16.mxu0 0
        %2341 = vmatpush1.bf16.xpose.msra.mxu0 0
        %2342 = vmatprep.subr.bf16.mxu0 0
        %2343 = vmatpush1.bf16.xpose.msra.mxu0 0
        %2344 = vmatprep.subr.bf16.mxu0 0
        %2345 = vmatpush1.bf16.xpose.msra.mxu0 0
        %2346 = vmatprep.subr.bf16.mxu0 0
        %2347 = vmatpush1.bf16.xpose.msra.mxu0 0
        %2348 = vmatprep.subr.bf16.mxu0 0
        %2349 = vmatpush1.bf16.xpose.msra.mxu0 0
        %2350 = vmatprep.subr.bf16.mxu0 0
        %2351 = vmatpush1.bf16.xpose.msra.mxu0 0
        %2352 = vmatprep.subr.bf16.mxu0 0
        %2353 = vmatpush1.bf16.xpose.msra.mxu0 0
        %2354 = vmatprep.subr.bf16.mxu0 0
        %2355 = vmatpush1.bf16.xpose.msra.mxu0 0
        %2356 = vmatprep.subr.bf16.mxu0 0
        %2357 = vmatpush1.bf16.xpose.msra.mxu0 0
        %2358 = vmatprep.subr.bf16.mxu0 0
        %2359 = vmatpush1.bf16.xpose.msra.mxu0 0
        %2360 = vmatprep.subr.bf16.mxu0 0
        %2361 = vmatpush1.bf16.xpose.msra.mxu0 0
        %2362 = vmatprep.subr.bf16.mxu0 0
        %2363 = vmatpush1.bf16.xpose.msra.mxu0 0
        %2364 = vmatprep.subr.bf16.mxu0 0
        %2365 = vmatpush1.bf16.xpose.msra.mxu0 0
        %2366 = vmatprep.subr.bf16.mxu0 0
        %2367 = vmatpush1.bf16.xpose.msra.mxu0 0
        %2368 = vmatprep.mubr.bf16.mxu0 0
        %2369 = vmatmul.mubr.bf16.gmra.mrb[0].mxu0 %v2331
        %v2370 = vpop.f32.mrb[0].mxu0
        %v2371 = vadd.f32 %v1060, %v2370
        %v2372 = vpop.f32.mrb[0].mxu0
        %v2373 = vpop.f32.mrb[0].mxu0
        %v2374 = vadd.f32 %v1060, %v2373
        %v2375 = vpop.f32.mrb[0].mxu0
        %2376 = vdwg.mxu0
        %v2377 = vsel %vm1110, %v2371, -inf
        %2378 = vmax.xlane.f32.xlu0 %v2377
        %v2379 = vpop.xlane.xlu0 %2378
        %v2380 = vsel %vm1110, %v2374, -inf
        %2381 = vmax.xlane.f32.xlu0 %v2380
        %v2382 = vpop.xlane.xlu0 %2381
        %v2383 = vsub.f32 %v2371, %v2379
        %v2384 = vsub.f32 %v2374, %v2382
        %v2385 = vmul.f32 %v2383, 1.442695
        %v2386 = vpow.pop %v2385
        %v2387 = vmul.f32 %v2384, 1.442695
        %v2388 = vpow.pop %v2387
        %v2389 = vsel %vm1110, %v2386, 0.0
        %2390 = vadd.xlane.f32.xlu0 %v2389
        %v2391 = vpop.xlane.xlu0 %2390
        %v2392 = vsel %vm1110, %v2388, 0.0
        %2393 = vadd.xlane.f32.xlu0 %v2392
        %v2394 = vpop.xlane.xlu0 %2393
        %v2395 = vrcp.pop %v2391
        %v2396 = vrcp.pop %v2394
        %v2397 = vmul.f32 %v2386, %v2395
        %v2398 = vmul.f32 %v2388, %v2396
        %v2399 = vpack.c.bf16 %v2398, %v2397
        %2401 = vrot.lane.b32.xlu0 %v2209, 64
        %v2402 = vpop.permute.xlu0 %2401
        %v2405 = vsel %vm1110, %v2399, 0
        %2407 = vmatprep.subr.bf16.mxu0 0
        %2408 = vmatpush1.bf16.msra.mxu0 %v2402
        %2409 = vmatprep.subr.bf16.mxu0 0
        %2410 = vmatpush1.bf16.msra.mxu0 0
        %2411 = vmatprep.subr.bf16.mxu0 0
        %2412 = vmatpush1.bf16.msra.mxu0 0
        %2413 = vmatprep.subr.bf16.mxu0 0
        %2414 = vmatpush1.bf16.msra.mxu0 0
        %2415 = vmatprep.subr.bf16.mxu0 0
        %2416 = vmatpush1.bf16.msra.mxu0 0
        %2417 = vmatprep.subr.bf16.mxu0 0
        %2418 = vmatpush1.bf16.msra.mxu0 0
        %2419 = vmatprep.subr.bf16.mxu0 0
        %2420 = vmatpush1.bf16.msra.mxu0 0
        %2421 = vmatprep.subr.bf16.mxu0 0
        %2422 = vmatpush1.bf16.msra.mxu0 0
        %2423 = vmatprep.subr.bf16.mxu0 0
        %2424 = vmatpush1.bf16.msra.mxu0 0
        %2425 = vmatprep.subr.bf16.mxu0 0
        %2426 = vmatpush1.bf16.msra.mxu0 0
        %2427 = vmatprep.subr.bf16.mxu0 0
        %2428 = vmatpush1.bf16.msra.mxu0 0
        %2429 = vmatprep.subr.bf16.mxu0 0
        %2430 = vmatpush1.bf16.msra.mxu0 0
        %2431 = vmatprep.subr.bf16.mxu0 0
        %2432 = vmatpush1.bf16.msra.mxu0 0
        %2433 = vmatprep.subr.bf16.mxu0 0
        %2434 = vmatpush1.bf16.msra.mxu0 0
        %2435 = vmatprep.subr.bf16.mxu0 0
        %2436 = vmatpush1.bf16.msra.mxu0 0
        %2437 = vmatprep.subr.bf16.mxu0 0
        %2438 = vmatpush1.bf16.msra.mxu0 0
        %2439 = vmatprep.mubr.bf16.mxu0 0
        %2440 = vmatmul.mubr.bf16.gmra.mrb[0].mxu0 %v2405
        %v2441 = vpop.f32.mrb[0].mxu0
        %v2442 = vadd.f32 0.0, %v2441
        %v2443 = vpop.f32.mrb[0].mxu0
        %v2444 = vpop.f32.mrb[0].mxu0
        %v2445 = vadd.f32 0.0, %v2444
        %v2446 = vpop.f32.mrb[0].mxu0
        %2447 = vdwg.mxu0
        %2450 = vrot.lane.b32.xlu0 %v2442, 64
        %v2451 = vpop.permute.xlu0 %2450
        %2452 = vrot.lane.b32.xlu0 %v2445, 64
        %v2453 = vpop.permute.xlu0 %2452
        %v2456 = vsel %vm1062, %v2318, %v2451
        %v2457 = vsel %vm1062, %v2321, %v2453
        %v2458 = vpack.c.bf16 %v2457, %v2456
        %s2459 = scalar_lea.vmem [#allocation2], 64
        %v2460 = vld [vmem:[%s2459] sm:$0xf]
        %v2461 = vld [vmem:[%s2459 + $0x4] sm:$0xf]
        %v2462 = vld [vmem:[%s2459 + $0x8] sm:$0xf]
        %v2463 = vld [vmem:[%s2459 + $0xc] sm:$0xf]
        %v2464 = vld [vmem:[%s2459 + $0x10] sm:$0xf]
        %v2465 = vld [vmem:[%s2459 + $0x14] sm:$0xf]
        %v2466 = vld [vmem:[%s2459 + $0x18] sm:$0xf]
        %v2467 = vld [vmem:[%s2459 + $0x1c] sm:$0xf]
        %v2468 = vld [vmem:[%s2459 + $0x20] sm:$0xf]
        %v2469 = vld [vmem:[%s2459 + $0x24] sm:$0xf]
        %v2470 = vld [vmem:[%s2459 + $0x28] sm:$0xf]
        %v2471 = vld [vmem:[%s2459 + $0x2c] sm:$0xf]
        %v2472 = vld [vmem:[%s2459 + $0x30] sm:$0xf]
        %v2473 = vld [vmem:[%s2459 + $0x34] sm:$0xf]
        %v2474 = vld [vmem:[%s2459 + $0x38] sm:$0xf]
        %v2475 = vld [vmem:[%s2459 + $0x3c] sm:$0xf]
        %s2476 = scalar_lea.vmem %s8, 1
        %v2477 = vld [vmem:[%s2476] sm:$0x1]
        %v2479 = vlaneseq
        %v2480 = vshrl.u32 %v2479, 7
        %v2481 = vsub.s32 0, %v2480
        %v2482 = vrot.slane %v2477, %v2481
        %v2500 = vunpack.c.l.b16 %v2460
        %v2501 = vunpack.c.l.b16 %v2461
        %v2502 = vunpack.c.l.b16 %v2462
        %v2503 = vunpack.c.l.b16 %v2463
        %v2504 = vunpack.c.l.b16 %v2464
        %v2505 = vunpack.c.l.b16 %v2465
        %v2506 = vunpack.c.l.b16 %v2466
        %v2507 = vunpack.c.l.b16 %v2467
        %v2508 = vunpack.c.l.b16 %v2468
        %v2509 = vunpack.c.l.b16 %v2469
        %v2510 = vunpack.c.l.b16 %v2470
        %v2511 = vunpack.c.l.b16 %v2471
        %v2512 = vunpack.c.l.b16 %v2472
        %v2513 = vunpack.c.l.b16 %v2473
        %v2514 = vunpack.c.l.b16 %v2474
        %v2515 = vunpack.c.l.b16 %v2475
        %v2516 = vpack.c.b16 %v2501, %v2500
        %v2517 = vpack.c.b16 %v2503, %v2502
        %v2518 = vpack.c.b16 %v2505, %v2504
        %v2519 = vpack.c.b16 %v2507, %v2506
        %v2520 = vpack.c.b16 %v2509, %v2508
        %v2521 = vpack.c.b16 %v2511, %v2510
        %v2522 = vpack.c.b16 %v2513, %v2512
        %v2523 = vpack.c.b16 %v2515, %v2514
        %2532 = vmatprep.subr.bf16.mxu0 0
        %2533 = vmatpush1.bf16.msra.mxu0 %v2516
        %2534 = vmatprep.subr.bf16.mxu0 0
        %2535 = vmatpush1.bf16.msra.mxu0 %v2517
        %2536 = vmatprep.subr.bf16.mxu0 0
        %2537 = vmatpush1.bf16.msra.mxu0 %v2518
        %2538 = vmatprep.subr.bf16.mxu0 0
        %2539 = vmatpush1.bf16.msra.mxu0 %v2519
        %2540 = vmatprep.subr.bf16.mxu0 0
        %2541 = vmatpush1.bf16.msra.mxu0 %v2520
        %2542 = vmatprep.subr.bf16.mxu0 0
        %2543 = vmatpush1.bf16.msra.mxu0 %v2521
        %2544 = vmatprep.subr.bf16.mxu0 0
        %2545 = vmatpush1.bf16.msra.mxu0 %v2522
        %2546 = vmatprep.subr.bf16.mxu0 0
        %2547 = vmatpush1.bf16.msra.mxu0 %v2523
        %2548 = vmatprep.subr.bf16.mxu0 0
        %2549 = vmatpush1.bf16.msra.mxu0 0
        %2550 = vmatprep.subr.bf16.mxu0 0
        %2551 = vmatpush1.bf16.msra.mxu0 0
        %2552 = vmatprep.subr.bf16.mxu0 0
        %2553 = vmatpush1.bf16.msra.mxu0 0
        %2554 = vmatprep.subr.bf16.mxu0 0
        %2555 = vmatpush1.bf16.msra.mxu0 0
        %2556 = vmatprep.subr.bf16.mxu0 0
        %2557 = vmatpush1.bf16.msra.mxu0 0
        %2558 = vmatprep.subr.bf16.mxu0 0
        %2559 = vmatpush1.bf16.msra.mxu0 0
        %2560 = vmatprep.subr.bf16.mxu0 0
        %2561 = vmatpush1.bf16.msra.mxu0 0
        %2562 = vmatprep.subr.bf16.mxu0 0
        %2563 = vmatpush1.bf16.msra.mxu0 0
        %2564 = vmatprep.mubr.bf16.mxu0 0
        %2565 = vmatmul.mubr.bf16.gmra.mrb[0].mxu0 %v2458
        %v2566 = vpop.f32.mrb[0].mxu0
        %v2567 = vadd.f32 %v2482, %v2566
        %v2568 = vpop.f32.mrb[0].mxu0
        %v2569 = vpop.f32.mrb[0].mxu0
        %v2570 = vadd.f32 %v2482, %v2569
        %v2571 = vpop.f32.mrb[0].mxu0
        %2572 = vdwg.mxu0
        %v2573 = vadd.f32 %v1941, %v2567
        %v2574 = vadd.f32 %v1942, %v2570
        %s2575 = scalar_lea.vmem %s9, 1
        %v2576 = vld [vmem:[%s2575] sm:$0x1]
        %s2577 = scalar_lea.vmem %s10, 1
        %v2578 = vld [vmem:[%s2577] sm:$0x1]
        %2579 = vadd.xlane.f32.xlu0 %v2573
        %v2580 = vpop.xlane.xlu0 %2579
        %2581 = vadd.xlane.f32.xlu0 %v2574
        %v2582 = vpop.xlane.xlu0 %2581
        %v2583 = vmul.f32 %v2580, %v755
        %v2584 = vmul.f32 %v2582, %v755
        %v2585 = vsub.f32 %v2573, %v2583
        %v2586 = vsub.f32 %v2574, %v2584
        %v2587 = vmul.f32 %v2585, %v2585
        %v2588 = vmul.f32 %v2586, %v2586
        %2589 = vadd.xlane.f32.xlu0 %v2587
        %v2590 = vpop.xlane.xlu0 %2589
        %2591 = vadd.xlane.f32.xlu0 %v2588
        %v2592 = vpop.xlane.xlu0 %2591
        %v2593 = vmul.f32 %v2590, %v755
        %v2594 = vmul.f32 %v2592, %v755
        %v2595 = vadd.f32 %v2593, 1e-12
        %v2596 = vadd.f32 %v2594, 1e-12
        %v2597 = vrsqrt.pop %v2595
        %v2598 = vrsqrt.pop %v2596
        %v2599 = vmul.f32 %v2585, %v2597
        %v2600 = vmul.f32 %v2586, %v2598
        %v2602 = vlaneseq
        %v2603 = vshrl.u32 %v2602, 7
        %v2604 = vsub.s32 0, %v2603
        %v2605 = vrot.slane %v2576, %v2604
        %v2607 = vmul.f32 %v2599, %v2605
        %v2608 = vmul.f32 %v2600, %v2605
        %v2610 = vlaneseq
        %v2611 = vshrl.u32 %v2610, 7
        %v2612 = vsub.s32 0, %v2611
        %v2613 = vrot.slane %v2578, %v2612
        %v2615 = vadd.f32 %v2607, %v2613
        %v2616 = vadd.f32 %v2608, %v2613
        %v2617 = vpack.c.bf16 %v2616, %v2615
        %s2618 = scalar_lea.vmem [#allocation4], 128
        %v2619 = vld [vmem:[%s2618] sm:$0xff]
        %v2620 = vld [vmem:[%s2618 + $0x8] sm:$0xff]
        %v2621 = vld [vmem:[%s2618 + $0x10] sm:$0xff]
        %v2622 = vld [vmem:[%s2618 + $0x18] sm:$0xff]
        %v2623 = vld [vmem:[%s2618 + $0x20] sm:$0xff]
        %v2624 = vld [vmem:[%s2618 + $0x28] sm:$0xff]
        %v2625 = vld [vmem:[%s2618 + $0x30] sm:$0xff]
        %v2626 = vld [vmem:[%s2618 + $0x38] sm:$0xff]
        %v2627 = vld [vmem:[%s2618 + $0x40] sm:$0xff]
        %v2628 = vld [vmem:[%s2618 + $0x48] sm:$0xff]
        %v2629 = vld [vmem:[%s2618 + $0x50] sm:$0xff]
        %v2630 = vld [vmem:[%s2618 + $0x58] sm:$0xff]
        %v2631 = vld [vmem:[%s2618 + $0x60] sm:$0xff]
        %v2632 = vld [vmem:[%s2618 + $0x68] sm:$0xff]
        %v2633 = vld [vmem:[%s2618 + $0x70] sm:$0xff]
        %v2634 = vld [vmem:[%s2618 + $0x78] sm:$0xff]
        %s2635 = scalar_lea.vmem %s12, 2
        %v2636 = vld [vmem:[%s2635] sm:$0x3]
        %v2638 = vlaneseq
        %v2639 = vshrl.u32 %v2638, 7
        %v2640 = vsub.s32 0, %v2639
        %v2641 = vrot.slane %v2636, %v2640
        %v2642 = vlaneseq
        %v2643 = vshrl.u32 %v2642, 7
        %v2644 = vsub.s32 1, %v2643
        %v2645 = vrot.slane %v2636, %v2644
        %v2664 = vunpack.c.l.b16 %v2619
        %v2665 = vunpack.c.h.b16 %v2619
        %v2666 = vunpack.c.l.b16 %v2620
        %v2667 = vunpack.c.h.b16 %v2620
        %v2668 = vunpack.c.l.b16 %v2621
        %v2669 = vunpack.c.h.b16 %v2621
        %v2670 = vunpack.c.l.b16 %v2622
        %v2671 = vunpack.c.h.b16 %v2622
        %v2672 = vunpack.c.l.b16 %v2623
        %v2673 = vunpack.c.h.b16 %v2623
        %v2674 = vunpack.c.l.b16 %v2624
        %v2675 = vunpack.c.h.b16 %v2624
        %v2676 = vunpack.c.l.b16 %v2625
        %v2677 = vunpack.c.h.b16 %v2625
        %v2678 = vunpack.c.l.b16 %v2626
        %v2679 = vunpack.c.h.b16 %v2626
        %v2680 = vunpack.c.l.b16 %v2627
        %v2681 = vunpack.c.h.b16 %v2627
        %v2682 = vunpack.c.l.b16 %v2628
        %v2683 = vunpack.c.h.b16 %v2628
        %v2684 = vunpack.c.l.b16 %v2629
        %v2685 = vunpack.c.h.b16 %v2629
        %v2686 = vunpack.c.l.b16 %v2630
        %v2687 = vunpack.c.h.b16 %v2630
        %v2688 = vunpack.c.l.b16 %v2631
        %v2689 = vunpack.c.h.b16 %v2631
        %v2690 = vunpack.c.l.b16 %v2632
        %v2691 = vunpack.c.h.b16 %v2632
        %v2692 = vunpack.c.l.b16 %v2633
        %v2693 = vunpack.c.h.b16 %v2633
        %v2694 = vunpack.c.l.b16 %v2634
        %v2695 = vunpack.c.h.b16 %v2634
        %v2696 = vpack.c.b16 %v2666, %v2664
        %v2697 = vpack.c.b16 %v2667, %v2665
        %v2698 = vpack.c.b16 %v2670, %v2668
        %v2699 = vpack.c.b16 %v2671, %v2669
        %v2700 = vpack.c.b16 %v2674, %v2672
        %v2701 = vpack.c.b16 %v2675, %v2673
        %v2702 = vpack.c.b16 %v2678, %v2676
        %v2703 = vpack.c.b16 %v2679, %v2677
        %v2704 = vpack.c.b16 %v2682, %v2680
        %v2705 = vpack.c.b16 %v2683, %v2681
        %v2706 = vpack.c.b16 %v2686, %v2684
        %v2707 = vpack.c.b16 %v2687, %v2685
        %v2708 = vpack.c.b16 %v2690, %v2688
        %v2709 = vpack.c.b16 %v2691, %v2689
        %v2710 = vpack.c.b16 %v2694, %v2692
        %v2711 = vpack.c.b16 %v2695, %v2693
        %2728 = vmatprep.subr.bf16.mxu0 %v2697
        %2729 = vmatpush1.bf16.msra.mxu0 %v2696
        %2730 = vmatprep.subr.bf16.mxu0 %v2699
        %2731 = vmatpush1.bf16.msra.mxu0 %v2698
        %2732 = vmatprep.subr.bf16.mxu0 %v2701
        %2733 = vmatpush1.bf16.msra.mxu0 %v2700
        %2734 = vmatprep.subr.bf16.mxu0 %v2703
        %2735 = vmatpush1.bf16.msra.mxu0 %v2702
        %2736 = vmatprep.subr.bf16.mxu0 %v2705
        %2737 = vmatpush1.bf16.msra.mxu0 %v2704
        %2738 = vmatprep.subr.bf16.mxu0 %v2707
        %2739 = vmatpush1.bf16.msra.mxu0 %v2706
        %2740 = vmatprep.subr.bf16.mxu0 %v2709
        %2741 = vmatpush1.bf16.msra.mxu0 %v2708
        %2742 = vmatprep.subr.bf16.mxu0 %v2711
        %2743 = vmatpush1.bf16.msra.mxu0 %v2710
        %2744 = vmatprep.subr.bf16.mxu0 0
        %2745 = vmatpush1.bf16.msra.mxu0 0
        %2746 = vmatprep.subr.bf16.mxu0 0
        %2747 = vmatpush1.bf16.msra.mxu0 0
        %2748 = vmatprep.subr.bf16.mxu0 0
        %2749 = vmatpush1.bf16.msra.mxu0 0
        %2750 = vmatprep.subr.bf16.mxu0 0
        %2751 = vmatpush1.bf16.msra.mxu0 0
        %2752 = vmatprep.subr.bf16.mxu0 0
        %2753 = vmatpush1.bf16.msra.mxu0 0
        %2754 = vmatprep.subr.bf16.mxu0 0
        %2755 = vmatpush1.bf16.msra.mxu0 0
        %2756 = vmatprep.subr.bf16.mxu0 0
        %2757 = vmatpush1.bf16.msra.mxu0 0
        %2758 = vmatprep.subr.bf16.mxu0 0
        %2759 = vmatpush1.bf16.msra.mxu0 0
        %2760 = vmatprep.mubr.bf16.mxu0 0
        %2761 = vmatmul.mubr.bf16.gmra.mrb[0].mxu0 %v2617
        %v2762 = vpop.f32.mrb[0].mxu0
        %v2763 = vadd.f32 %v2641, %v2762
        %v2764 = vpop.f32.mrb[0].mxu0
        %v2765 = vadd.f32 %v2645, %v2764
        %v2766 = vpop.f32.mrb[0].mxu0
        %v2767 = vadd.f32 %v2641, %v2766
        %v2768 = vpop.f32.mrb[0].mxu0
        %v2769 = vadd.f32 %v2645, %v2768
        %2770 = vdwg.mxu0
        %v2771 = vmul.f32 %v2763, 0.5
        %v2772 = vmul.f32 %v2765, 0.5
        %v2773 = vmul.f32 %v2767, 0.5
        %v2774 = vmul.f32 %v2769, 0.5
        %v2775 = vmul.f32 %v2763, 0.70710677
        %v2776 = vmul.f32 %v2765, 0.70710677
        %v2777 = vmul.f32 %v2767, 0.70710677
        %v2778 = vmul.f32 %v2769, 0.70710677
        %vm2779 = vcmp.lt.f32.partialorder %v2775, 0.0
        %vm2780 = vcmp.lt.f32.partialorder %v2776, 0.0
        %vm2781 = vcmp.lt.f32.partialorder %v2777, 0.0
        %vm2782 = vcmp.lt.f32.partialorder %v2778, 0.0
        %v2783 = vsel %vm2779, -1.0, 1.0
        %v2784 = vsel %vm2780, -1.0, 1.0
        %v2785 = vsel %vm2781, -1.0, 1.0
        %v2786 = vsel %vm2782, -1.0, 1.0
        %v2787 = vand.u32 2147483647, %v2775
        %v2788 = vand.u32 2147483647, %v2776
        %v2789 = vand.u32 2147483647, %v2777
        %v2790 = vand.u32 2147483647, %v2778
        %v2791 = vmul.f32 %v2787, 0.3275911
        %v2792 = vmul.f32 %v2788, 0.3275911
        %v2793 = vmul.f32 %v2789, 0.3275911
        %v2794 = vmul.f32 %v2790, 0.3275911
        %v2795 = vadd.f32 %v2791, 1.0
        %v2796 = vadd.f32 %v2792, 1.0
        %v2797 = vadd.f32 %v2793, 1.0
        %v2798 = vadd.f32 %v2794, 1.0
        %v2799 = vrcp.pop %v2795
        %v2800 = vrcp.pop %v2796
        %v2801 = vrcp.pop %v2797
        %v2802 = vrcp.pop %v2798
        %v2803 = vmul.f32 %v2799, 1.0614054
        %v2804 = vmul.f32 %v2800, 1.0614054
        %v2805 = vmul.f32 %v2801, 1.0614054
        %v2806 = vmul.f32 %v2802, 1.0614054
        %v2807 = vadd.f32 %v2803, -1.4531521
        %v2808 = vadd.f32 %v2804, -1.4531521
        %v2809 = vadd.f32 %v2805, -1.4531521
        %v2810 = vadd.f32 %v2806, -1.4531521
        %v2811 = vmul.f32 %v2807, %v2799
        %v2812 = vmul.f32 %v2808, %v2800
        %v2813 = vmul.f32 %v2809, %v2801
        %v2814 = vmul.f32 %v2810, %v2802
        %v2815 = vadd.f32 %v2811, 1.4214138
        %v2816 = vadd.f32 %v2812, 1.4214138
        %v2817 = vadd.f32 %v2813, 1.4214138
        %v2818 = vadd.f32 %v2814, 1.4214138
        %v2819 = vmul.f32 %v2815, %v2799
        %v2820 = vmul.f32 %v2816, %v2800
        %v2821 = vmul.f32 %v2817, %v2801
        %v2822 = vmul.f32 %v2818, %v2802
        %v2823 = vadd.f32 %v2819, -0.28449672
        %v2824 = vadd.f32 %v2820, -0.28449672
        %v2825 = vadd.f32 %v2821, -0.28449672
        %v2826 = vadd.f32 %v2822, -0.28449672
        %v2827 = vmul.f32 %v2823, %v2799
        %v2828 = vmul.f32 %v2824, %v2800
        %v2829 = vmul.f32 %v2825, %v2801
        %v2830 = vmul.f32 %v2826, %v2802
        %v2831 = vadd.f32 %v2827, 0.2548296
        %v2832 = vadd.f32 %v2828, 0.2548296
        %v2833 = vadd.f32 %v2829, 0.2548296
        %v2834 = vadd.f32 %v2830, 0.2548296
        %v2835 = vmul.f32 %v2831, %v2799
        %v2836 = vmul.f32 %v2832, %v2800
        %v2837 = vmul.f32 %v2833, %v2801
        %v2838 = vmul.f32 %v2834, %v2802
        %v2839 = vsub.f32 0.0, %v2787
        %v2840 = vsub.f32 0.0, %v2788
        %v2841 = vsub.f32 0.0, %v2789
        %v2842 = vsub.f32 0.0, %v2790
        %v2843 = vmul.f32 %v2839, %v2787
        %v2844 = vmul.f32 %v2840, %v2788
        %v2845 = vmul.f32 %v2841, %v2789
        %v2846 = vmul.f32 %v2842, %v2790
        %v2847 = vmul.f32 %v2843, 1.442695
        %v2848 = vpow.pop %v2847
        %v2849 = vmul.f32 %v2844, 1.442695
        %v2850 = vpow.pop %v2849
        %v2851 = vmul.f32 %v2845, 1.442695
        %v2852 = vpow.pop %v2851
        %v2853 = vmul.f32 %v2846, 1.442695
        %v2854 = vpow.pop %v2853
        %v2855 = vmul.f32 %v2835, %v2848
        %v2856 = vmul.f32 %v2836, %v2850
        %v2857 = vmul.f32 %v2837, %v2852
        %v2858 = vmul.f32 %v2838, %v2854
        %v2859 = vsub.f32 1.0, %v2855
        %v2860 = vsub.f32 1.0, %v2856
        %v2861 = vsub.f32 1.0, %v2857
        %v2862 = vsub.f32 1.0, %v2858
        %v2863 = vmul.f32 %v2783, %v2859
        %v2864 = vmul.f32 %v2784, %v2860
        %v2865 = vmul.f32 %v2785, %v2861
        %v2866 = vmul.f32 %v2786, %v2862
        %v2867 = vadd.f32 %v2863, 1.0
        %v2868 = vadd.f32 %v2864, 1.0
        %v2869 = vadd.f32 %v2865, 1.0
        %v2870 = vadd.f32 %v2866, 1.0
        %v2871 = vmul.f32 %v2771, %v2867
        %v2872 = vmul.f32 %v2772, %v2868
        %v2873 = vmul.f32 %v2773, %v2869
        %v2874 = vmul.f32 %v2774, %v2870
        %v2875 = vpack.c.bf16 %v2873, %v2871
        %v2876 = vpack.c.bf16 %v2874, %v2872
        %s2877 = scalar_lea.vmem [#allocation6], 128
        %v2878 = vld [vmem:[%s2877] sm:$0xf]
        %v2879 = vld [vmem:[%s2877 + $0x4] sm:$0xf]
        %v2880 = vld [vmem:[%s2877 + $0x8] sm:$0xf]
        %v2881 = vld [vmem:[%s2877 + $0xc] sm:$0xf]
        %v2882 = vld [vmem:[%s2877 + $0x10] sm:$0xf]
        %v2883 = vld [vmem:[%s2877 + $0x14] sm:$0xf]
        %v2884 = vld [vmem:[%s2877 + $0x18] sm:$0xf]
        %v2885 = vld [vmem:[%s2877 + $0x1c] sm:$0xf]
        %v2886 = vld [vmem:[%s2877 + $0x20] sm:$0xf]
        %v2887 = vld [vmem:[%s2877 + $0x24] sm:$0xf]
        %v2888 = vld [vmem:[%s2877 + $0x28] sm:$0xf]
        %v2889 = vld [vmem:[%s2877 + $0x2c] sm:$0xf]
        %v2890 = vld [vmem:[%s2877 + $0x30] sm:$0xf]
        %v2891 = vld [vmem:[%s2877 + $0x34] sm:$0xf]
        %v2892 = vld [vmem:[%s2877 + $0x38] sm:$0xf]
        %v2893 = vld [vmem:[%s2877 + $0x3c] sm:$0xf]
        %v2894 = vld [vmem:[%s2877 + $0x40] sm:$0xf]
        %v2895 = vld [vmem:[%s2877 + $0x44] sm:$0xf]
        %v2896 = vld [vmem:[%s2877 + $0x48] sm:$0xf]
        %v2897 = vld [vmem:[%s2877 + $0x4c] sm:$0xf]
        %v2898 = vld [vmem:[%s2877 + $0x50] sm:$0xf]
        %v2899 = vld [vmem:[%s2877 + $0x54] sm:$0xf]
        %v2900 = vld [vmem:[%s2877 + $0x58] sm:$0xf]
        %v2901 = vld [vmem:[%s2877 + $0x5c] sm:$0xf]
        %v2902 = vld [vmem:[%s2877 + $0x60] sm:$0xf]
        %v2903 = vld [vmem:[%s2877 + $0x64] sm:$0xf]
        %v2904 = vld [vmem:[%s2877 + $0x68] sm:$0xf]
        %v2905 = vld [vmem:[%s2877 + $0x6c] sm:$0xf]
        %v2906 = vld [vmem:[%s2877 + $0x70] sm:$0xf]
        %v2907 = vld [vmem:[%s2877 + $0x74] sm:$0xf]
        %v2908 = vld [vmem:[%s2877 + $0x78] sm:$0xf]
        %v2909 = vld [vmem:[%s2877 + $0x7c] sm:$0xf]
        %s2910 = scalar_lea.vmem %s14, 1
        %v2911 = vld [vmem:[%s2910] sm:$0x1]
        %v2913 = vlaneseq
        %v2914 = vshrl.u32 %v2913, 7
        %v2915 = vsub.s32 0, %v2914
        %v2916 = vrot.slane %v2911, %v2915
        %v2950 = vunpack.c.l.b16 %v2878
        %v2951 = vunpack.c.l.b16 %v2879
        %v2952 = vunpack.c.l.b16 %v2880
        %v2953 = vunpack.c.l.b16 %v2881
        %v2954 = vunpack.c.l.b16 %v2882
        %v2955 = vunpack.c.l.b16 %v2883
        %v2956 = vunpack.c.l.b16 %v2884
        %v2957 = vunpack.c.l.b16 %v2885
        %v2958 = vunpack.c.l.b16 %v2886
        %v2959 = vunpack.c.l.b16 %v2887
        %v2960 = vunpack.c.l.b16 %v2888
        %v2961 = vunpack.c.l.b16 %v2889
        %v2962 = vunpack.c.l.b16 %v2890
        %v2963 = vunpack.c.l.b16 %v2891
        %v2964 = vunpack.c.l.b16 %v2892
        %v2965 = vunpack.c.l.b16 %v2893
        %v2966 = vunpack.c.l.b16 %v2894
        %v2967 = vunpack.c.l.b16 %v2895
        %v2968 = vunpack.c.l.b16 %v2896
        %v2969 = vunpack.c.l.b16 %v2897
        %v2970 = vunpack.c.l.b16 %v2898
        %v2971 = vunpack.c.l.b16 %v2899
        %v2972 = vunpack.c.l.b16 %v2900
        %v2973 = vunpack.c.l.b16 %v2901
        %v2974 = vunpack.c.l.b16 %v2902
        %v2975 = vunpack.c.l.b16 %v2903
        %v2976 = vunpack.c.l.b16 %v2904
        %v2977 = vunpack.c.l.b16 %v2905
        %v2978 = vunpack.c.l.b16 %v2906
        %v2979 = vunpack.c.l.b16 %v2907
        %v2980 = vunpack.c.l.b16 %v2908
        %v2981 = vunpack.c.l.b16 %v2909
        %v2982 = vpack.c.b16 %v2951, %v2950
        %v2983 = vpack.c.b16 %v2953, %v2952
        %v2984 = vpack.c.b16 %v2955, %v2954
        %v2985 = vpack.c.b16 %v2957, %v2956
        %v2986 = vpack.c.b16 %v2959, %v2958
        %v2987 = vpack.c.b16 %v2961, %v2960
        %v2988 = vpack.c.b16 %v2963, %v2962
        %v2989 = vpack.c.b16 %v2965, %v2964
        %v2990 = vpack.c.b16 %v2967, %v2966
        %v2991 = vpack.c.b16 %v2969, %v2968
        %v2992 = vpack.c.b16 %v2971, %v2970
        %v2993 = vpack.c.b16 %v2973, %v2972
        %v2994 = vpack.c.b16 %v2975, %v2974
        %v2995 = vpack.c.b16 %v2977, %v2976
        %v2996 = vpack.c.b16 %v2979, %v2978
        %v2997 = vpack.c.b16 %v2981, %v2980
        %3014 = vmatprep.subr.bf16.mxu0 0
        %3015 = vmatpush1.bf16.msra.mxu0 %v2982
        %3016 = vmatprep.subr.bf16.mxu0 0
        %3017 = vmatpush1.bf16.msra.mxu0 %v2983
        %3018 = vmatprep.subr.bf16.mxu0 0
        %3019 = vmatpush1.bf16.msra.mxu0 %v2984
        %3020 = vmatprep.subr.bf16.mxu0 0
        %3021 = vmatpush1.bf16.msra.mxu0 %v2985
        %3022 = vmatprep.subr.bf16.mxu0 0
        %3023 = vmatpush1.bf16.msra.mxu0 %v2986
        %3024 = vmatprep.subr.bf16.mxu0 0
        %3025 = vmatpush1.bf16.msra.mxu0 %v2987
        %3026 = vmatprep.subr.bf16.mxu0 0
        %3027 = vmatpush1.bf16.msra.mxu0 %v2988
        %3028 = vmatprep.subr.bf16.mxu0 0
        %3029 = vmatpush1.bf16.msra.mxu0 %v2989
        %3030 = vmatprep.subr.bf16.mxu0 0
        %3031 = vmatpush1.bf16.msra.mxu0 %v2990
        %3032 = vmatprep.subr.bf16.mxu0 0
        %3033 = vmatpush1.bf16.msra.mxu0 %v2991
        %3034 = vmatprep.subr.bf16.mxu0 0
        %3035 = vmatpush1.bf16.msra.mxu0 %v2992
        %3036 = vmatprep.subr.bf16.mxu0 0
        %3037 = vmatpush1.bf16.msra.mxu0 %v2993
        %3038 = vmatprep.subr.bf16.mxu0 0
        %3039 = vmatpush1.bf16.msra.mxu0 %v2994
        %3040 = vmatprep.subr.bf16.mxu0 0
        %3041 = vmatpush1.bf16.msra.mxu0 %v2995
        %3042 = vmatprep.subr.bf16.mxu0 0
        %3043 = vmatpush1.bf16.msra.mxu0 %v2996
        %3044 = vmatprep.subr.bf16.mxu0 0
        %3045 = vmatpush1.bf16.msra.mxu0 %v2997
        %3046 = vmatprep.mubr.bf16.mxu0 %v2876
        %3047 = vmatmul.mubr.bf16.gmra.mrb[0].mxu0 %v2875
        %v3048 = vpop.f32.mrb[0].mxu0
        %v3049 = vadd.f32 %v2916, %v3048
        %v3050 = vpop.f32.mrb[0].mxu0
        %v3051 = vpop.f32.mrb[0].mxu0
        %v3052 = vpop.f32.mrb[0].mxu0
        %3053 = vdwg.mxu0
        %v3054 = vadd.f32 %v2615, %v3049
        %s3055 = scalar_lea.vmem %s15, 1
        %v3056 = vld [vmem:[%s3055] sm:$0x1]
        %s3057 = scalar_lea.vmem %s16, 1
        %v3058 = vld [vmem:[%s3057] sm:$0x1]
        %3059 = vadd.xlane.f32.xlu0 %v3054
        %v3060 = vpop.xlane.xlu0 %3059
        %v3061 = vmul.f32 %v3060, %v755
        %v3062 = vsub.f32 %v3054, %v3061
        %v3063 = vmul.f32 %v3062, %v3062
        %3064 = vadd.xlane.f32.xlu0 %v3063
        %v3065 = vpop.xlane.xlu0 %3064
        %v3066 = vmul.f32 %v3065, %v755
        %v3067 = vadd.f32 %v3066, 1e-12
        %v3068 = vrsqrt.pop %v3067
        %v3069 = vmul.f32 %v3062, %v3068
        %v3071 = vlaneseq
        %v3072 = vshrl.u32 %v3071, 7
        %v3073 = vsub.s32 0, %v3072
        %v3074 = vrot.slane %v3056, %v3073
        %v3076 = vmul.f32 %v3069, %v3074
        %v3078 = vlaneseq
        %v3079 = vshrl.u32 %v3078, 7
        %v3080 = vsub.s32 0, %v3079
        %v3081 = vrot.slane %v3058, %v3080
        %v3083 = vadd.f32 %v3076, %v3081
        %v3084 = vpack.c.bf16 %v3083, %v3083
        %v3085 = vld [vmem:[#allocation7] sm:$0xf]
        %v3086 = vld [vmem:[#allocation7 + $0x4] sm:$0xf]
        %v3087 = vld [vmem:[#allocation7 + $0x8] sm:$0xf]
        %v3088 = vld [vmem:[#allocation7 + $0xc] sm:$0xf]
        %v3089 = vld [vmem:[#allocation7 + $0x10] sm:$0xf]
        %v3090 = vld [vmem:[#allocation7 + $0x14] sm:$0xf]
        %v3091 = vld [vmem:[#allocation7 + $0x18] sm:$0xf]
        %v3092 = vld [vmem:[#allocation7 + $0x1c] sm:$0xf]
        %v3093 = vld [vmem:[#allocation7 + $0x20] sm:$0xf]
        %v3094 = vld [vmem:[#allocation7 + $0x24] sm:$0xf]
        %v3095 = vld [vmem:[#allocation7 + $0x28] sm:$0xf]
        %v3096 = vld [vmem:[#allocation7 + $0x2c] sm:$0xf]
        %v3097 = vld [vmem:[#allocation7 + $0x30] sm:$0xf]
        %v3098 = vld [vmem:[#allocation7 + $0x34] sm:$0xf]
        %v3099 = vld [vmem:[#allocation7 + $0x38] sm:$0xf]
        %v3100 = vld [vmem:[#allocation7 + $0x3c] sm:$0xf]
        %v3101 = vld [vmem:[%s18] sm:$0x1]
        %v3118 = vunpack.c.l.b16 %v3085
        %v3119 = vunpack.c.l.b16 %v3086
        %v3120 = vunpack.c.l.b16 %v3087
        %v3121 = vunpack.c.l.b16 %v3088
        %v3122 = vunpack.c.l.b16 %v3089
        %v3123 = vunpack.c.l.b16 %v3090
        %v3124 = vunpack.c.l.b16 %v3091
        %v3125 = vunpack.c.l.b16 %v3092
        %v3126 = vunpack.c.l.b16 %v3093
        %v3127 = vunpack.c.l.b16 %v3094
        %v3128 = vunpack.c.l.b16 %v3095
        %v3129 = vunpack.c.l.b16 %v3096
        %v3130 = vunpack.c.l.b16 %v3097
        %v3131 = vunpack.c.l.b16 %v3098
        %v3132 = vunpack.c.l.b16 %v3099
        %v3133 = vunpack.c.l.b16 %v3100
        %v3134 = vpack.c.b16 %v3119, %v3118
        %v3135 = vpack.c.b16 %v3121, %v3120
        %v3136 = vpack.c.b16 %v3123, %v3122
        %v3137 = vpack.c.b16 %v3125, %v3124
        %v3138 = vpack.c.b16 %v3127, %v3126
        %v3139 = vpack.c.b16 %v3129, %v3128
        %v3140 = vpack.c.b16 %v3131, %v3130
        %v3141 = vpack.c.b16 %v3133, %v3132
        %3150 = vmatprep.subr.bf16.mxu0 0
        %3151 = vmatpush1.bf16.msra.mxu0 %v3134
        %3152 = vmatprep.subr.bf16.mxu0 0
        %3153 = vmatpush1.bf16.msra.mxu0 %v3135
        %3154 = vmatprep.subr.bf16.mxu0 0
        %3155 = vmatpush1.bf16.msra.mxu0 %v3136
        %3156 = vmatprep.subr.bf16.mxu0 0
        %3157 = vmatpush1.bf16.msra.mxu0 %v3137
        %3158 = vmatprep.subr.bf16.mxu0 0
        %3159 = vmatpush1.bf16.msra.mxu0 %v3138
        %3160 = vmatprep.subr.bf16.mxu0 0
        %3161 = vmatpush1.bf16.msra.mxu0 %v3139
        %3162 = vmatprep.subr.bf16.mxu0 0
        %3163 = vmatpush1.bf16.msra.mxu0 %v3140
        %3164 = vmatprep.subr.bf16.mxu0 0
        %3165 = vmatpush1.bf16.msra.mxu0 %v3141
        %3166 = vmatprep.subr.bf16.mxu0 0
        %3167 = vmatpush1.bf16.msra.mxu0 0
        %3168 = vmatprep.subr.bf16.mxu0 0
        %3169 = vmatpush1.bf16.msra.mxu0 0
        %3170 = vmatprep.subr.bf16.mxu0 0
        %3171 = vmatpush1.bf16.msra.mxu0 0
        %3172 = vmatprep.subr.bf16.mxu0 0
        %3173 = vmatpush1.bf16.msra.mxu0 0
        %3174 = vmatprep.subr.bf16.mxu0 0
        %3175 = vmatpush1.bf16.msra.mxu0 0
        %3176 = vmatprep.subr.bf16.mxu0 0
        %3177 = vmatpush1.bf16.msra.mxu0 0
        %3178 = vmatprep.subr.bf16.mxu0 0
        %3179 = vmatpush1.bf16.msra.mxu0 0
        %3180 = vmatprep.subr.bf16.mxu0 0
        %3181 = vmatpush1.bf16.msra.mxu0 0
        %3182 = vmatprep.mubr.bf16.mxu0 0
        %3183 = vmatmul.mubr.bf16.gmra.mrb[0].mxu0 %v3084
        %v3184 = vpop.f32.mrb[0].mxu0
        %v3185 = vadd.f32 %v3101, %v3184
        %v3186 = vpop.f32.mrb[0].mxu0
        %v3187 = vpop.f32.mrb[0].mxu0
        %v3188 = vpop.f32.mrb[0].mxu0
        %3189 = vdwg.mxu0
        %v3190 = vmax.f32 %v3185, 0.0
        %v3191 = vpack.c.bf16 %v3190, %v3190
        %v3192 = vld [vmem:[#allocation9] sm:$0xf]
        %v3193 = vld [vmem:[#allocation9 + $0x4] sm:$0xf]
        %v3194 = vld [vmem:[#allocation9 + $0x8] sm:$0xf]
        %v3195 = vld [vmem:[#allocation9 + $0xc] sm:$0xf]
        %v3196 = vld [vmem:[#allocation9 + $0x10] sm:$0xf]
        %v3197 = vld [vmem:[#allocation9 + $0x14] sm:$0xf]
        %v3198 = vld [vmem:[#allocation9 + $0x18] sm:$0xf]
        %v3199 = vld [vmem:[#allocation9 + $0x1c] sm:$0xf]
        %v3200 = vld [vmem:[#allocation9 + $0x20] sm:$0xf]
        %v3201 = vld [vmem:[#allocation9 + $0x24] sm:$0xf]
        %v3202 = vld [vmem:[#allocation9 + $0x28] sm:$0xf]
        %v3203 = vld [vmem:[#allocation9 + $0x2c] sm:$0xf]
        %v3204 = vld [vmem:[#allocation9 + $0x30] sm:$0xf]
        %v3205 = vld [vmem:[#allocation9 + $0x34] sm:$0xf]
        %v3206 = vld [vmem:[#allocation9 + $0x38] sm:$0xf]
        %v3207 = vld [vmem:[#allocation9 + $0x3c] sm:$0xf]
        %v3208 = vld [vmem:[%s20] sm:$0x1]
        %v3225 = vunpack.c.l.b16 %v3192
        %v3226 = vunpack.c.l.b16 %v3193
        %v3227 = vunpack.c.l.b16 %v3194
        %v3228 = vunpack.c.l.b16 %v3195
        %v3229 = vunpack.c.l.b16 %v3196
        %v3230 = vunpack.c.l.b16 %v3197
        %v3231 = vunpack.c.l.b16 %v3198
        %v3232 = vunpack.c.l.b16 %v3199
        %v3233 = vunpack.c.l.b16 %v3200
        %v3234 = vunpack.c.l.b16 %v3201
        %v3235 = vunpack.c.l.b16 %v3202
        %v3236 = vunpack.c.l.b16 %v3203
        %v3237 = vunpack.c.l.b16 %v3204
        %v3238 = vunpack.c.l.b16 %v3205
        %v3239 = vunpack.c.l.b16 %v3206
        %v3240 = vunpack.c.l.b16 %v3207
        %v3241 = vpack.c.b16 %v3226, %v3225
        %v3242 = vpack.c.b16 %v3228, %v3227
        %v3243 = vpack.c.b16 %v3230, %v3229
        %v3244 = vpack.c.b16 %v3232, %v3231
        %v3245 = vpack.c.b16 %v3234, %v3233
        %v3246 = vpack.c.b16 %v3236, %v3235
        %v3247 = vpack.c.b16 %v3238, %v3237
        %v3248 = vpack.c.b16 %v3240, %v3239
        %3257 = vmatprep.subr.bf16.mxu0 0
        %3258 = vmatpush1.bf16.msra.mxu0 %v3241
        %3259 = vmatprep.subr.bf16.mxu0 0
        %3260 = vmatpush1.bf16.msra.mxu0 %v3242
        %3261 = vmatprep.subr.bf16.mxu0 0
        %3262 = vmatpush1.bf16.msra.mxu0 %v3243
        %3263 = vmatprep.subr.bf16.mxu0 0
        %3264 = vmatpush1.bf16.msra.mxu0 %v3244
        %3265 = vmatprep.subr.bf16.mxu0 0
        %3266 = vmatpush1.bf16.msra.mxu0 %v3245
        %3267 = vmatprep.subr.bf16.mxu0 0
        %3268 = vmatpush1.bf16.msra.mxu0 %v3246
        %3269 = vmatprep.subr.bf16.mxu0 0
        %3270 = vmatpush1.bf16.msra.mxu0 %v3247
        %3271 = vmatprep.subr.bf16.mxu0 0
        %3272 = vmatpush1.bf16.msra.mxu0 %v3248
        %3273 = vmatprep.subr.bf16.mxu0 0
        %3274 = vmatpush1.bf16.msra.mxu0 0
        %3275 = vmatprep.subr.bf16.mxu0 0
        %3276 = vmatpush1.bf16.msra.mxu0 0
        %3277 = vmatprep.subr.bf16.mxu0 0
        %3278 = vmatpush1.bf16.msra.mxu0 0
        %3279 = vmatprep.subr.bf16.mxu0 0
        %3280 = vmatpush1.bf16.msra.mxu0 0
        %3281 = vmatprep.subr.bf16.mxu0 0
        %3282 = vmatpush1.bf16.msra.mxu0 0
        %3283 = vmatprep.subr.bf16.mxu0 0
        %3284 = vmatpush1.bf16.msra.mxu0 0
        %3285 = vmatprep.subr.bf16.mxu0 0
        %3286 = vmatpush1.bf16.msra.mxu0 0
        %3287 = vmatprep.subr.bf16.mxu0 0
        %3288 = vmatpush1.bf16.msra.mxu0 0
        %3289 = vmatprep.mubr.bf16.mxu0 0
        %3290 = vmatmul.mubr.bf16.gmra.mrb[0].mxu0 %v3191
        %v3291 = vpop.f32.mrb[0].mxu0
        %v3292 = vadd.f32 %v3208, %v3291
        %v3293 = vpop.f32.mrb[0].mxu0
        %v3294 = vpop.f32.mrb[0].mxu0
        %v3295 = vpop.f32.mrb[0].mxu0
        %3296 = vdwg.mxu0
        %v3297 = vlaneseq
        %v3298 = vshrl.u32 %v3297, 7
        %v3299 = vsub.s32 0, %v3298
        %v3300 = vrot.slane %v3292, %v3299
        %3301 = vst [vmem:[%s741] sm:$0xff] %v3300
        %p3302 = scmp.lt.s32.totalorder %s35, 1
        %s3303 = scalar_select %p3302, %s35, 1
        %s3304 = smul.addr %s3303, 8
        %s3305 = scalar_lea.vmem %s21, %s3304
        // Predicated region
        $region125: #{forward.1} parent=103 // pred_check
          %p3306 = pneg %p504
        $region126: #{forward.1} parent=103 // pred_check_branch
          %3308 = sbr.rel (%p3306) target = $region128
        $region127: #{forward.1} parent=103 // pred_region
          _
        $region128: #{forward.1} parent=103 // pred_fallthru
          _
      $region104: #{forward.1} parent=5 // pred_fallthru
        _
      %p3309 = scmp.le.s32.totalorder 2, %s30
      // Predicated region
      $region129: #{forward.1} parent=5 // pred_check
        %p3310 = pneg %p3309
      $region130: #{forward.1} parent=5 // pred_check_branch
        %3312 = sbr.rel (%p3310) target = $region132
      $region131: #{forward.1} parent=5 // pred_region
        %s3313 = ssub.s32 %s30, 2
        // Predicated region
        $region133: #{forward.1} parent=131 // pred_check
          %p3314 = pneg %p510
        $region134: #{forward.1} parent=131 // pred_check_branch
          %3316 = sbr.rel (%p3314) target = $region136
        $region135: #{forward.1} parent=131 // pred_region
          %p3317 = scmp.lt.s32.totalorder %s36, 1
          %s3318 = scalar_select %p3317, %s36, 1
          %s3319 = smul.addr %s3318, 8
          %s3320 = scalar_lea.vmem %s21, %s3319
        $region136: #{forward.1} parent=131 // pred_fallthru
          _
      $region132: #{forward.1} parent=5 // pred_fallthru
        _
    $region6: #{forward.1} parent=1 // loop_footer
      %s34 = sadd.s32 1, %s30
    $region7: #{forward.1} parent=1 // loop_footer_branch
      %29 = sbr.rel target = $region3
    $region8: #{forward.1} parent=1 // loop_exit
      _
    %3321 = vsyncpa [#allocation3], 1
    %s3322 = scalar_lea.sflag [#allocation3], 1
    %3323 = vsyncpa %s3322, 1
    %3324 = vsyncpa [#allocation5], 1
    %3325 = vsyncpa [#allocation8], 1

</llo_original>
